<compile_context>
chip_gen: v6e
topology: v6e:2x2x1
jax: 0.10.0
libtpu: 0.0.40
codegen_flags: <defaults>
</compile_context>

<pallas_src>
import math

import jax
import jax.numpy as jnp
from jax.experimental import pallas as pl
from jax.experimental.pallas import tpu as pltpu

# ---- module "config" (small, deterministic, consistent with the module) ----
D_MODEL = 32
N_HEADS = 4
D_K = 8
D_V = 8
BATCH = 2
SEQ = 8
LN_EPS = 1e-5


def _num_tensorcores() -> int:
    """Best-effort TensorCores-per-chip query; both code paths are correct."""
    try:
        kind = jax.devices()[0].device_kind.lower()
    except Exception:
        return 1
    return 2 if ("v7" in kind or "7x" in kind) else 1


def _make_kernel(n_heads, d_k):
    scale = 1.0 / math.sqrt(d_k)

    def kernel(xq_ref, xk_ref, xv_ref, w_ref, ln_ref, o_ref):
        # Activation blocks: [bb, S, D]; bb = whole batch on 1-TC chips.
        xq = xq_ref[...]                       # also the residual
        xk = xk_ref[...]
        xv = xv_ref[...]
        bb, s, d = xq.shape
        g = bb * n_heads                       # merged (batch, head) batch dim

        # Leading-dim broadcast + leading-dim reshape only (free layout-wise);
        # every contraction below is then a rank-3 leading-batch matmul.
        def over_bh_act(x):                    # [bb, S, D] -> [bb*H, S, D]
            return jnp.broadcast_to(x[:, None], (bb, n_heads, s, d)).reshape(g, s, d)

        def over_bh_w(wh):                     # [H, D, 8]  -> [bb*H, D, 8]
            e = wh.shape[-1]
            return jnp.broadcast_to(wh[None], (bb, n_heads, d, e)).reshape(g, d, e)

        xq_g = over_bh_act(xq)
        xk_g = over_bh_act(xk)
        xv_g = over_bh_act(xv)

        # One packed weight stream: [4, H, D, 8] = (W_Q, W_K, W_V, W_O slabs).
        wq_g = over_bh_w(w_ref[0])
        wk_g = over_bh_w(w_ref[1])
        wv_g = over_bh_w(w_ref[2])
        wo_g = over_bh_w(w_ref[3])             # per-head W_O slab, un-transposed

        # Projections (1/sqrt(d_k) folded into Q once).
        q = jnp.einsum('gsm,gmd->gsd', xq_g, wq_g,
                       preferred_element_type=jnp.float32) * scale
        k = jnp.einsum('gsm,gmd->gsd', xk_g, wk_g,
                       preferred_element_type=jnp.float32)
        v = jnp.einsum('gsm,gmd->gsd', xv_g, wv_g,
                       preferred_element_type=jnp.float32)

        # Scaled dot-product attention, batched over (batch, head).
        scores = jnp.einsum('gqd,gkd->gqk', q, k,
                            preferred_element_type=jnp.float32)     # [g, S, S]
        scores = scores - jnp.max(scores, axis=-1, keepdims=True)
        p = jnp.exp(scores)
        # Exact division (review: approx reciprocal made 1e-4 check marginal).
        p = p / jnp.sum(p, axis=-1, keepdims=True)
        ctx = jnp.einsum('gqk,gkd->gqd', p, v,
                         preferred_element_type=jnp.float32)        # [g, S, dv]

        # Output projection per (batch, head): same rhs-last-contracted batched
        # matmul shape as the scores op, then a cheap major-axis head sum
        # (fused multi-contracting einsum is not lowerable by Mosaic).
        out_h = jnp.einsum('gqd,gnd->gqn', ctx, wo_g,
                           preferred_element_type=jnp.float32)      # [g, S, D]
        out = jnp.sum(out_h.reshape(bb, n_heads, s, d), axis=1) + xq  # [bb,S,D]

        # LayerNorm over the last dim (biased variance, eps=1e-5) + affine.
        mean = jnp.mean(out, axis=-1, keepdims=True)
        var = jnp.mean(jnp.square(out - mean), axis=-1, keepdims=True)
        normed = (out - mean) * jax.lax.rsqrt(var + LN_EPS)
        ln = ln_ref[...]                       # [2, D]
        o_ref[...] = (normed * ln[0:1] + ln[1:2]).astype(o_ref.dtype)

    return kernel


def multi_head_attention(input_q, input_k, input_v,
                         w_q, w_k, w_v, w_o, gamma, beta):
    """input_*: [B, S, D_MODEL]; w_q/w_k/w_v/w_o are PyTorch-style [out, in] Linear weights."""
    b, s, d = input_q.shape
    assert d == D_MODEL and D_K == D_V

    # --- wrapper-side (plain JAX, free) weight packing: one DMA stream each ---
    #   W_Q/W_K/W_V: [H*dk, D] -> head-major [H, D, dk]
    #   W_O (fc)   : [D, H*dv] -> per-head un-transposed slabs [H, D, dv]
    wq_h = w_q.reshape(N_HEADS, D_K, d).transpose(0, 2, 1)
    wk_h = w_k.reshape(N_HEADS, D_K, d).transpose(0, 2, 1)
    wv_h = w_v.reshape(N_HEADS, D_V, d).transpose(0, 2, 1)
    wo_h = w_o.reshape(d, N_HEADS, D_V).transpose(1, 0, 2)
    wqkvo = jnp.stack([wq_h, wk_h, wv_h, wo_h])          # [4, H, D, 8]
    ln = jnp.stack([gamma, beta])                        # [2, D]

    # Batch tiling: whole batch in ONE grid step on single-TC v5e/v6e; one
    # batch element per (parallel) step on 2-TC v7x.
    bb = 1 if (_num_tensorcores() > 1 and b > 1) else b
    grid = (b // bb,)

    act_spec = pl.BlockSpec((bb, s, d), lambda i: (i, 0, 0))

    def full_spec(arr):
        nd = arr.ndim
        return pl.BlockSpec(arr.shape, lambda i, _nd=nd: (0,) * _nd)

    return pl.pallas_call(
        _make_kernel(N_HEADS, D_K),
        out_shape=jax.ShapeDtypeStruct((b, s, d), input_q.dtype),
        grid_spec=pltpu.PrefetchScalarGridSpec(
            num_scalar_prefetch=0,
            grid=grid,
            in_specs=[
                act_spec, act_spec, act_spec,
                full_spec(wqkvo), full_spec(ln),
            ],
            out_specs=act_spec,
        ),
        compiler_params=pltpu.CompilerParams(
            dimension_semantics=("parallel",)),
    )(input_q, input_k, input_v, wqkvo, ln)


def reference(input_q, input_k, input_v, w_q, w_k, w_v, w_o, gamma, beta):
    """Pure-JAX reference matching the PyTorch forward."""
    b = input_q.shape[0]
    residual = input_q
    q = (input_q @ w_q.T).reshape(b, -1, N_HEADS, D_K).transpose(0, 2, 1, 3)
    k = (input_k @ w_k.T).reshape(b, -1, N_HEADS, D_K).transpose(0, 2, 1, 3)
    v = (input_v @ w_v.T).reshape(b, -1, N_HEADS, D_V).transpose(0, 2, 1, 3)
    scores = jnp.einsum("bhqd,bhkd->bhqk", q, k) / math.sqrt(D_K)
    attn = jax.nn.softmax(scores, axis=-1)
    ctx = jnp.einsum("bhqk,bhkd->bhqd", attn, v)
    ctx = ctx.transpose(0, 2, 1, 3).reshape(b, -1, N_HEADS * D_V)
    out = ctx @ w_o.T + residual
    mean = out.mean(-1, keepdims=True)
    var = ((out - mean) ** 2).mean(-1, keepdims=True)
    return (out - mean) / jnp.sqrt(var + LN_EPS) * gamma + beta


if __name__ == "__main__":
    key = jax.random.PRNGKey(0)
    k_xq, k_xk, k_xv, k_wq, k_wk, k_wv, k_wo = jax.random.split(key, 7)

    x_q = jax.random.normal(k_xq, (BATCH, SEQ, D_MODEL), dtype=jnp.float32)
    x_k = jax.random.normal(k_xk, (BATCH, SEQ, D_MODEL), dtype=jnp.float32)
    x_v = jax.random.normal(k_xv, (BATCH, SEQ, D_MODEL), dtype=jnp.float32)

    # Deterministic parameter init (PyTorch-style [out, in] Linear weights).
    scale = 0.02
    w_q = scale * jax.random.normal(k_wq, (N_HEADS * D_K, D_MODEL), jnp.float32)
    w_k = scale * jax.random.normal(k_wk, (N_HEADS * D_K, D_MODEL), jnp.float32)
    w_v = scale * jax.random.normal(k_wv, (N_HEADS * D_V, D_MODEL), jnp.float32)
    w_o = scale * jax.random.normal(k_wo, (D_MODEL, N_HEADS * D_V), jnp.float32)
    gamma = jnp.ones((D_MODEL,), jnp.float32)
    beta = jnp.zeros((D_MODEL,), jnp.float32)

    out = multi_head_attention(x_q, x_k, x_v, w_q, w_k, w_v, w_o, gamma, beta)
    out = jax.block_until_ready(out)

    ref = reference(x_q, x_k, x_v, w_q, w_k, w_v, w_o, gamma, beta)
    assert out.shape == (BATCH, SEQ, D_MODEL)
    assert jnp.allclose(out, ref, atol=1e-4, rtol=1e-4), \
        float(jnp.max(jnp.abs(out - ref)))

    print("KERNEL_OK")
</pallas_src>

<mosaic_0001>
module attributes {stable_mosaic.version = 11 : i64} {
  func.func @kernel(%arg0: i32, %arg1: memref<2x8x32xf32, #tpu.memory_space<vmem>>, %arg2: memref<2x8x32xf32, #tpu.memory_space<vmem>>, %arg3: memref<2x8x32xf32, #tpu.memory_space<vmem>>, %arg4: memref<4x4x32x8xf32, #tpu.memory_space<vmem>>, %arg5: memref<2x32xf32, #tpu.memory_space<vmem>>, %arg6: memref<2x8x32xf32, #tpu.memory_space<vmem>>) attributes {dimension_semantics = [#tpu.dimension_semantics<parallel>], iteration_bounds = array<i64: 1>, scalar_prefetch = 0 : i64, scratch_operands = 0 : i64, tpu.core_type = #tpu.core_type<tc>, window_params = [{transform_indices = @transform_0, window_bounds = array<i64: 2, 8, 32>}, {transform_indices = @transform_1, window_bounds = array<i64: 2, 8, 32>}, {transform_indices = @transform_2, window_bounds = array<i64: 2, 8, 32>}, {pipeline_mode = #tpu.pipeline_mode<synchronous>, transform_indices = @transform_3, window_bounds = array<i64: 4, 4, 32, 8>}, {pipeline_mode = #tpu.pipeline_mode<synchronous>, transform_indices = @transform_4, window_bounds = array<i64: 2, 32>}, {transform_indices = @transform_5, window_bounds = array<i64: 2, 8, 32>}]} {
    %c0 = arith.constant 0 : index
    %c0_0 = arith.constant 0 : index
    %c0_1 = arith.constant 0 : index
    %0 = vector.load %arg1[%c0, %c0_0, %c0_1] : memref<2x8x32xf32, #tpu.memory_space<vmem>>, vector<2x8x32xf32>
    %c0_2 = arith.constant 0 : index
    %c0_3 = arith.constant 0 : index
    %c0_4 = arith.constant 0 : index
    %1 = vector.load %arg2[%c0_2, %c0_3, %c0_4] : memref<2x8x32xf32, #tpu.memory_space<vmem>>, vector<2x8x32xf32>
    %c0_5 = arith.constant 0 : index
    %c0_6 = arith.constant 0 : index
    %c0_7 = arith.constant 0 : index
    %2 = vector.load %arg3[%c0_5, %c0_6, %c0_7] : memref<2x8x32xf32, #tpu.memory_space<vmem>>, vector<2x8x32xf32>
    %3 = vector.shape_cast %0 : vector<2x8x32xf32> to vector<2x1x8x32xf32>
    %4 = vector.shape_cast %3 : vector<2x1x8x32xf32> to vector<2x1x8x32xf32>
    %5 = vector.broadcast %4 : vector<2x1x8x32xf32> to vector<2x4x8x32xf32>
    %6 = vector.shape_cast %5 : vector<2x4x8x32xf32> to vector<8x8x32xf32>
    %7 = vector.shape_cast %1 : vector<2x8x32xf32> to vector<2x1x8x32xf32>
    %8 = vector.shape_cast %7 : vector<2x1x8x32xf32> to vector<2x1x8x32xf32>
    %9 = vector.broadcast %8 : vector<2x1x8x32xf32> to vector<2x4x8x32xf32>
    %10 = vector.shape_cast %9 : vector<2x4x8x32xf32> to vector<8x8x32xf32>
    %11 = vector.shape_cast %2 : vector<2x8x32xf32> to vector<2x1x8x32xf32>
    %12 = vector.shape_cast %11 : vector<2x1x8x32xf32> to vector<2x1x8x32xf32>
    %13 = vector.broadcast %12 : vector<2x1x8x32xf32> to vector<2x4x8x32xf32>
    %14 = vector.shape_cast %13 : vector<2x4x8x32xf32> to vector<8x8x32xf32>
    %c0_8 = arith.constant 0 : index
    %c0_9 = arith.constant 0 : index
    %c0_10 = arith.constant 0 : index
    %c0_11 = arith.constant 0 : index
    %15 = vector.load %arg4[%c0_8, %c0_9, %c0_10, %c0_11] : memref<4x4x32x8xf32, #tpu.memory_space<vmem>>, vector<1x4x32x8xf32>
    %16 = vector.shape_cast %15 : vector<1x4x32x8xf32> to vector<4x32x8xf32>
    %17 = vector.shape_cast %16 : vector<4x32x8xf32> to vector<1x4x32x8xf32>
    %18 = vector.shape_cast %17 : vector<1x4x32x8xf32> to vector<1x4x32x8xf32>
    %19 = vector.broadcast %18 : vector<1x4x32x8xf32> to vector<2x4x32x8xf32>
    %20 = vector.shape_cast %19 : vector<2x4x32x8xf32> to vector<8x32x8xf32>
    %c1 = arith.constant 1 : index
    %c0_12 = arith.constant 0 : index
    %c0_13 = arith.constant 0 : index
    %c0_14 = arith.constant 0 : index
    %21 = vector.load %arg4[%c1, %c0_12, %c0_13, %c0_14] : memref<4x4x32x8xf32, #tpu.memory_space<vmem>>, vector<1x4x32x8xf32>
    %22 = vector.shape_cast %21 : vector<1x4x32x8xf32> to vector<4x32x8xf32>
    %23 = vector.shape_cast %22 : vector<4x32x8xf32> to vector<1x4x32x8xf32>
    %24 = vector.shape_cast %23 : vector<1x4x32x8xf32> to vector<1x4x32x8xf32>
    %25 = vector.broadcast %24 : vector<1x4x32x8xf32> to vector<2x4x32x8xf32>
    %26 = vector.shape_cast %25 : vector<2x4x32x8xf32> to vector<8x32x8xf32>
    %c2 = arith.constant 2 : index
    %c0_15 = arith.constant 0 : index
    %c0_16 = arith.constant 0 : index
    %c0_17 = arith.constant 0 : index
    %27 = vector.load %arg4[%c2, %c0_15, %c0_16, %c0_17] : memref<4x4x32x8xf32, #tpu.memory_space<vmem>>, vector<1x4x32x8xf32>
    %28 = vector.shape_cast %27 : vector<1x4x32x8xf32> to vector<4x32x8xf32>
    %29 = vector.shape_cast %28 : vector<4x32x8xf32> to vector<1x4x32x8xf32>
    %30 = vector.shape_cast %29 : vector<1x4x32x8xf32> to vector<1x4x32x8xf32>
    %31 = vector.broadcast %30 : vector<1x4x32x8xf32> to vector<2x4x32x8xf32>
    %32 = vector.shape_cast %31 : vector<2x4x32x8xf32> to vector<8x32x8xf32>
    %c3 = arith.constant 3 : index
    %c0_18 = arith.constant 0 : index
    %c0_19 = arith.constant 0 : index
    %c0_20 = arith.constant 0 : index
    %33 = vector.load %arg4[%c3, %c0_18, %c0_19, %c0_20] : memref<4x4x32x8xf32, #tpu.memory_space<vmem>>, vector<1x4x32x8xf32>
    %34 = vector.shape_cast %33 : vector<1x4x32x8xf32> to vector<4x32x8xf32>
    %35 = vector.shape_cast %34 : vector<4x32x8xf32> to vector<1x4x32x8xf32>
    %36 = vector.shape_cast %35 : vector<1x4x32x8xf32> to vector<1x4x32x8xf32>
    %37 = vector.broadcast %36 : vector<1x4x32x8xf32> to vector<2x4x32x8xf32>
    %38 = vector.shape_cast %37 : vector<2x4x32x8xf32> to vector<8x32x8xf32>
    "tpu.trace_start"() <{level = 10 : i32, message = "gsm,gmd->gsd"}> : () -> ()
    %cst = arith.constant dense<0.000000e+00> : vector<8x8x8xf32>
    %39 = tpu.matmul %6, %20, %cst {dimension_numbers = #tpu.dot_dimension_numbers<[2], [1], [1], [2], [0, 0, 0, 1, 1, 2], [0], [0]>} : vector<8x8x32xf32>, vector<8x32x8xf32>, vector<8x8x8xf32> -> vector<8x8x8xf32>
    "tpu.trace_stop"() : () -> ()
    %cst_21 = arith.constant 0.353553385 : f32
    %40 = vector.broadcast %cst_21 : f32 to vector<8x8x8xf32>
    %41 = arith.mulf %39, %40 : vector<8x8x8xf32>
    "tpu.trace_start"() <{level = 10 : i32, message = "gsm,gmd->gsd"}> : () -> ()
    %cst_22 = arith.constant dense<0.000000e+00> : vector<8x8x8xf32>
    %42 = tpu.matmul %10, %26, %cst_22 {dimension_numbers = #tpu.dot_dimension_numbers<[2], [1], [1], [2], [0, 0, 0, 1, 1, 2], [0], [0]>} : vector<8x8x32xf32>, vector<8x32x8xf32>, vector<8x8x8xf32> -> vector<8x8x8xf32>
    %cst_23 = arith.constant dense<0.000000e+00> : vector<8x8x8xf32>
    %43 = tpu.matmul %14, %32, %cst_23 {dimension_numbers = #tpu.dot_dimension_numbers<[2], [1], [1], [2], [0, 0, 0, 1, 1, 2], [0], [0]>} : vector<8x8x32xf32>, vector<8x32x8xf32>, vector<8x8x8xf32> -> vector<8x8x8xf32>
    "tpu.trace_stop"() : () -> ()
    "tpu.trace_start"() <{level = 10 : i32, message = "gqd,gkd->gqk"}> : () -> ()
    %cst_24 = arith.constant dense<0.000000e+00> : vector<8x8x8xf32>
    %44 = tpu.matmul %41, %42, %cst_24 {dimension_numbers = #tpu.dot_dimension_numbers<[2], [2], [1], [1], [0, 0, 0, 1, 1, 1], [0], [0]>} : vector<8x8x8xf32>, vector<8x8x8xf32>, vector<8x8x8xf32> -> vector<8x8x8xf32>
    "tpu.trace_stop"() : () -> ()
    %cst_25 = arith.constant dense<0xFF800000> : vector<8x8xf32>
    %45 = vector.multi_reduction <maximumf>, %44, %cst_25 [2] : vector<8x8x8xf32> to vector<8x8xf32>
    %46 = vector.shape_cast %45 : vector<8x8xf32> to vector<8x8x1xf32>
    %47 = vector.broadcast %46 : vector<8x8x1xf32> to vector<8x8x8xf32>
    %48 = arith.subf %44, %47 : vector<8x8x8xf32>
    %49 = math.exp %48 : vector<8x8x8xf32>
    %cst_26 = arith.constant dense<0.000000e+00> : vector<8x8xf32>
    %50 = vector.multi_reduction <add>, %49, %cst_26 [2] : vector<8x8x8xf32> to vector<8x8xf32>
    %51 = vector.shape_cast %50 : vector<8x8xf32> to vector<8x8x1xf32>
    %52 = vector.broadcast %51 : vector<8x8x1xf32> to vector<8x8x8xf32>
    %53 = arith.divf %49, %52 : vector<8x8x8xf32>
    "tpu.trace_start"() <{level = 10 : i32, message = "gqk,gkd->gqd"}> : () -> ()
    %cst_27 = arith.constant dense<0.000000e+00> : vector<8x8x8xf32>
    %54 = tpu.matmul %53, %43, %cst_27 {dimension_numbers = #tpu.dot_dimension_numbers<[2], [1], [1], [2], [0, 0, 0, 1, 1, 2], [0], [0]>} : vector<8x8x8xf32>, vector<8x8x8xf32>, vector<8x8x8xf32> -> vector<8x8x8xf32>
    "tpu.trace_stop"() : () -> ()
    "tpu.trace_start"() <{level = 10 : i32, message = "gqd,gnd->gqn"}> : () -> ()
    %cst_28 = arith.constant dense<0.000000e+00> : vector<8x8x32xf32>
    %55 = tpu.matmul %54, %38, %cst_28 {dimension_numbers = #tpu.dot_dimension_numbers<[2], [2], [1], [1], [0, 0, 0, 1, 1, 1], [0], [0]>} : vector<8x8x8xf32>, vector<8x32x8xf32>, vector<8x8x32xf32> -> vector<8x8x32xf32>
    "tpu.trace_stop"() : () -> ()
    %56 = vector.shape_cast %55 : vector<8x8x32xf32> to vector<2x4x8x32xf32>
    %cst_29 = arith.constant dense<0.000000e+00> : vector<2x8x32xf32>
    %57 = vector.multi_reduction <add>, %56, %cst_29 [1] : vector<2x4x8x32xf32> to vector<2x8x32xf32>
    %58 = arith.addf %57, %0 : vector<2x8x32xf32>
    %cst_30 = arith.constant dense<0.000000e+00> : vector<2x8xf32>
    %59 = vector.multi_reduction <add>, %58, %cst_30 [2] : vector<2x8x32xf32> to vector<2x8xf32>
    %60 = vector.shape_cast %59 : vector<2x8xf32> to vector<2x8x1xf32>
    %cst_31 = arith.constant 3.200000e+01 : f32
    %61 = vector.broadcast %cst_31 : f32 to vector<2x8x1xf32>
    %62 = arith.divf %60, %61 : vector<2x8x1xf32>
    %63 = vector.broadcast %62 : vector<2x8x1xf32> to vector<2x8x32xf32>
    %64 = arith.subf %58, %63 : vector<2x8x32xf32>
    %65 = arith.mulf %64, %64 : vector<2x8x32xf32>
    %cst_32 = arith.constant dense<0.000000e+00> : vector<2x8xf32>
    %66 = vector.multi_reduction <add>, %65, %cst_32 [2] : vector<2x8x32xf32> to vector<2x8xf32>
    %67 = vector.shape_cast %66 : vector<2x8xf32> to vector<2x8x1xf32>
    %cst_33 = arith.constant 3.200000e+01 : f32
    %68 = vector.broadcast %cst_33 : f32 to vector<2x8x1xf32>
    %69 = arith.divf %67, %68 : vector<2x8x1xf32>
    %70 = vector.broadcast %62 : vector<2x8x1xf32> to vector<2x8x32xf32>
    %71 = arith.subf %58, %70 : vector<2x8x32xf32>
    %cst_34 = arith.constant 9.99999974E-6 : f32
    %72 = vector.broadcast %cst_34 : f32 to vector<2x8x1xf32>
    %73 = arith.addf %69, %72 : vector<2x8x1xf32>
    %74 = math.rsqrt %73 : vector<2x8x1xf32>
    %75 = vector.broadcast %74 : vector<2x8x1xf32> to vector<2x8x32xf32>
    %76 = arith.mulf %71, %75 : vector<2x8x32xf32>
    %c0_35 = arith.constant 0 : index
    %c0_36 = arith.constant 0 : index
    %77 = vector.load %arg5[%c0_35, %c0_36] : memref<2x32xf32, #tpu.memory_space<vmem>>, vector<2x32xf32>
    %78 = vector.extract_strided_slice %77 {offsets = [0, 0], sizes = [1, 32], strides = [1, 1]} : vector<2x32xf32> to vector<1x32xf32>
    %79 = vector.shape_cast %78 : vector<1x32xf32> to vector<1x1x32xf32>
    %80 = vector.broadcast %79 : vector<1x1x32xf32> to vector<2x8x32xf32>
    %81 = arith.mulf %76, %80 : vector<2x8x32xf32>
    %82 = vector.extract_strided_slice %77 {offsets = [1, 0], sizes = [1, 32], strides = [1, 1]} : vector<2x32xf32> to vector<1x32xf32>
    %83 = vector.shape_cast %82 : vector<1x32xf32> to vector<1x1x32xf32>
    %84 = vector.broadcast %83 : vector<1x1x32xf32> to vector<2x8x32xf32>
    %85 = arith.addf %81, %84 : vector<2x8x32xf32>
    %c0_37 = arith.constant 0 : index
    %c0_38 = arith.constant 0 : index
    %c0_39 = arith.constant 0 : index
    %86 = vector.load %arg6[%c0_37, %c0_38, %c0_39] : memref<2x8x32xf32, #tpu.memory_space<vmem>>, vector<2x8x32xf32>
    tpu.vector_store %arg6[%c0_37, %c0_38, %c0_39], %85 {strides = array<i32>} : memref<2x8x32xf32, #tpu.memory_space<vmem>>, vector<2x8x32xf32>,
    return
  }
  func.func @transform_0(%arg0: i32) -> (i32, i32, i32) {
    %c0_i32 = arith.constant 0 : i32
    %c0_i32_0 = arith.constant 0 : i32
    %c0_i32_1 = arith.constant 0 : i32
    return %arg0, %c0_i32, %c0_i32_0 : i32, i32, i32
  }
  func.func @transform_1(%arg0: i32) -> (i32, i32, i32) {
    %c0_i32 = arith.constant 0 : i32
    %c0_i32_0 = arith.constant 0 : i32
    %c0_i32_1 = arith.constant 0 : i32
    return %arg0, %c0_i32, %c0_i32_0 : i32, i32, i32
  }
  func.func @transform_2(%arg0: i32) -> (i32, i32, i32) {
    %c0_i32 = arith.constant 0 : i32
    %c0_i32_0 = arith.constant 0 : i32
    %c0_i32_1 = arith.constant 0 : i32
    return %arg0, %c0_i32, %c0_i32_0 : i32, i32, i32
  }
  func.func @transform_3(%arg0: i32) -> (i32, i32, i32, i32) {
    %c0_i32 = arith.constant 0 : i32
    %c0_i32_0 = arith.constant 0 : i32
    %c0_i32_1 = arith.constant 0 : i32
    %c0_i32_2 = arith.constant 0 : i32
    %c0_i32_3 = arith.constant 0 : i32
    return %c0_i32, %c0_i32_0, %c0_i32_1, %c0_i32_2 : i32, i32, i32, i32
  }
  func.func @transform_4(%arg0: i32) -> (i32, i32) {
    %c0_i32 = arith.constant 0 : i32
    %c0_i32_0 = arith.constant 0 : i32
    %c0_i32_1 = arith.constant 0 : i32
    return %c0_i32, %c0_i32_0 : i32, i32
  }
  func.func @transform_5(%arg0: i32) -> (i32, i32, i32) {
    %c0_i32 = arith.constant 0 : i32
    %c0_i32_0 = arith.constant 0 : i32
    %c0_i32_1 = arith.constant 0 : i32
    return %arg0, %c0_i32, %c0_i32_0 : i32, i32, i32
  }
}

</mosaic_0001>

<llo_original>
// kernel: tpu_custom_call.1
$region0: #{tpu_custom_call.1}
  #allocation0 [shape = 'u32[]', space=smem, size = 0x4, offset = 0x4, fixed_abs, tag = 'smem constant byte address 0x4 - core index']
  #allocation1 [shape = 'u32[144,128]{1,0:T(1,128)}', space=vmem, size = 0x12000, scoped, tag = 'internal scratch']
  %s0 = inlined_call_operand.vmem [shape: f32[2,8,32], index: 0, kind: input, shape index: {}]
  %s1 = inlined_call_operand.vmem [shape: f32[2,8,32], index: 1, kind: input, shape index: {}]
  %s2 = inlined_call_operand.vmem [shape: f32[2,8,32], index: 2, kind: input, shape index: {}]
  %s3 = inlined_call_operand.vmem [shape: f32[4,4,32,8], index: 3, kind: input, shape index: {}]
  %s4 = inlined_call_operand.vmem [shape: f32[2,32], index: 4, kind: input, shape index: {}]
  %s5 = inlined_call_operand.hbm [shape: f32[2,8,32], index: 5, kind: output, shape index: {}]
  %s6 = sld [smem:[#allocation0]]
  $region30: #{tpu_custom_call.1} parent=0
    _
  %s8 = ssub.s32 1, %s6
  %s9 = scalar_select 0, %s8, %s6
  $region1: #{tpu_custom_call.1} parent=0
    #allocation2 [shape = 'u8[8192]{0}', space=vmem, size = 0x2000, scoped, tag = 'output window, operand 0, single buffered']
    #allocation3 [shape = 's32[1]{0}', space=sflag, size = 0x4, scoped, tag = 'scoped memory for tpu_custom_call.1']
    %10 = vsyncpa [#allocation3], 0
    // Predicated region
    $region2: #{tpu_custom_call.1} parent=1 // pred_check
      _
    $region3: #{tpu_custom_call.1} parent=1 // pred_check_branch
      %12 = sbr.rel (0) target = $region5
    $region4: #{tpu_custom_call.1} parent=1 // pred_region
      _
    $region5: #{tpu_custom_call.1} parent=1 // pred_fallthru
      _
    // Predicated region
    $region6: #{tpu_custom_call.1} parent=1 // pred_check
      _
    $region7: #{tpu_custom_call.1} parent=1 // pred_check_branch
      %14 = sbr.rel (0) target = $region9
    $region8: #{tpu_custom_call.1} parent=1 // pred_region
      _
    $region9: #{tpu_custom_call.1} parent=1 // pred_fallthru
      _
    // Predicated region
    $region10: #{tpu_custom_call.1} parent=1 // pred_check
      _
    $region11: #{tpu_custom_call.1} parent=1 // pred_check_branch
      %16 = sbr.rel (0) target = $region13
    $region12: #{tpu_custom_call.1} parent=1 // pred_region
      _
    $region13: #{tpu_custom_call.1} parent=1 // pred_fallthru
      _
    // Predicated region
    $region14: #{tpu_custom_call.1} parent=1 // pred_check
      _
    $region15: #{tpu_custom_call.1} parent=1 // pred_check_branch
      %18 = sbr.rel (0) target = $region17
    $region16: #{tpu_custom_call.1} parent=1 // pred_region
      _
    $region17: #{tpu_custom_call.1} parent=1 // pred_fallthru
      _
    // Predicated region
    $region18: #{tpu_custom_call.1} parent=1 // pred_check
      _
    $region19: #{tpu_custom_call.1} parent=1 // pred_check_branch
      %20 = sbr.rel (0) target = $region21
    $region20: #{tpu_custom_call.1} parent=1 // pred_region
      _
    $region21: #{tpu_custom_call.1} parent=1 // pred_fallthru
      _
    %v21 = vld [vmem:[%s0] sm:$0xff]
    %v22 = vld [vmem:[%s0 + $0x8] sm:$0xff]
    %v23 = vld [vmem:[%s1] sm:$0xff]
    %v24 = vld [vmem:[%s1 + $0x8] sm:$0xff]
    %v25 = vld [vmem:[%s2] sm:$0xff]
    %v26 = vld [vmem:[%s2 + $0x8] sm:$0xff]
    %v27 = vld [vmem:[%s3] sm:$0xff]
    %v28 = vld [vmem:[%s3 + $0x8] sm:$0xff]
    %v29 = vld [vmem:[%s3 + $0x10] sm:$0xff]
    %v30 = vld [vmem:[%s3 + $0x18] sm:$0xff]
    %v31 = vld [vmem:[%s3 + $0x20] sm:$0xff]
    %v32 = vld [vmem:[%s3 + $0x28] sm:$0xff]
    %v33 = vld [vmem:[%s3 + $0x30] sm:$0xff]
    %v34 = vld [vmem:[%s3 + $0x38] sm:$0xff]
    %v35 = vld [vmem:[%s3 + $0x40] sm:$0xff]
    %v36 = vld [vmem:[%s3 + $0x48] sm:$0xff]
    %v37 = vld [vmem:[%s3 + $0x50] sm:$0xff]
    %v38 = vld [vmem:[%s3 + $0x58] sm:$0xff]
    %v39 = vld [vmem:[%s3 + $0x60] sm:$0xff]
    %v40 = vld [vmem:[%s3 + $0x68] sm:$0xff]
    %v41 = vld [vmem:[%s3 + $0x70] sm:$0xff]
    %v42 = vld [vmem:[%s3 + $0x78] sm:$0xff]
    %s43 = scalar_lea.vmem %s3, 128
    %v44 = vld [vmem:[%s43] sm:$0xff]
    %v45 = vld [vmem:[%s43 + $0x8] sm:$0xff]
    %v46 = vld [vmem:[%s43 + $0x10] sm:$0xff]
    %v47 = vld [vmem:[%s43 + $0x18] sm:$0xff]
    %v48 = vld [vmem:[%s43 + $0x20] sm:$0xff]
    %v49 = vld [vmem:[%s43 + $0x28] sm:$0xff]
    %v50 = vld [vmem:[%s43 + $0x30] sm:$0xff]
    %v51 = vld [vmem:[%s43 + $0x38] sm:$0xff]
    %v52 = vld [vmem:[%s43 + $0x40] sm:$0xff]
    %v53 = vld [vmem:[%s43 + $0x48] sm:$0xff]
    %v54 = vld [vmem:[%s43 + $0x50] sm:$0xff]
    %v55 = vld [vmem:[%s43 + $0x58] sm:$0xff]
    %v56 = vld [vmem:[%s43 + $0x60] sm:$0xff]
    %v57 = vld [vmem:[%s43 + $0x68] sm:$0xff]
    %v58 = vld [vmem:[%s43 + $0x70] sm:$0xff]
    %v59 = vld [vmem:[%s43 + $0x78] sm:$0xff]
    %s60 = scalar_lea.vmem %s3, 256
    %v61 = vld [vmem:[%s60] sm:$0xff]
    %v62 = vld [vmem:[%s60 + $0x8] sm:$0xff]
    %v63 = vld [vmem:[%s60 + $0x10] sm:$0xff]
    %v64 = vld [vmem:[%s60 + $0x18] sm:$0xff]
    %v65 = vld [vmem:[%s60 + $0x20] sm:$0xff]
    %v66 = vld [vmem:[%s60 + $0x28] sm:$0xff]
    %v67 = vld [vmem:[%s60 + $0x30] sm:$0xff]
    %v68 = vld [vmem:[%s60 + $0x38] sm:$0xff]
    %v69 = vld [vmem:[%s60 + $0x40] sm:$0xff]
    %v70 = vld [vmem:[%s60 + $0x48] sm:$0xff]
    %v71 = vld [vmem:[%s60 + $0x50] sm:$0xff]
    %v72 = vld [vmem:[%s60 + $0x58] sm:$0xff]
    %v73 = vld [vmem:[%s60 + $0x60] sm:$0xff]
    %v74 = vld [vmem:[%s60 + $0x68] sm:$0xff]
    %v75 = vld [vmem:[%s60 + $0x70] sm:$0xff]
    %v76 = vld [vmem:[%s60 + $0x78] sm:$0xff]
    %s77 = scalar_lea.vmem %s3, 384
    %v78 = vld [vmem:[%s77] sm:$0xff]
    %v79 = vld [vmem:[%s77 + $0x8] sm:$0xff]
    %v80 = vld [vmem:[%s77 + $0x10] sm:$0xff]
    %v81 = vld [vmem:[%s77 + $0x18] sm:$0xff]
    %v82 = vld [vmem:[%s77 + $0x20] sm:$0xff]
    %v83 = vld [vmem:[%s77 + $0x28] sm:$0xff]
    %v84 = vld [vmem:[%s77 + $0x30] sm:$0xff]
    %v85 = vld [vmem:[%s77 + $0x38] sm:$0xff]
    %v86 = vld [vmem:[%s77 + $0x40] sm:$0xff]
    %v87 = vld [vmem:[%s77 + $0x48] sm:$0xff]
    %v88 = vld [vmem:[%s77 + $0x50] sm:$0xff]
    %v89 = vld [vmem:[%s77 + $0x58] sm:$0xff]
    %v90 = vld [vmem:[%s77 + $0x60] sm:$0xff]
    %v91 = vld [vmem:[%s77 + $0x68] sm:$0xff]
    %v92 = vld [vmem:[%s77 + $0x70] sm:$0xff]
    %v93 = vld [vmem:[%s77 + $0x78] sm:$0xff]
    %vm94 = vcmask 261120
    %v96 = vsel %vm94, %v21, 0
    %98 = vmatprep.subr.mxu0 0.0
    %99 = vmatpush1.msra.mxu0 0.0
    %100 = vmatprep.subr.mxu0 0.0
    %101 = vmatpush1.msra.mxu0 0.0
    %102 = vmatprep.subr.mxu0 0.0
    %103 = vmatpush1.msra.mxu0 0.0
    %104 = vmatprep.subr.mxu0 0.0
    %105 = vmatpush1.msra.mxu0 0.0
    %106 = vmatprep.subr.mxu0 0.0
    %107 = vmatpush1.msra.mxu0 0.0
    %108 = vmatprep.subr.mxu0 0.0
    %109 = vmatpush1.msra.mxu0 0.0
    %110 = vmatprep.subr.mxu0 0.0
    %111 = vmatpush1.msra.mxu0 0.0
    %112 = vmatprep.subr.mxu0 0.0
    %113 = vmatpush1.msra.mxu0 0.0
    %114 = vmatprep.subr.mxu0 0.0
    %115 = vmatpush1.msra.mxu0 0.0
    %116 = vmatprep.subr.mxu0 0.0
    %117 = vmatpush1.msra.mxu0 0.0
    %118 = vmatprep.subr.mxu0 0.0
    %119 = vmatpush1.msra.mxu0 0.0
    %120 = vmatprep.subr.mxu0 0.0
    %121 = vmatpush1.msra.mxu0 0.0
    %122 = vmatprep.subr.mxu0 0.0
    %123 = vmatpush1.msra.mxu0 %v30
    %124 = vmatprep.subr.mxu0 0.0
    %125 = vmatpush1.msra.mxu0 %v29
    %126 = vmatprep.subr.mxu0 0.0
    %127 = vmatpush1.msra.mxu0 %v28
    %128 = vmatprep.subr.mxu0 0.0
    %129 = vmatpush1.msra.mxu0 %v27
    %130 = vmatprep.subr.mxu0 0.0
    %131 = vmatpush2.msra.mxu0 0.0
    %132 = vmatprep.subr.mxu0 0.0
    %133 = vmatpush2.msra.mxu0 0.0
    %134 = vmatprep.subr.mxu0 0.0
    %135 = vmatpush2.msra.mxu0 0.0
    %136 = vmatprep.subr.mxu0 0.0
    %137 = vmatpush2.msra.mxu0 0.0
    %138 = vmatprep.subr.mxu0 0.0
    %139 = vmatpush2.msra.mxu0 0.0
    %140 = vmatprep.subr.mxu0 0.0
    %141 = vmatpush2.msra.mxu0 0.0
    %142 = vmatprep.subr.mxu0 0.0
    %143 = vmatpush2.msra.mxu0 0.0
    %144 = vmatprep.subr.mxu0 0.0
    %145 = vmatpush2.msra.mxu0 0.0
    %146 = vmatprep.subr.mxu0 0.0
    %147 = vmatpush2.msra.mxu0 0.0
    %148 = vmatprep.subr.mxu0 0.0
    %149 = vmatpush2.msra.mxu0 0.0
    %150 = vmatprep.subr.mxu0 0.0
    %151 = vmatpush2.msra.mxu0 0.0
    %152 = vmatprep.subr.mxu0 0.0
    %153 = vmatpush2.msra.mxu0 0.0
    %154 = vmatprep.subr.mxu0 0.0
    %155 = vmatpush2.msra.mxu0 0.0
    %156 = vmatprep.subr.mxu0 0.0
    %157 = vmatpush2.msra.mxu0 0.0
    %158 = vmatprep.subr.mxu0 0.0
    %159 = vmatpush2.msra.mxu0 0.0
    %160 = vmatprep.subr.mxu0 0.0
    %161 = vmatpush2.msra.mxu0 0.0
    %162 = vmatprep.mubr.f32.mxu0 0.0
    %163 = vmatmul.mubr.f32.gmra.mxu0 %v96
    %v164 = vpop.f32.mrf.mxu0
    %v165 = vadd.f32 0.0, %v164
    %v166 = vpop.f32.mrf.mxu0
    %167 = vdwg.mxu0
    %168 = vmatprep.subr.mxu0 0.0
    %169 = vmatpush1.msra.mxu0 0.0
    %170 = vmatprep.subr.mxu0 0.0
    %171 = vmatpush1.msra.mxu0 0.0
    %172 = vmatprep.subr.mxu0 0.0
    %173 = vmatpush1.msra.mxu0 0.0
    %174 = vmatprep.subr.mxu0 0.0
    %175 = vmatpush1.msra.mxu0 0.0
    %176 = vmatprep.subr.mxu0 0.0
    %177 = vmatpush1.msra.mxu0 0.0
    %178 = vmatprep.subr.mxu0 0.0
    %179 = vmatpush1.msra.mxu0 0.0
    %180 = vmatprep.subr.mxu0 0.0
    %181 = vmatpush1.msra.mxu0 0.0
    %182 = vmatprep.subr.mxu0 0.0
    %183 = vmatpush1.msra.mxu0 0.0
    %184 = vmatprep.subr.mxu0 0.0
    %185 = vmatpush1.msra.mxu0 0.0
    %186 = vmatprep.subr.mxu0 0.0
    %187 = vmatpush1.msra.mxu0 0.0
    %188 = vmatprep.subr.mxu0 0.0
    %189 = vmatpush1.msra.mxu0 0.0
    %190 = vmatprep.subr.mxu0 0.0
    %191 = vmatpush1.msra.mxu0 0.0
    %192 = vmatprep.subr.mxu0 0.0
    %193 = vmatpush1.msra.mxu0 %v34
    %194 = vmatprep.subr.mxu0 0.0
    %195 = vmatpush1.msra.mxu0 %v33
    %196 = vmatprep.subr.mxu0 0.0
    %197 = vmatpush1.msra.mxu0 %v32
    %198 = vmatprep.subr.mxu0 0.0
    %199 = vmatpush1.msra.mxu0 %v31
    %200 = vmatprep.subr.mxu0 0.0
    %201 = vmatpush2.msra.mxu0 0.0
    %202 = vmatprep.subr.mxu0 0.0
    %203 = vmatpush2.msra.mxu0 0.0
    %204 = vmatprep.subr.mxu0 0.0
    %205 = vmatpush2.msra.mxu0 0.0
    %206 = vmatprep.subr.mxu0 0.0
    %207 = vmatpush2.msra.mxu0 0.0
    %208 = vmatprep.subr.mxu0 0.0
    %209 = vmatpush2.msra.mxu0 0.0
    %210 = vmatprep.subr.mxu0 0.0
    %211 = vmatpush2.msra.mxu0 0.0
    %212 = vmatprep.subr.mxu0 0.0
    %213 = vmatpush2.msra.mxu0 0.0
    %214 = vmatprep.subr.mxu0 0.0
    %215 = vmatpush2.msra.mxu0 0.0
    %216 = vmatprep.subr.mxu0 0.0
    %217 = vmatpush2.msra.mxu0 0.0
    %218 = vmatprep.subr.mxu0 0.0
    %219 = vmatpush2.msra.mxu0 0.0
    %220 = vmatprep.subr.mxu0 0.0
    %221 = vmatpush2.msra.mxu0 0.0
    %222 = vmatprep.subr.mxu0 0.0
    %223 = vmatpush2.msra.mxu0 0.0
    %224 = vmatprep.subr.mxu0 0.0
    %225 = vmatpush2.msra.mxu0 0.0
    %226 = vmatprep.subr.mxu0 0.0
    %227 = vmatpush2.msra.mxu0 0.0
    %228 = vmatprep.subr.mxu0 0.0
    %229 = vmatpush2.msra.mxu0 0.0
    %230 = vmatprep.subr.mxu0 0.0
    %231 = vmatpush2.msra.mxu0 0.0
    %232 = vmatprep.mubr.f32.mxu0 0.0
    %233 = vmatmul.mubr.f32.gmra.mxu0 %v96
    %v234 = vpop.f32.mrf.mxu0
    %v235 = vadd.f32 0.0, %v234
    %v236 = vpop.f32.mrf.mxu0
    %237 = vdwg.mxu0
    %238 = vmatprep.subr.mxu0 0.0
    %239 = vmatpush1.msra.mxu0 0.0
    %240 = vmatprep.subr.mxu0 0.0
    %241 = vmatpush1.msra.mxu0 0.0
    %242 = vmatprep.subr.mxu0 0.0
    %243 = vmatpush1.msra.mxu0 0.0
    %244 = vmatprep.subr.mxu0 0.0
    %245 = vmatpush1.msra.mxu0 0.0
    %246 = vmatprep.subr.mxu0 0.0
    %247 = vmatpush1.msra.mxu0 0.0
    %248 = vmatprep.subr.mxu0 0.0
    %249 = vmatpush1.msra.mxu0 0.0
    %250 = vmatprep.subr.mxu0 0.0
    %251 = vmatpush1.msra.mxu0 0.0
    %252 = vmatprep.subr.mxu0 0.0
    %253 = vmatpush1.msra.mxu0 0.0
    %254 = vmatprep.subr.mxu0 0.0
    %255 = vmatpush1.msra.mxu0 0.0
    %256 = vmatprep.subr.mxu0 0.0
    %257 = vmatpush1.msra.mxu0 0.0
    %258 = vmatprep.subr.mxu0 0.0
    %259 = vmatpush1.msra.mxu0 0.0
    %260 = vmatprep.subr.mxu0 0.0
    %261 = vmatpush1.msra.mxu0 0.0
    %262 = vmatprep.subr.mxu0 0.0
    %263 = vmatpush1.msra.mxu0 %v38
    %264 = vmatprep.subr.mxu0 0.0
    %265 = vmatpush1.msra.mxu0 %v37
    %266 = vmatprep.subr.mxu0 0.0
    %267 = vmatpush1.msra.mxu0 %v36
    %268 = vmatprep.subr.mxu0 0.0
    %269 = vmatpush1.msra.mxu0 %v35
    %270 = vmatprep.subr.mxu0 0.0
    %271 = vmatpush2.msra.mxu0 0.0
    %272 = vmatprep.subr.mxu0 0.0
    %273 = vmatpush2.msra.mxu0 0.0
    %274 = vmatprep.subr.mxu0 0.0
    %275 = vmatpush2.msra.mxu0 0.0
    %276 = vmatprep.subr.mxu0 0.0
    %277 = vmatpush2.msra.mxu0 0.0
    %278 = vmatprep.subr.mxu0 0.0
    %279 = vmatpush2.msra.mxu0 0.0
    %280 = vmatprep.subr.mxu0 0.0
    %281 = vmatpush2.msra.mxu0 0.0
    %282 = vmatprep.subr.mxu0 0.0
    %283 = vmatpush2.msra.mxu0 0.0
    %284 = vmatprep.subr.mxu0 0.0
    %285 = vmatpush2.msra.mxu0 0.0
    %286 = vmatprep.subr.mxu0 0.0
    %287 = vmatpush2.msra.mxu0 0.0
    %288 = vmatprep.subr.mxu0 0.0
    %289 = vmatpush2.msra.mxu0 0.0
    %290 = vmatprep.subr.mxu0 0.0
    %291 = vmatpush2.msra.mxu0 0.0
    %292 = vmatprep.subr.mxu0 0.0
    %293 = vmatpush2.msra.mxu0 0.0
    %294 = vmatprep.subr.mxu0 0.0
    %295 = vmatpush2.msra.mxu0 0.0
    %296 = vmatprep.subr.mxu0 0.0
    %297 = vmatpush2.msra.mxu0 0.0
    %298 = vmatprep.subr.mxu0 0.0
    %299 = vmatpush2.msra.mxu0 0.0
    %300 = vmatprep.subr.mxu0 0.0
    %301 = vmatpush2.msra.mxu0 0.0
    %302 = vmatprep.mubr.f32.mxu0 0.0
    %303 = vmatmul.mubr.f32.gmra.mxu0 %v96
    %v304 = vpop.f32.mrf.mxu0
    %v305 = vadd.f32 0.0, %v304
    %v306 = vpop.f32.mrf.mxu0
    %307 = vdwg.mxu0
    %308 = vmatprep.subr.mxu0 0.0
    %309 = vmatpush1.msra.mxu0 0.0
    %310 = vmatprep.subr.mxu0 0.0
    %311 = vmatpush1.msra.mxu0 0.0
    %312 = vmatprep.subr.mxu0 0.0
    %313 = vmatpush1.msra.mxu0 0.0
    %314 = vmatprep.subr.mxu0 0.0
    %315 = vmatpush1.msra.mxu0 0.0
    %316 = vmatprep.subr.mxu0 0.0
    %317 = vmatpush1.msra.mxu0 0.0
    %318 = vmatprep.subr.mxu0 0.0
    %319 = vmatpush1.msra.mxu0 0.0
    %320 = vmatprep.subr.mxu0 0.0
    %321 = vmatpush1.msra.mxu0 0.0
    %322 = vmatprep.subr.mxu0 0.0
    %323 = vmatpush1.msra.mxu0 0.0
    %324 = vmatprep.subr.mxu0 0.0
    %325 = vmatpush1.msra.mxu0 0.0
    %326 = vmatprep.subr.mxu0 0.0
    %327 = vmatpush1.msra.mxu0 0.0
    %328 = vmatprep.subr.mxu0 0.0
    %329 = vmatpush1.msra.mxu0 0.0
    %330 = vmatprep.subr.mxu0 0.0
    %331 = vmatpush1.msra.mxu0 0.0
    %332 = vmatprep.subr.mxu0 0.0
    %333 = vmatpush1.msra.mxu0 %v42
    %334 = vmatprep.subr.mxu0 0.0
    %335 = vmatpush1.msra.mxu0 %v41
    %336 = vmatprep.subr.mxu0 0.0
    %337 = vmatpush1.msra.mxu0 %v40
    %338 = vmatprep.subr.mxu0 0.0
    %339 = vmatpush1.msra.mxu0 %v39
    %340 = vmatprep.subr.mxu0 0.0
    %341 = vmatpush2.msra.mxu0 0.0
    %342 = vmatprep.subr.mxu0 0.0
    %343 = vmatpush2.msra.mxu0 0.0
    %344 = vmatprep.subr.mxu0 0.0
    %345 = vmatpush2.msra.mxu0 0.0
    %346 = vmatprep.subr.mxu0 0.0
    %347 = vmatpush2.msra.mxu0 0.0
    %348 = vmatprep.subr.mxu0 0.0
    %349 = vmatpush2.msra.mxu0 0.0
    %350 = vmatprep.subr.mxu0 0.0
    %351 = vmatpush2.msra.mxu0 0.0
    %352 = vmatprep.subr.mxu0 0.0
    %353 = vmatpush2.msra.mxu0 0.0
    %354 = vmatprep.subr.mxu0 0.0
    %355 = vmatpush2.msra.mxu0 0.0
    %356 = vmatprep.subr.mxu0 0.0
    %357 = vmatpush2.msra.mxu0 0.0
    %358 = vmatprep.subr.mxu0 0.0
    %359 = vmatpush2.msra.mxu0 0.0
    %360 = vmatprep.subr.mxu0 0.0
    %361 = vmatpush2.msra.mxu0 0.0
    %362 = vmatprep.subr.mxu0 0.0
    %363 = vmatpush2.msra.mxu0 0.0
    %364 = vmatprep.subr.mxu0 0.0
    %365 = vmatpush2.msra.mxu0 0.0
    %366 = vmatprep.subr.mxu0 0.0
    %367 = vmatpush2.msra.mxu0 0.0
    %368 = vmatprep.subr.mxu0 0.0
    %369 = vmatpush2.msra.mxu0 0.0
    %370 = vmatprep.subr.mxu0 0.0
    %371 = vmatpush2.msra.mxu0 0.0
    %372 = vmatprep.mubr.f32.mxu0 0.0
    %373 = vmatmul.mubr.f32.gmra.mxu0 %v96
    %v374 = vpop.f32.mrf.mxu0
    %v375 = vadd.f32 0.0, %v374
    %v376 = vpop.f32.mrf.mxu0
    %377 = vdwg.mxu0
    %v379 = vsel %vm94, %v22, 0
    %381 = vmatprep.subr.mxu0 0.0
    %382 = vmatpush1.msra.mxu0 0.0
    %383 = vmatprep.subr.mxu0 0.0
    %384 = vmatpush1.msra.mxu0 0.0
    %385 = vmatprep.subr.mxu0 0.0
    %386 = vmatpush1.msra.mxu0 0.0
    %387 = vmatprep.subr.mxu0 0.0
    %388 = vmatpush1.msra.mxu0 0.0
    %389 = vmatprep.subr.mxu0 0.0
    %390 = vmatpush1.msra.mxu0 0.0
    %391 = vmatprep.subr.mxu0 0.0
    %392 = vmatpush1.msra.mxu0 0.0
    %393 = vmatprep.subr.mxu0 0.0
    %394 = vmatpush1.msra.mxu0 0.0
    %395 = vmatprep.subr.mxu0 0.0
    %396 = vmatpush1.msra.mxu0 0.0
    %397 = vmatprep.subr.mxu0 0.0
    %398 = vmatpush1.msra.mxu0 0.0
    %399 = vmatprep.subr.mxu0 0.0
    %400 = vmatpush1.msra.mxu0 0.0
    %401 = vmatprep.subr.mxu0 0.0
    %402 = vmatpush1.msra.mxu0 0.0
    %403 = vmatprep.subr.mxu0 0.0
    %404 = vmatpush1.msra.mxu0 0.0
    %405 = vmatprep.subr.mxu0 0.0
    %406 = vmatpush1.msra.mxu0 %v30
    %407 = vmatprep.subr.mxu0 0.0
    %408 = vmatpush1.msra.mxu0 %v29
    %409 = vmatprep.subr.mxu0 0.0
    %410 = vmatpush1.msra.mxu0 %v28
    %411 = vmatprep.subr.mxu0 0.0
    %412 = vmatpush1.msra.mxu0 %v27
    %413 = vmatprep.subr.mxu0 0.0
    %414 = vmatpush2.msra.mxu0 0.0
    %415 = vmatprep.subr.mxu0 0.0
    %416 = vmatpush2.msra.mxu0 0.0
    %417 = vmatprep.subr.mxu0 0.0
    %418 = vmatpush2.msra.mxu0 0.0
    %419 = vmatprep.subr.mxu0 0.0
    %420 = vmatpush2.msra.mxu0 0.0
    %421 = vmatprep.subr.mxu0 0.0
    %422 = vmatpush2.msra.mxu0 0.0
    %423 = vmatprep.subr.mxu0 0.0
    %424 = vmatpush2.msra.mxu0 0.0
    %425 = vmatprep.subr.mxu0 0.0
    %426 = vmatpush2.msra.mxu0 0.0
    %427 = vmatprep.subr.mxu0 0.0
    %428 = vmatpush2.msra.mxu0 0.0
    %429 = vmatprep.subr.mxu0 0.0
    %430 = vmatpush2.msra.mxu0 0.0
    %431 = vmatprep.subr.mxu0 0.0
    %432 = vmatpush2.msra.mxu0 0.0
    %433 = vmatprep.subr.mxu0 0.0
    %434 = vmatpush2.msra.mxu0 0.0
    %435 = vmatprep.subr.mxu0 0.0
    %436 = vmatpush2.msra.mxu0 0.0
    %437 = vmatprep.subr.mxu0 0.0
    %438 = vmatpush2.msra.mxu0 0.0
    %439 = vmatprep.subr.mxu0 0.0
    %440 = vmatpush2.msra.mxu0 0.0
    %441 = vmatprep.subr.mxu0 0.0
    %442 = vmatpush2.msra.mxu0 0.0
    %443 = vmatprep.subr.mxu0 0.0
    %444 = vmatpush2.msra.mxu0 0.0
    %445 = vmatprep.mubr.f32.mxu0 0.0
    %446 = vmatmul.mubr.f32.gmra.mxu0 %v379
    %v447 = vpop.f32.mrf.mxu0
    %v448 = vadd.f32 0.0, %v447
    %v449 = vpop.f32.mrf.mxu0
    %450 = vdwg.mxu0
    %451 = vmatprep.subr.mxu0 0.0
    %452 = vmatpush1.msra.mxu0 0.0
    %453 = vmatprep.subr.mxu0 0.0
    %454 = vmatpush1.msra.mxu0 0.0
    %455 = vmatprep.subr.mxu0 0.0
    %456 = vmatpush1.msra.mxu0 0.0
    %457 = vmatprep.subr.mxu0 0.0
    %458 = vmatpush1.msra.mxu0 0.0
    %459 = vmatprep.subr.mxu0 0.0
    %460 = vmatpush1.msra.mxu0 0.0
    %461 = vmatprep.subr.mxu0 0.0
    %462 = vmatpush1.msra.mxu0 0.0
    %463 = vmatprep.subr.mxu0 0.0
    %464 = vmatpush1.msra.mxu0 0.0
    %465 = vmatprep.subr.mxu0 0.0
    %466 = vmatpush1.msra.mxu0 0.0
    %467 = vmatprep.subr.mxu0 0.0
    %468 = vmatpush1.msra.mxu0 0.0
    %469 = vmatprep.subr.mxu0 0.0
    %470 = vmatpush1.msra.mxu0 0.0
    %471 = vmatprep.subr.mxu0 0.0
    %472 = vmatpush1.msra.mxu0 0.0
    %473 = vmatprep.subr.mxu0 0.0
    %474 = vmatpush1.msra.mxu0 0.0
    %475 = vmatprep.subr.mxu0 0.0
    %476 = vmatpush1.msra.mxu0 %v34
    %477 = vmatprep.subr.mxu0 0.0
    %478 = vmatpush1.msra.mxu0 %v33
    %479 = vmatprep.subr.mxu0 0.0
    %480 = vmatpush1.msra.mxu0 %v32
    %481 = vmatprep.subr.mxu0 0.0
    %482 = vmatpush1.msra.mxu0 %v31
    %483 = vmatprep.subr.mxu0 0.0
    %484 = vmatpush2.msra.mxu0 0.0
    %485 = vmatprep.subr.mxu0 0.0
    %486 = vmatpush2.msra.mxu0 0.0
    %487 = vmatprep.subr.mxu0 0.0
    %488 = vmatpush2.msra.mxu0 0.0
    %489 = vmatprep.subr.mxu0 0.0
    %490 = vmatpush2.msra.mxu0 0.0
    %491 = vmatprep.subr.mxu0 0.0
    %492 = vmatpush2.msra.mxu0 0.0
    %493 = vmatprep.subr.mxu0 0.0
    %494 = vmatpush2.msra.mxu0 0.0
    %495 = vmatprep.subr.mxu0 0.0
    %496 = vmatpush2.msra.mxu0 0.0
    %497 = vmatprep.subr.mxu0 0.0
    %498 = vmatpush2.msra.mxu0 0.0
    %499 = vmatprep.subr.mxu0 0.0
    %500 = vmatpush2.msra.mxu0 0.0
    %501 = vmatprep.subr.mxu0 0.0
    %502 = vmatpush2.msra.mxu0 0.0
    %503 = vmatprep.subr.mxu0 0.0
    %504 = vmatpush2.msra.mxu0 0.0
    %505 = vmatprep.subr.mxu0 0.0
    %506 = vmatpush2.msra.mxu0 0.0
    %507 = vmatprep.subr.mxu0 0.0
    %508 = vmatpush2.msra.mxu0 0.0
    %509 = vmatprep.subr.mxu0 0.0
    %510 = vmatpush2.msra.mxu0 0.0
    %511 = vmatprep.subr.mxu0 0.0
    %512 = vmatpush2.msra.mxu0 0.0
    %513 = vmatprep.subr.mxu0 0.0
    %514 = vmatpush2.msra.mxu0 0.0
    %515 = vmatprep.mubr.f32.mxu0 0.0
    %516 = vmatmul.mubr.f32.gmra.mxu0 %v379
    %v517 = vpop.f32.mrf.mxu0
    %v518 = vadd.f32 0.0, %v517
    %v519 = vpop.f32.mrf.mxu0
    %520 = vdwg.mxu0
    %521 = vmatprep.subr.mxu0 0.0
    %522 = vmatpush1.msra.mxu0 0.0
    %523 = vmatprep.subr.mxu0 0.0
    %524 = vmatpush1.msra.mxu0 0.0
    %525 = vmatprep.subr.mxu0 0.0
    %526 = vmatpush1.msra.mxu0 0.0
    %527 = vmatprep.subr.mxu0 0.0
    %528 = vmatpush1.msra.mxu0 0.0
    %529 = vmatprep.subr.mxu0 0.0
    %530 = vmatpush1.msra.mxu0 0.0
    %531 = vmatprep.subr.mxu0 0.0
    %532 = vmatpush1.msra.mxu0 0.0
    %533 = vmatprep.subr.mxu0 0.0
    %534 = vmatpush1.msra.mxu0 0.0
    %535 = vmatprep.subr.mxu0 0.0
    %536 = vmatpush1.msra.mxu0 0.0
    %537 = vmatprep.subr.mxu0 0.0
    %538 = vmatpush1.msra.mxu0 0.0
    %539 = vmatprep.subr.mxu0 0.0
    %540 = vmatpush1.msra.mxu0 0.0
    %541 = vmatprep.subr.mxu0 0.0
    %542 = vmatpush1.msra.mxu0 0.0
    %543 = vmatprep.subr.mxu0 0.0
    %544 = vmatpush1.msra.mxu0 0.0
    %545 = vmatprep.subr.mxu0 0.0
    %546 = vmatpush1.msra.mxu0 %v38
    %547 = vmatprep.subr.mxu0 0.0
    %548 = vmatpush1.msra.mxu0 %v37
    %549 = vmatprep.subr.mxu0 0.0
    %550 = vmatpush1.msra.mxu0 %v36
    %551 = vmatprep.subr.mxu0 0.0
    %552 = vmatpush1.msra.mxu0 %v35
    %553 = vmatprep.subr.mxu0 0.0
    %554 = vmatpush2.msra.mxu0 0.0
    %555 = vmatprep.subr.mxu0 0.0
    %556 = vmatpush2.msra.mxu0 0.0
    %557 = vmatprep.subr.mxu0 0.0
    %558 = vmatpush2.msra.mxu0 0.0
    %559 = vmatprep.subr.mxu0 0.0
    %560 = vmatpush2.msra.mxu0 0.0
    %561 = vmatprep.subr.mxu0 0.0
    %562 = vmatpush2.msra.mxu0 0.0
    %563 = vmatprep.subr.mxu0 0.0
    %564 = vmatpush2.msra.mxu0 0.0
    %565 = vmatprep.subr.mxu0 0.0
    %566 = vmatpush2.msra.mxu0 0.0
    %567 = vmatprep.subr.mxu0 0.0
    %568 = vmatpush2.msra.mxu0 0.0
    %569 = vmatprep.subr.mxu0 0.0
    %570 = vmatpush2.msra.mxu0 0.0
    %571 = vmatprep.subr.mxu0 0.0
    %572 = vmatpush2.msra.mxu0 0.0
    %573 = vmatprep.subr.mxu0 0.0
    %574 = vmatpush2.msra.mxu0 0.0
    %575 = vmatprep.subr.mxu0 0.0
    %576 = vmatpush2.msra.mxu0 0.0
    %577 = vmatprep.subr.mxu0 0.0
    %578 = vmatpush2.msra.mxu0 0.0
    %579 = vmatprep.subr.mxu0 0.0
    %580 = vmatpush2.msra.mxu0 0.0
    %581 = vmatprep.subr.mxu0 0.0
    %582 = vmatpush2.msra.mxu0 0.0
    %583 = vmatprep.subr.mxu0 0.0
    %584 = vmatpush2.msra.mxu0 0.0
    %585 = vmatprep.mubr.f32.mxu0 0.0
    %586 = vmatmul.mubr.f32.gmra.mxu0 %v379
    %v587 = vpop.f32.mrf.mxu0
    %v588 = vadd.f32 0.0, %v587
    %v589 = vpop.f32.mrf.mxu0
    %590 = vdwg.mxu0
    %591 = vmatprep.subr.mxu0 0.0
    %592 = vmatpush1.msra.mxu0 0.0
    %593 = vmatprep.subr.mxu0 0.0
    %594 = vmatpush1.msra.mxu0 0.0
    %595 = vmatprep.subr.mxu0 0.0
    %596 = vmatpush1.msra.mxu0 0.0
    %597 = vmatprep.subr.mxu0 0.0
    %598 = vmatpush1.msra.mxu0 0.0
    %599 = vmatprep.subr.mxu0 0.0
    %600 = vmatpush1.msra.mxu0 0.0
    %601 = vmatprep.subr.mxu0 0.0
    %602 = vmatpush1.msra.mxu0 0.0
    %603 = vmatprep.subr.mxu0 0.0
    %604 = vmatpush1.msra.mxu0 0.0
    %605 = vmatprep.subr.mxu0 0.0
    %606 = vmatpush1.msra.mxu0 0.0
    %607 = vmatprep.subr.mxu0 0.0
    %608 = vmatpush1.msra.mxu0 0.0
    %609 = vmatprep.subr.mxu0 0.0
    %610 = vmatpush1.msra.mxu0 0.0
    %611 = vmatprep.subr.mxu0 0.0
    %612 = vmatpush1.msra.mxu0 0.0
    %613 = vmatprep.subr.mxu0 0.0
    %614 = vmatpush1.msra.mxu0 0.0
    %615 = vmatprep.subr.mxu0 0.0
    %616 = vmatpush1.msra.mxu0 %v42
    %617 = vmatprep.subr.mxu0 0.0
    %618 = vmatpush1.msra.mxu0 %v41
    %619 = vmatprep.subr.mxu0 0.0
    %620 = vmatpush1.msra.mxu0 %v40
    %621 = vmatprep.subr.mxu0 0.0
    %622 = vmatpush1.msra.mxu0 %v39
    %623 = vmatprep.subr.mxu0 0.0
    %624 = vmatpush2.msra.mxu0 0.0
    %625 = vmatprep.subr.mxu0 0.0
    %626 = vmatpush2.msra.mxu0 0.0
    %627 = vmatprep.subr.mxu0 0.0
    %628 = vmatpush2.msra.mxu0 0.0
    %629 = vmatprep.subr.mxu0 0.0
    %630 = vmatpush2.msra.mxu0 0.0
    %631 = vmatprep.subr.mxu0 0.0
    %632 = vmatpush2.msra.mxu0 0.0
    %633 = vmatprep.subr.mxu0 0.0
    %634 = vmatpush2.msra.mxu0 0.0
    %635 = vmatprep.subr.mxu0 0.0
    %636 = vmatpush2.msra.mxu0 0.0
    %637 = vmatprep.subr.mxu0 0.0
    %638 = vmatpush2.msra.mxu0 0.0
    %639 = vmatprep.subr.mxu0 0.0
    %640 = vmatpush2.msra.mxu0 0.0
    %641 = vmatprep.subr.mxu0 0.0
    %642 = vmatpush2.msra.mxu0 0.0
    %643 = vmatprep.subr.mxu0 0.0
    %644 = vmatpush2.msra.mxu0 0.0
    %645 = vmatprep.subr.mxu0 0.0
    %646 = vmatpush2.msra.mxu0 0.0
    %647 = vmatprep.subr.mxu0 0.0
    %648 = vmatpush2.msra.mxu0 0.0
    %649 = vmatprep.subr.mxu0 0.0
    %650 = vmatpush2.msra.mxu0 0.0
    %651 = vmatprep.subr.mxu0 0.0
    %652 = vmatpush2.msra.mxu0 0.0
    %653 = vmatprep.subr.mxu0 0.0
    %654 = vmatpush2.msra.mxu0 0.0
    %655 = vmatprep.mubr.f32.mxu0 0.0
    %656 = vmatmul.mubr.f32.gmra.mxu0 %v379
    %v657 = vpop.f32.mrf.mxu0
    %v658 = vadd.f32 0.0, %v657
    %v659 = vpop.f32.mrf.mxu0
    %660 = vdwg.mxu0
    %v661 = vmul.f32 %v165, 0.35355338
    %v662 = vmul.f32 %v235, 0.35355338
    %v663 = vmul.f32 %v305, 0.35355338
    %v664 = vmul.f32 %v375, 0.35355338
    %v665 = vmul.f32 %v448, 0.35355338
    %v666 = vmul.f32 %v518, 0.35355338
    %v667 = vmul.f32 %v588, 0.35355338
    %v668 = vmul.f32 %v658, 0.35355338
    %v670 = vsel %vm94, %v23, 0
    %672 = vmatprep.subr.mxu0 0.0
    %673 = vmatpush1.msra.mxu0 0.0
    %674 = vmatprep.subr.mxu0 0.0
    %675 = vmatpush1.msra.mxu0 0.0
    %676 = vmatprep.subr.mxu0 0.0
    %677 = vmatpush1.msra.mxu0 0.0
    %678 = vmatprep.subr.mxu0 0.0
    %679 = vmatpush1.msra.mxu0 0.0
    %680 = vmatprep.subr.mxu0 0.0
    %681 = vmatpush1.msra.mxu0 0.0
    %682 = vmatprep.subr.mxu0 0.0
    %683 = vmatpush1.msra.mxu0 0.0
    %684 = vmatprep.subr.mxu0 0.0
    %685 = vmatpush1.msra.mxu0 0.0
    %686 = vmatprep.subr.mxu0 0.0
    %687 = vmatpush1.msra.mxu0 0.0
    %688 = vmatprep.subr.mxu0 0.0
    %689 = vmatpush1.msra.mxu0 0.0
    %690 = vmatprep.subr.mxu0 0.0
    %691 = vmatpush1.msra.mxu0 0.0
    %692 = vmatprep.subr.mxu0 0.0
    %693 = vmatpush1.msra.mxu0 0.0
    %694 = vmatprep.subr.mxu0 0.0
    %695 = vmatpush1.msra.mxu0 0.0
    %696 = vmatprep.subr.mxu0 0.0
    %697 = vmatpush1.msra.mxu0 %v47
    %698 = vmatprep.subr.mxu0 0.0
    %699 = vmatpush1.msra.mxu0 %v46
    %700 = vmatprep.subr.mxu0 0.0
    %701 = vmatpush1.msra.mxu0 %v45
    %702 = vmatprep.subr.mxu0 0.0
    %703 = vmatpush1.msra.mxu0 %v44
    %704 = vmatprep.subr.mxu0 0.0
    %705 = vmatpush2.msra.mxu0 0.0
    %706 = vmatprep.subr.mxu0 0.0
    %707 = vmatpush2.msra.mxu0 0.0
    %708 = vmatprep.subr.mxu0 0.0
    %709 = vmatpush2.msra.mxu0 0.0
    %710 = vmatprep.subr.mxu0 0.0
    %711 = vmatpush2.msra.mxu0 0.0
    %712 = vmatprep.subr.mxu0 0.0
    %713 = vmatpush2.msra.mxu0 0.0
    %714 = vmatprep.subr.mxu0 0.0
    %715 = vmatpush2.msra.mxu0 0.0
    %716 = vmatprep.subr.mxu0 0.0
    %717 = vmatpush2.msra.mxu0 0.0
    %718 = vmatprep.subr.mxu0 0.0
    %719 = vmatpush2.msra.mxu0 0.0
    %720 = vmatprep.subr.mxu0 0.0
    %721 = vmatpush2.msra.mxu0 0.0
    %722 = vmatprep.subr.mxu0 0.0
    %723 = vmatpush2.msra.mxu0 0.0
    %724 = vmatprep.subr.mxu0 0.0
    %725 = vmatpush2.msra.mxu0 0.0
    %726 = vmatprep.subr.mxu0 0.0
    %727 = vmatpush2.msra.mxu0 0.0
    %728 = vmatprep.subr.mxu0 0.0
    %729 = vmatpush2.msra.mxu0 0.0
    %730 = vmatprep.subr.mxu0 0.0
    %731 = vmatpush2.msra.mxu0 0.0
    %732 = vmatprep.subr.mxu0 0.0
    %733 = vmatpush2.msra.mxu0 0.0
    %734 = vmatprep.subr.mxu0 0.0
    %735 = vmatpush2.msra.mxu0 0.0
    %736 = vmatprep.mubr.f32.mxu0 0.0
    %737 = vmatmul.mubr.f32.gmra.mxu0 %v670
    %v738 = vpop.f32.mrf.mxu0
    %v739 = vadd.f32 0.0, %v738
    %v740 = vpop.f32.mrf.mxu0
    %741 = vdwg.mxu0
    %742 = vmatprep.subr.mxu0 0.0
    %743 = vmatpush1.msra.mxu0 0.0
    %744 = vmatprep.subr.mxu0 0.0
    %745 = vmatpush1.msra.mxu0 0.0
    %746 = vmatprep.subr.mxu0 0.0
    %747 = vmatpush1.msra.mxu0 0.0
    %748 = vmatprep.subr.mxu0 0.0
    %749 = vmatpush1.msra.mxu0 0.0
    %750 = vmatprep.subr.mxu0 0.0
    %751 = vmatpush1.msra.mxu0 0.0
    %752 = vmatprep.subr.mxu0 0.0
    %753 = vmatpush1.msra.mxu0 0.0
    %754 = vmatprep.subr.mxu0 0.0
    %755 = vmatpush1.msra.mxu0 0.0
    %756 = vmatprep.subr.mxu0 0.0
    %757 = vmatpush1.msra.mxu0 0.0
    %758 = vmatprep.subr.mxu0 0.0
    %759 = vmatpush1.msra.mxu0 0.0
    %760 = vmatprep.subr.mxu0 0.0
    %761 = vmatpush1.msra.mxu0 0.0
    %762 = vmatprep.subr.mxu0 0.0
    %763 = vmatpush1.msra.mxu0 0.0
    %764 = vmatprep.subr.mxu0 0.0
    %765 = vmatpush1.msra.mxu0 0.0
    %766 = vmatprep.subr.mxu0 0.0
    %767 = vmatpush1.msra.mxu0 %v51
    %768 = vmatprep.subr.mxu0 0.0
    %769 = vmatpush1.msra.mxu0 %v50
    %770 = vmatprep.subr.mxu0 0.0
    %771 = vmatpush1.msra.mxu0 %v49
    %772 = vmatprep.subr.mxu0 0.0
    %773 = vmatpush1.msra.mxu0 %v48
    %774 = vmatprep.subr.mxu0 0.0
    %775 = vmatpush2.msra.mxu0 0.0
    %776 = vmatprep.subr.mxu0 0.0
    %777 = vmatpush2.msra.mxu0 0.0
    %778 = vmatprep.subr.mxu0 0.0
    %779 = vmatpush2.msra.mxu0 0.0
    %780 = vmatprep.subr.mxu0 0.0
    %781 = vmatpush2.msra.mxu0 0.0
    %782 = vmatprep.subr.mxu0 0.0
    %783 = vmatpush2.msra.mxu0 0.0
    %784 = vmatprep.subr.mxu0 0.0
    %785 = vmatpush2.msra.mxu0 0.0
    %786 = vmatprep.subr.mxu0 0.0
    %787 = vmatpush2.msra.mxu0 0.0
    %788 = vmatprep.subr.mxu0 0.0
    %789 = vmatpush2.msra.mxu0 0.0
    %790 = vmatprep.subr.mxu0 0.0
    %791 = vmatpush2.msra.mxu0 0.0
    %792 = vmatprep.subr.mxu0 0.0
    %793 = vmatpush2.msra.mxu0 0.0
    %794 = vmatprep.subr.mxu0 0.0
    %795 = vmatpush2.msra.mxu0 0.0
    %796 = vmatprep.subr.mxu0 0.0
    %797 = vmatpush2.msra.mxu0 0.0
    %798 = vmatprep.subr.mxu0 0.0
    %799 = vmatpush2.msra.mxu0 0.0
    %800 = vmatprep.subr.mxu0 0.0
    %801 = vmatpush2.msra.mxu0 0.0
    %802 = vmatprep.subr.mxu0 0.0
    %803 = vmatpush2.msra.mxu0 0.0
    %804 = vmatprep.subr.mxu0 0.0
    %805 = vmatpush2.msra.mxu0 0.0
    %806 = vmatprep.mubr.f32.mxu0 0.0
    %807 = vmatmul.mubr.f32.gmra.mxu0 %v670
    %v808 = vpop.f32.mrf.mxu0
    %v809 = vadd.f32 0.0, %v808
    %v810 = vpop.f32.mrf.mxu0
    %811 = vdwg.mxu0
    %812 = vmatprep.subr.mxu0 0.0
    %813 = vmatpush1.msra.mxu0 0.0
    %814 = vmatprep.subr.mxu0 0.0
    %815 = vmatpush1.msra.mxu0 0.0
    %816 = vmatprep.subr.mxu0 0.0
    %817 = vmatpush1.msra.mxu0 0.0
    %818 = vmatprep.subr.mxu0 0.0
    %819 = vmatpush1.msra.mxu0 0.0
    %820 = vmatprep.subr.mxu0 0.0
    %821 = vmatpush1.msra.mxu0 0.0
    %822 = vmatprep.subr.mxu0 0.0
    %823 = vmatpush1.msra.mxu0 0.0
    %824 = vmatprep.subr.mxu0 0.0
    %825 = vmatpush1.msra.mxu0 0.0
    %826 = vmatprep.subr.mxu0 0.0
    %827 = vmatpush1.msra.mxu0 0.0
    %828 = vmatprep.subr.mxu0 0.0
    %829 = vmatpush1.msra.mxu0 0.0
    %830 = vmatprep.subr.mxu0 0.0
    %831 = vmatpush1.msra.mxu0 0.0
    %832 = vmatprep.subr.mxu0 0.0
    %833 = vmatpush1.msra.mxu0 0.0
    %834 = vmatprep.subr.mxu0 0.0
    %835 = vmatpush1.msra.mxu0 0.0
    %836 = vmatprep.subr.mxu0 0.0
    %837 = vmatpush1.msra.mxu0 %v55
    %838 = vmatprep.subr.mxu0 0.0
    %839 = vmatpush1.msra.mxu0 %v54
    %840 = vmatprep.subr.mxu0 0.0
    %841 = vmatpush1.msra.mxu0 %v53
    %842 = vmatprep.subr.mxu0 0.0
    %843 = vmatpush1.msra.mxu0 %v52
    %844 = vmatprep.subr.mxu0 0.0
    %845 = vmatpush2.msra.mxu0 0.0
    %846 = vmatprep.subr.mxu0 0.0
    %847 = vmatpush2.msra.mxu0 0.0
    %848 = vmatprep.subr.mxu0 0.0
    %849 = vmatpush2.msra.mxu0 0.0
    %850 = vmatprep.subr.mxu0 0.0
    %851 = vmatpush2.msra.mxu0 0.0
    %852 = vmatprep.subr.mxu0 0.0
    %853 = vmatpush2.msra.mxu0 0.0
    %854 = vmatprep.subr.mxu0 0.0
    %855 = vmatpush2.msra.mxu0 0.0
    %856 = vmatprep.subr.mxu0 0.0
    %857 = vmatpush2.msra.mxu0 0.0
    %858 = vmatprep.subr.mxu0 0.0
    %859 = vmatpush2.msra.mxu0 0.0
    %860 = vmatprep.subr.mxu0 0.0
    %861 = vmatpush2.msra.mxu0 0.0
    %862 = vmatprep.subr.mxu0 0.0
    %863 = vmatpush2.msra.mxu0 0.0
    %864 = vmatprep.subr.mxu0 0.0
    %865 = vmatpush2.msra.mxu0 0.0
    %866 = vmatprep.subr.mxu0 0.0
    %867 = vmatpush2.msra.mxu0 0.0
    %868 = vmatprep.subr.mxu0 0.0
    %869 = vmatpush2.msra.mxu0 0.0
    %870 = vmatprep.subr.mxu0 0.0
    %871 = vmatpush2.msra.mxu0 0.0
    %872 = vmatprep.subr.mxu0 0.0
    %873 = vmatpush2.msra.mxu0 0.0
    %874 = vmatprep.subr.mxu0 0.0
    %875 = vmatpush2.msra.mxu0 0.0
    %876 = vmatprep.mubr.f32.mxu0 0.0
    %877 = vmatmul.mubr.f32.gmra.mxu0 %v670
    %v878 = vpop.f32.mrf.mxu0
    %v879 = vadd.f32 0.0, %v878
    %v880 = vpop.f32.mrf.mxu0
    %881 = vdwg.mxu0
    %882 = vmatprep.subr.mxu0 0.0
    %883 = vmatpush1.msra.mxu0 0.0
    %884 = vmatprep.subr.mxu0 0.0
    %885 = vmatpush1.msra.mxu0 0.0
    %886 = vmatprep.subr.mxu0 0.0
    %887 = vmatpush1.msra.mxu0 0.0
    %888 = vmatprep.subr.mxu0 0.0
    %889 = vmatpush1.msra.mxu0 0.0
    %890 = vmatprep.subr.mxu0 0.0
    %891 = vmatpush1.msra.mxu0 0.0
    %892 = vmatprep.subr.mxu0 0.0
    %893 = vmatpush1.msra.mxu0 0.0
    %894 = vmatprep.subr.mxu0 0.0
    %895 = vmatpush1.msra.mxu0 0.0
    %896 = vmatprep.subr.mxu0 0.0
    %897 = vmatpush1.msra.mxu0 0.0
    %898 = vmatprep.subr.mxu0 0.0
    %899 = vmatpush1.msra.mxu0 0.0
    %900 = vmatprep.subr.mxu0 0.0
    %901 = vmatpush1.msra.mxu0 0.0
    %902 = vmatprep.subr.mxu0 0.0
    %903 = vmatpush1.msra.mxu0 0.0
    %904 = vmatprep.subr.mxu0 0.0
    %905 = vmatpush1.msra.mxu0 0.0
    %906 = vmatprep.subr.mxu0 0.0
    %907 = vmatpush1.msra.mxu0 %v59
    %908 = vmatprep.subr.mxu0 0.0
    %909 = vmatpush1.msra.mxu0 %v58
    %910 = vmatprep.subr.mxu0 0.0
    %911 = vmatpush1.msra.mxu0 %v57
    %912 = vmatprep.subr.mxu0 0.0
    %913 = vmatpush1.msra.mxu0 %v56
    %914 = vmatprep.subr.mxu0 0.0
    %915 = vmatpush2.msra.mxu0 0.0
    %916 = vmatprep.subr.mxu0 0.0
    %917 = vmatpush2.msra.mxu0 0.0
    %918 = vmatprep.subr.mxu0 0.0
    %919 = vmatpush2.msra.mxu0 0.0
    %920 = vmatprep.subr.mxu0 0.0
    %921 = vmatpush2.msra.mxu0 0.0
    %922 = vmatprep.subr.mxu0 0.0
    %923 = vmatpush2.msra.mxu0 0.0
    %924 = vmatprep.subr.mxu0 0.0
    %925 = vmatpush2.msra.mxu0 0.0
    %926 = vmatprep.subr.mxu0 0.0
    %927 = vmatpush2.msra.mxu0 0.0
    %928 = vmatprep.subr.mxu0 0.0
    %929 = vmatpush2.msra.mxu0 0.0
    %930 = vmatprep.subr.mxu0 0.0
    %931 = vmatpush2.msra.mxu0 0.0
    %932 = vmatprep.subr.mxu0 0.0
    %933 = vmatpush2.msra.mxu0 0.0
    %934 = vmatprep.subr.mxu0 0.0
    %935 = vmatpush2.msra.mxu0 0.0
    %936 = vmatprep.subr.mxu0 0.0
    %937 = vmatpush2.msra.mxu0 0.0
    %938 = vmatprep.subr.mxu0 0.0
    %939 = vmatpush2.msra.mxu0 0.0
    %940 = vmatprep.subr.mxu0 0.0
    %941 = vmatpush2.msra.mxu0 0.0
    %942 = vmatprep.subr.mxu0 0.0
    %943 = vmatpush2.msra.mxu0 0.0
    %944 = vmatprep.subr.mxu0 0.0
    %945 = vmatpush2.msra.mxu0 0.0
    %946 = vmatprep.mubr.f32.mxu0 0.0
    %947 = vmatmul.mubr.f32.gmra.mxu0 %v670
    %v948 = vpop.f32.mrf.mxu0
    %v949 = vadd.f32 0.0, %v948
    %v950 = vpop.f32.mrf.mxu0
    %951 = vdwg.mxu0
    %v953 = vsel %vm94, %v24, 0
    %955 = vmatprep.subr.mxu0 0.0
    %956 = vmatpush1.msra.mxu0 0.0
    %957 = vmatprep.subr.mxu0 0.0
    %958 = vmatpush1.msra.mxu0 0.0
    %959 = vmatprep.subr.mxu0 0.0
    %960 = vmatpush1.msra.mxu0 0.0
    %961 = vmatprep.subr.mxu0 0.0
    %962 = vmatpush1.msra.mxu0 0.0
    %963 = vmatprep.subr.mxu0 0.0
    %964 = vmatpush1.msra.mxu0 0.0
    %965 = vmatprep.subr.mxu0 0.0
    %966 = vmatpush1.msra.mxu0 0.0
    %967 = vmatprep.subr.mxu0 0.0
    %968 = vmatpush1.msra.mxu0 0.0
    %969 = vmatprep.subr.mxu0 0.0
    %970 = vmatpush1.msra.mxu0 0.0
    %971 = vmatprep.subr.mxu0 0.0
    %972 = vmatpush1.msra.mxu0 0.0
    %973 = vmatprep.subr.mxu0 0.0
    %974 = vmatpush1.msra.mxu0 0.0
    %975 = vmatprep.subr.mxu0 0.0
    %976 = vmatpush1.msra.mxu0 0.0
    %977 = vmatprep.subr.mxu0 0.0
    %978 = vmatpush1.msra.mxu0 0.0
    %979 = vmatprep.subr.mxu0 0.0
    %980 = vmatpush1.msra.mxu0 %v47
    %981 = vmatprep.subr.mxu0 0.0
    %982 = vmatpush1.msra.mxu0 %v46
    %983 = vmatprep.subr.mxu0 0.0
    %984 = vmatpush1.msra.mxu0 %v45
    %985 = vmatprep.subr.mxu0 0.0
    %986 = vmatpush1.msra.mxu0 %v44
    %987 = vmatprep.subr.mxu0 0.0
    %988 = vmatpush2.msra.mxu0 0.0
    %989 = vmatprep.subr.mxu0 0.0
    %990 = vmatpush2.msra.mxu0 0.0
    %991 = vmatprep.subr.mxu0 0.0
    %992 = vmatpush2.msra.mxu0 0.0
    %993 = vmatprep.subr.mxu0 0.0
    %994 = vmatpush2.msra.mxu0 0.0
    %995 = vmatprep.subr.mxu0 0.0
    %996 = vmatpush2.msra.mxu0 0.0
    %997 = vmatprep.subr.mxu0 0.0
    %998 = vmatpush2.msra.mxu0 0.0
    %999 = vmatprep.subr.mxu0 0.0
    %1000 = vmatpush2.msra.mxu0 0.0
    %1001 = vmatprep.subr.mxu0 0.0
    %1002 = vmatpush2.msra.mxu0 0.0
    %1003 = vmatprep.subr.mxu0 0.0
    %1004 = vmatpush2.msra.mxu0 0.0
    %1005 = vmatprep.subr.mxu0 0.0
    %1006 = vmatpush2.msra.mxu0 0.0
    %1007 = vmatprep.subr.mxu0 0.0
    %1008 = vmatpush2.msra.mxu0 0.0
    %1009 = vmatprep.subr.mxu0 0.0
    %1010 = vmatpush2.msra.mxu0 0.0
    %1011 = vmatprep.subr.mxu0 0.0
    %1012 = vmatpush2.msra.mxu0 0.0
    %1013 = vmatprep.subr.mxu0 0.0
    %1014 = vmatpush2.msra.mxu0 0.0
    %1015 = vmatprep.subr.mxu0 0.0
    %1016 = vmatpush2.msra.mxu0 0.0
    %1017 = vmatprep.subr.mxu0 0.0
    %1018 = vmatpush2.msra.mxu0 0.0
    %1019 = vmatprep.mubr.f32.mxu0 0.0
    %1020 = vmatmul.mubr.f32.gmra.mxu0 %v953
    %v1021 = vpop.f32.mrf.mxu0
    %v1022 = vadd.f32 0.0, %v1021
    %v1023 = vpop.f32.mrf.mxu0
    %1024 = vdwg.mxu0
    %1025 = vmatprep.subr.mxu0 0.0
    %1026 = vmatpush1.msra.mxu0 0.0
    %1027 = vmatprep.subr.mxu0 0.0
    %1028 = vmatpush1.msra.mxu0 0.0
    %1029 = vmatprep.subr.mxu0 0.0
    %1030 = vmatpush1.msra.mxu0 0.0
    %1031 = vmatprep.subr.mxu0 0.0
    %1032 = vmatpush1.msra.mxu0 0.0
    %1033 = vmatprep.subr.mxu0 0.0
    %1034 = vmatpush1.msra.mxu0 0.0
    %1035 = vmatprep.subr.mxu0 0.0
    %1036 = vmatpush1.msra.mxu0 0.0
    %1037 = vmatprep.subr.mxu0 0.0
    %1038 = vmatpush1.msra.mxu0 0.0
    %1039 = vmatprep.subr.mxu0 0.0
    %1040 = vmatpush1.msra.mxu0 0.0
    %1041 = vmatprep.subr.mxu0 0.0
    %1042 = vmatpush1.msra.mxu0 0.0
    %1043 = vmatprep.subr.mxu0 0.0
    %1044 = vmatpush1.msra.mxu0 0.0
    %1045 = vmatprep.subr.mxu0 0.0
    %1046 = vmatpush1.msra.mxu0 0.0
    %1047 = vmatprep.subr.mxu0 0.0
    %1048 = vmatpush1.msra.mxu0 0.0
    %1049 = vmatprep.subr.mxu0 0.0
    %1050 = vmatpush1.msra.mxu0 %v51
    %1051 = vmatprep.subr.mxu0 0.0
    %1052 = vmatpush1.msra.mxu0 %v50
    %1053 = vmatprep.subr.mxu0 0.0
    %1054 = vmatpush1.msra.mxu0 %v49
    %1055 = vmatprep.subr.mxu0 0.0
    %1056 = vmatpush1.msra.mxu0 %v48
    %1057 = vmatprep.subr.mxu0 0.0
    %1058 = vmatpush2.msra.mxu0 0.0
    %1059 = vmatprep.subr.mxu0 0.0
    %1060 = vmatpush2.msra.mxu0 0.0
    %1061 = vmatprep.subr.mxu0 0.0
    %1062 = vmatpush2.msra.mxu0 0.0
    %1063 = vmatprep.subr.mxu0 0.0
    %1064 = vmatpush2.msra.mxu0 0.0
    %1065 = vmatprep.subr.mxu0 0.0
    %1066 = vmatpush2.msra.mxu0 0.0
    %1067 = vmatprep.subr.mxu0 0.0
    %1068 = vmatpush2.msra.mxu0 0.0
    %1069 = vmatprep.subr.mxu0 0.0
    %1070 = vmatpush2.msra.mxu0 0.0
    %1071 = vmatprep.subr.mxu0 0.0
    %1072 = vmatpush2.msra.mxu0 0.0
    %1073 = vmatprep.subr.mxu0 0.0
    %1074 = vmatpush2.msra.mxu0 0.0
    %1075 = vmatprep.subr.mxu0 0.0
    %1076 = vmatpush2.msra.mxu0 0.0
    %1077 = vmatprep.subr.mxu0 0.0
    %1078 = vmatpush2.msra.mxu0 0.0
    %1079 = vmatprep.subr.mxu0 0.0
    %1080 = vmatpush2.msra.mxu0 0.0
    %1081 = vmatprep.subr.mxu0 0.0
    %1082 = vmatpush2.msra.mxu0 0.0
    %1083 = vmatprep.subr.mxu0 0.0
    %1084 = vmatpush2.msra.mxu0 0.0
    %1085 = vmatprep.subr.mxu0 0.0
    %1086 = vmatpush2.msra.mxu0 0.0
    %1087 = vmatprep.subr.mxu0 0.0
    %1088 = vmatpush2.msra.mxu0 0.0
    %1089 = vmatprep.mubr.f32.mxu0 0.0
    %1090 = vmatmul.mubr.f32.gmra.mxu0 %v953
    %v1091 = vpop.f32.mrf.mxu0
    %v1092 = vadd.f32 0.0, %v1091
    %v1093 = vpop.f32.mrf.mxu0
    %1094 = vdwg.mxu0
    %1095 = vmatprep.subr.mxu0 0.0
    %1096 = vmatpush1.msra.mxu0 0.0
    %1097 = vmatprep.subr.mxu0 0.0
    %1098 = vmatpush1.msra.mxu0 0.0
    %1099 = vmatprep.subr.mxu0 0.0
    %1100 = vmatpush1.msra.mxu0 0.0
    %1101 = vmatprep.subr.mxu0 0.0
    %1102 = vmatpush1.msra.mxu0 0.0
    %1103 = vmatprep.subr.mxu0 0.0
    %1104 = vmatpush1.msra.mxu0 0.0
    %1105 = vmatprep.subr.mxu0 0.0
    %1106 = vmatpush1.msra.mxu0 0.0
    %1107 = vmatprep.subr.mxu0 0.0
    %1108 = vmatpush1.msra.mxu0 0.0
    %1109 = vmatprep.subr.mxu0 0.0
    %1110 = vmatpush1.msra.mxu0 0.0
    %1111 = vmatprep.subr.mxu0 0.0
    %1112 = vmatpush1.msra.mxu0 0.0
    %1113 = vmatprep.subr.mxu0 0.0
    %1114 = vmatpush1.msra.mxu0 0.0
    %1115 = vmatprep.subr.mxu0 0.0
    %1116 = vmatpush1.msra.mxu0 0.0
    %1117 = vmatprep.subr.mxu0 0.0
    %1118 = vmatpush1.msra.mxu0 0.0
    %1119 = vmatprep.subr.mxu0 0.0
    %1120 = vmatpush1.msra.mxu0 %v55
    %1121 = vmatprep.subr.mxu0 0.0
    %1122 = vmatpush1.msra.mxu0 %v54
    %1123 = vmatprep.subr.mxu0 0.0
    %1124 = vmatpush1.msra.mxu0 %v53
    %1125 = vmatprep.subr.mxu0 0.0
    %1126 = vmatpush1.msra.mxu0 %v52
    %1127 = vmatprep.subr.mxu0 0.0
    %1128 = vmatpush2.msra.mxu0 0.0
    %1129 = vmatprep.subr.mxu0 0.0
    %1130 = vmatpush2.msra.mxu0 0.0
    %1131 = vmatprep.subr.mxu0 0.0
    %1132 = vmatpush2.msra.mxu0 0.0
    %1133 = vmatprep.subr.mxu0 0.0
    %1134 = vmatpush2.msra.mxu0 0.0
    %1135 = vmatprep.subr.mxu0 0.0
    %1136 = vmatpush2.msra.mxu0 0.0
    %1137 = vmatprep.subr.mxu0 0.0
    %1138 = vmatpush2.msra.mxu0 0.0
    %1139 = vmatprep.subr.mxu0 0.0
    %1140 = vmatpush2.msra.mxu0 0.0
    %1141 = vmatprep.subr.mxu0 0.0
    %1142 = vmatpush2.msra.mxu0 0.0
    %1143 = vmatprep.subr.mxu0 0.0
    %1144 = vmatpush2.msra.mxu0 0.0
    %1145 = vmatprep.subr.mxu0 0.0
    %1146 = vmatpush2.msra.mxu0 0.0
    %1147 = vmatprep.subr.mxu0 0.0
    %1148 = vmatpush2.msra.mxu0 0.0
    %1149 = vmatprep.subr.mxu0 0.0
    %1150 = vmatpush2.msra.mxu0 0.0
    %1151 = vmatprep.subr.mxu0 0.0
    %1152 = vmatpush2.msra.mxu0 0.0
    %1153 = vmatprep.subr.mxu0 0.0
    %1154 = vmatpush2.msra.mxu0 0.0
    %1155 = vmatprep.subr.mxu0 0.0
    %1156 = vmatpush2.msra.mxu0 0.0
    %1157 = vmatprep.subr.mxu0 0.0
    %1158 = vmatpush2.msra.mxu0 0.0
    %1159 = vmatprep.mubr.f32.mxu0 0.0
    %1160 = vmatmul.mubr.f32.gmra.mxu0 %v953
    %v1161 = vpop.f32.mrf.mxu0
    %v1162 = vadd.f32 0.0, %v1161
    %v1163 = vpop.f32.mrf.mxu0
    %1164 = vdwg.mxu0
    %1165 = vmatprep.subr.mxu0 0.0
    %1166 = vmatpush1.msra.mxu0 0.0
    %1167 = vmatprep.subr.mxu0 0.0
    %1168 = vmatpush1.msra.mxu0 0.0
    %1169 = vmatprep.subr.mxu0 0.0
    %1170 = vmatpush1.msra.mxu0 0.0
    %1171 = vmatprep.subr.mxu0 0.0
    %1172 = vmatpush1.msra.mxu0 0.0
    %1173 = vmatprep.subr.mxu0 0.0
    %1174 = vmatpush1.msra.mxu0 0.0
    %1175 = vmatprep.subr.mxu0 0.0
    %1176 = vmatpush1.msra.mxu0 0.0
    %1177 = vmatprep.subr.mxu0 0.0
    %1178 = vmatpush1.msra.mxu0 0.0
    %1179 = vmatprep.subr.mxu0 0.0
    %1180 = vmatpush1.msra.mxu0 0.0
    %1181 = vmatprep.subr.mxu0 0.0
    %1182 = vmatpush1.msra.mxu0 0.0
    %1183 = vmatprep.subr.mxu0 0.0
    %1184 = vmatpush1.msra.mxu0 0.0
    %1185 = vmatprep.subr.mxu0 0.0
    %1186 = vmatpush1.msra.mxu0 0.0
    %1187 = vmatprep.subr.mxu0 0.0
    %1188 = vmatpush1.msra.mxu0 0.0
    %1189 = vmatprep.subr.mxu0 0.0
    %1190 = vmatpush1.msra.mxu0 %v59
    %1191 = vmatprep.subr.mxu0 0.0
    %1192 = vmatpush1.msra.mxu0 %v58
    %1193 = vmatprep.subr.mxu0 0.0
    %1194 = vmatpush1.msra.mxu0 %v57
    %1195 = vmatprep.subr.mxu0 0.0
    %1196 = vmatpush1.msra.mxu0 %v56
    %1197 = vmatprep.subr.mxu0 0.0
    %1198 = vmatpush2.msra.mxu0 0.0
    %1199 = vmatprep.subr.mxu0 0.0
    %1200 = vmatpush2.msra.mxu0 0.0
    %1201 = vmatprep.subr.mxu0 0.0
    %1202 = vmatpush2.msra.mxu0 0.0
    %1203 = vmatprep.subr.mxu0 0.0
    %1204 = vmatpush2.msra.mxu0 0.0
    %1205 = vmatprep.subr.mxu0 0.0
    %1206 = vmatpush2.msra.mxu0 0.0
    %1207 = vmatprep.subr.mxu0 0.0
    %1208 = vmatpush2.msra.mxu0 0.0
    %1209 = vmatprep.subr.mxu0 0.0
    %1210 = vmatpush2.msra.mxu0 0.0
    %1211 = vmatprep.subr.mxu0 0.0
    %1212 = vmatpush2.msra.mxu0 0.0
    %1213 = vmatprep.subr.mxu0 0.0
    %1214 = vmatpush2.msra.mxu0 0.0
    %1215 = vmatprep.subr.mxu0 0.0
    %1216 = vmatpush2.msra.mxu0 0.0
    %1217 = vmatprep.subr.mxu0 0.0
    %1218 = vmatpush2.msra.mxu0 0.0
    %1219 = vmatprep.subr.mxu0 0.0
    %1220 = vmatpush2.msra.mxu0 0.0
    %1221 = vmatprep.subr.mxu0 0.0
    %1222 = vmatpush2.msra.mxu0 0.0
    %1223 = vmatprep.subr.mxu0 0.0
    %1224 = vmatpush2.msra.mxu0 0.0
    %1225 = vmatprep.subr.mxu0 0.0
    %1226 = vmatpush2.msra.mxu0 0.0
    %1227 = vmatprep.subr.mxu0 0.0
    %1228 = vmatpush2.msra.mxu0 0.0
    %1229 = vmatprep.mubr.f32.mxu0 0.0
    %1230 = vmatmul.mubr.f32.gmra.mxu0 %v953
    %v1231 = vpop.f32.mrf.mxu0
    %v1232 = vadd.f32 0.0, %v1231
    %v1233 = vpop.f32.mrf.mxu0
    %1234 = vdwg.mxu0
    %v1236 = vsel %vm94, %v25, 0
    %1238 = vmatprep.subr.mxu0 0.0
    %1239 = vmatpush1.msra.mxu0 0.0
    %1240 = vmatprep.subr.mxu0 0.0
    %1241 = vmatpush1.msra.mxu0 0.0
    %1242 = vmatprep.subr.mxu0 0.0
    %1243 = vmatpush1.msra.mxu0 0.0
    %1244 = vmatprep.subr.mxu0 0.0
    %1245 = vmatpush1.msra.mxu0 0.0
    %1246 = vmatprep.subr.mxu0 0.0
    %1247 = vmatpush1.msra.mxu0 0.0
    %1248 = vmatprep.subr.mxu0 0.0
    %1249 = vmatpush1.msra.mxu0 0.0
    %1250 = vmatprep.subr.mxu0 0.0
    %1251 = vmatpush1.msra.mxu0 0.0
    %1252 = vmatprep.subr.mxu0 0.0
    %1253 = vmatpush1.msra.mxu0 0.0
    %1254 = vmatprep.subr.mxu0 0.0
    %1255 = vmatpush1.msra.mxu0 0.0
    %1256 = vmatprep.subr.mxu0 0.0
    %1257 = vmatpush1.msra.mxu0 0.0
    %1258 = vmatprep.subr.mxu0 0.0
    %1259 = vmatpush1.msra.mxu0 0.0
    %1260 = vmatprep.subr.mxu0 0.0
    %1261 = vmatpush1.msra.mxu0 0.0
    %1262 = vmatprep.subr.mxu0 0.0
    %1263 = vmatpush1.msra.mxu0 %v64
    %1264 = vmatprep.subr.mxu0 0.0
    %1265 = vmatpush1.msra.mxu0 %v63
    %1266 = vmatprep.subr.mxu0 0.0
    %1267 = vmatpush1.msra.mxu0 %v62
    %1268 = vmatprep.subr.mxu0 0.0
    %1269 = vmatpush1.msra.mxu0 %v61
    %1270 = vmatprep.subr.mxu0 0.0
    %1271 = vmatpush2.msra.mxu0 0.0
    %1272 = vmatprep.subr.mxu0 0.0
    %1273 = vmatpush2.msra.mxu0 0.0
    %1274 = vmatprep.subr.mxu0 0.0
    %1275 = vmatpush2.msra.mxu0 0.0
    %1276 = vmatprep.subr.mxu0 0.0
    %1277 = vmatpush2.msra.mxu0 0.0
    %1278 = vmatprep.subr.mxu0 0.0
    %1279 = vmatpush2.msra.mxu0 0.0
    %1280 = vmatprep.subr.mxu0 0.0
    %1281 = vmatpush2.msra.mxu0 0.0
    %1282 = vmatprep.subr.mxu0 0.0
    %1283 = vmatpush2.msra.mxu0 0.0
    %1284 = vmatprep.subr.mxu0 0.0
    %1285 = vmatpush2.msra.mxu0 0.0
    %1286 = vmatprep.subr.mxu0 0.0
    %1287 = vmatpush2.msra.mxu0 0.0
    %1288 = vmatprep.subr.mxu0 0.0
    %1289 = vmatpush2.msra.mxu0 0.0
    %1290 = vmatprep.subr.mxu0 0.0
    %1291 = vmatpush2.msra.mxu0 0.0
    %1292 = vmatprep.subr.mxu0 0.0
    %1293 = vmatpush2.msra.mxu0 0.0
    %1294 = vmatprep.subr.mxu0 0.0
    %1295 = vmatpush2.msra.mxu0 0.0
    %1296 = vmatprep.subr.mxu0 0.0
    %1297 = vmatpush2.msra.mxu0 0.0
    %1298 = vmatprep.subr.mxu0 0.0
    %1299 = vmatpush2.msra.mxu0 0.0
    %1300 = vmatprep.subr.mxu0 0.0
    %1301 = vmatpush2.msra.mxu0 0.0
    %1302 = vmatprep.mubr.f32.mxu0 0.0
    %1303 = vmatmul.mubr.f32.gmra.mxu0 %v1236
    %v1304 = vpop.f32.mrf.mxu0
    %v1305 = vadd.f32 0.0, %v1304
    %v1306 = vpop.f32.mrf.mxu0
    %1307 = vdwg.mxu0
    %1308 = vmatprep.subr.mxu0 0.0
    %1309 = vmatpush1.msra.mxu0 0.0
    %1310 = vmatprep.subr.mxu0 0.0
    %1311 = vmatpush1.msra.mxu0 0.0
    %1312 = vmatprep.subr.mxu0 0.0
    %1313 = vmatpush1.msra.mxu0 0.0
    %1314 = vmatprep.subr.mxu0 0.0
    %1315 = vmatpush1.msra.mxu0 0.0
    %1316 = vmatprep.subr.mxu0 0.0
    %1317 = vmatpush1.msra.mxu0 0.0
    %1318 = vmatprep.subr.mxu0 0.0
    %1319 = vmatpush1.msra.mxu0 0.0
    %1320 = vmatprep.subr.mxu0 0.0
    %1321 = vmatpush1.msra.mxu0 0.0
    %1322 = vmatprep.subr.mxu0 0.0
    %1323 = vmatpush1.msra.mxu0 0.0
    %1324 = vmatprep.subr.mxu0 0.0
    %1325 = vmatpush1.msra.mxu0 0.0
    %1326 = vmatprep.subr.mxu0 0.0
    %1327 = vmatpush1.msra.mxu0 0.0
    %1328 = vmatprep.subr.mxu0 0.0
    %1329 = vmatpush1.msra.mxu0 0.0
    %1330 = vmatprep.subr.mxu0 0.0
    %1331 = vmatpush1.msra.mxu0 0.0
    %1332 = vmatprep.subr.mxu0 0.0
    %1333 = vmatpush1.msra.mxu0 %v68
    %1334 = vmatprep.subr.mxu0 0.0
    %1335 = vmatpush1.msra.mxu0 %v67
    %1336 = vmatprep.subr.mxu0 0.0
    %1337 = vmatpush1.msra.mxu0 %v66
    %1338 = vmatprep.subr.mxu0 0.0
    %1339 = vmatpush1.msra.mxu0 %v65
    %1340 = vmatprep.subr.mxu0 0.0
    %1341 = vmatpush2.msra.mxu0 0.0
    %1342 = vmatprep.subr.mxu0 0.0
    %1343 = vmatpush2.msra.mxu0 0.0
    %1344 = vmatprep.subr.mxu0 0.0
    %1345 = vmatpush2.msra.mxu0 0.0
    %1346 = vmatprep.subr.mxu0 0.0
    %1347 = vmatpush2.msra.mxu0 0.0
    %1348 = vmatprep.subr.mxu0 0.0
    %1349 = vmatpush2.msra.mxu0 0.0
    %1350 = vmatprep.subr.mxu0 0.0
    %1351 = vmatpush2.msra.mxu0 0.0
    %1352 = vmatprep.subr.mxu0 0.0
    %1353 = vmatpush2.msra.mxu0 0.0
    %1354 = vmatprep.subr.mxu0 0.0
    %1355 = vmatpush2.msra.mxu0 0.0
    %1356 = vmatprep.subr.mxu0 0.0
    %1357 = vmatpush2.msra.mxu0 0.0
    %1358 = vmatprep.subr.mxu0 0.0
    %1359 = vmatpush2.msra.mxu0 0.0
    %1360 = vmatprep.subr.mxu0 0.0
    %1361 = vmatpush2.msra.mxu0 0.0
    %1362 = vmatprep.subr.mxu0 0.0
    %1363 = vmatpush2.msra.mxu0 0.0
    %1364 = vmatprep.subr.mxu0 0.0
    %1365 = vmatpush2.msra.mxu0 0.0
    %1366 = vmatprep.subr.mxu0 0.0
    %1367 = vmatpush2.msra.mxu0 0.0
    %1368 = vmatprep.subr.mxu0 0.0
    %1369 = vmatpush2.msra.mxu0 0.0
    %1370 = vmatprep.subr.mxu0 0.0
    %1371 = vmatpush2.msra.mxu0 0.0
    %1372 = vmatprep.mubr.f32.mxu0 0.0
    %1373 = vmatmul.mubr.f32.gmra.mxu0 %v1236
    %v1374 = vpop.f32.mrf.mxu0
    %v1375 = vadd.f32 0.0, %v1374
    %v1376 = vpop.f32.mrf.mxu0
    %1377 = vdwg.mxu0
    %1378 = vmatprep.subr.mxu0 0.0
    %1379 = vmatpush1.msra.mxu0 0.0
    %1380 = vmatprep.subr.mxu0 0.0
    %1381 = vmatpush1.msra.mxu0 0.0
    %1382 = vmatprep.subr.mxu0 0.0
    %1383 = vmatpush1.msra.mxu0 0.0
    %1384 = vmatprep.subr.mxu0 0.0
    %1385 = vmatpush1.msra.mxu0 0.0
    %1386 = vmatprep.subr.mxu0 0.0
    %1387 = vmatpush1.msra.mxu0 0.0
    %1388 = vmatprep.subr.mxu0 0.0
    %1389 = vmatpush1.msra.mxu0 0.0
    %1390 = vmatprep.subr.mxu0 0.0
    %1391 = vmatpush1.msra.mxu0 0.0
    %1392 = vmatprep.subr.mxu0 0.0
    %1393 = vmatpush1.msra.mxu0 0.0
    %1394 = vmatprep.subr.mxu0 0.0
    %1395 = vmatpush1.msra.mxu0 0.0
    %1396 = vmatprep.subr.mxu0 0.0
    %1397 = vmatpush1.msra.mxu0 0.0
    %1398 = vmatprep.subr.mxu0 0.0
    %1399 = vmatpush1.msra.mxu0 0.0
    %1400 = vmatprep.subr.mxu0 0.0
    %1401 = vmatpush1.msra.mxu0 0.0
    %1402 = vmatprep.subr.mxu0 0.0
    %1403 = vmatpush1.msra.mxu0 %v72
    %1404 = vmatprep.subr.mxu0 0.0
    %1405 = vmatpush1.msra.mxu0 %v71
    %1406 = vmatprep.subr.mxu0 0.0
    %1407 = vmatpush1.msra.mxu0 %v70
    %1408 = vmatprep.subr.mxu0 0.0
    %1409 = vmatpush1.msra.mxu0 %v69
    %1410 = vmatprep.subr.mxu0 0.0
    %1411 = vmatpush2.msra.mxu0 0.0
    %1412 = vmatprep.subr.mxu0 0.0
    %1413 = vmatpush2.msra.mxu0 0.0
    %1414 = vmatprep.subr.mxu0 0.0
    %1415 = vmatpush2.msra.mxu0 0.0
    %1416 = vmatprep.subr.mxu0 0.0
    %1417 = vmatpush2.msra.mxu0 0.0
    %1418 = vmatprep.subr.mxu0 0.0
    %1419 = vmatpush2.msra.mxu0 0.0
    %1420 = vmatprep.subr.mxu0 0.0
    %1421 = vmatpush2.msra.mxu0 0.0
    %1422 = vmatprep.subr.mxu0 0.0
    %1423 = vmatpush2.msra.mxu0 0.0
    %1424 = vmatprep.subr.mxu0 0.0
    %1425 = vmatpush2.msra.mxu0 0.0
    %1426 = vmatprep.subr.mxu0 0.0
    %1427 = vmatpush2.msra.mxu0 0.0
    %1428 = vmatprep.subr.mxu0 0.0
    %1429 = vmatpush2.msra.mxu0 0.0
    %1430 = vmatprep.subr.mxu0 0.0
    %1431 = vmatpush2.msra.mxu0 0.0
    %1432 = vmatprep.subr.mxu0 0.0
    %1433 = vmatpush2.msra.mxu0 0.0
    %1434 = vmatprep.subr.mxu0 0.0
    %1435 = vmatpush2.msra.mxu0 0.0
    %1436 = vmatprep.subr.mxu0 0.0
    %1437 = vmatpush2.msra.mxu0 0.0
    %1438 = vmatprep.subr.mxu0 0.0
    %1439 = vmatpush2.msra.mxu0 0.0
    %1440 = vmatprep.subr.mxu0 0.0
    %1441 = vmatpush2.msra.mxu0 0.0
    %1442 = vmatprep.mubr.f32.mxu0 0.0
    %1443 = vmatmul.mubr.f32.gmra.mxu0 %v1236
    %v1444 = vpop.f32.mrf.mxu0
    %v1445 = vadd.f32 0.0, %v1444
    %v1446 = vpop.f32.mrf.mxu0
    %1447 = vdwg.mxu0
    %1448 = vmatprep.subr.mxu0 0.0
    %1449 = vmatpush1.msra.mxu0 0.0
    %1450 = vmatprep.subr.mxu0 0.0
    %1451 = vmatpush1.msra.mxu0 0.0
    %1452 = vmatprep.subr.mxu0 0.0
    %1453 = vmatpush1.msra.mxu0 0.0
    %1454 = vmatprep.subr.mxu0 0.0
    %1455 = vmatpush1.msra.mxu0 0.0
    %1456 = vmatprep.subr.mxu0 0.0
    %1457 = vmatpush1.msra.mxu0 0.0
    %1458 = vmatprep.subr.mxu0 0.0
    %1459 = vmatpush1.msra.mxu0 0.0
    %1460 = vmatprep.subr.mxu0 0.0
    %1461 = vmatpush1.msra.mxu0 0.0
    %1462 = vmatprep.subr.mxu0 0.0
    %1463 = vmatpush1.msra.mxu0 0.0
    %1464 = vmatprep.subr.mxu0 0.0
    %1465 = vmatpush1.msra.mxu0 0.0
    %1466 = vmatprep.subr.mxu0 0.0
    %1467 = vmatpush1.msra.mxu0 0.0
    %1468 = vmatprep.subr.mxu0 0.0
    %1469 = vmatpush1.msra.mxu0 0.0
    %1470 = vmatprep.subr.mxu0 0.0
    %1471 = vmatpush1.msra.mxu0 0.0
    %1472 = vmatprep.subr.mxu0 0.0
    %1473 = vmatpush1.msra.mxu0 %v76
    %1474 = vmatprep.subr.mxu0 0.0
    %1475 = vmatpush1.msra.mxu0 %v75
    %1476 = vmatprep.subr.mxu0 0.0
    %1477 = vmatpush1.msra.mxu0 %v74
    %1478 = vmatprep.subr.mxu0 0.0
    %1479 = vmatpush1.msra.mxu0 %v73
    %1480 = vmatprep.subr.mxu0 0.0
    %1481 = vmatpush2.msra.mxu0 0.0
    %1482 = vmatprep.subr.mxu0 0.0
    %1483 = vmatpush2.msra.mxu0 0.0
    %1484 = vmatprep.subr.mxu0 0.0
    %1485 = vmatpush2.msra.mxu0 0.0
    %1486 = vmatprep.subr.mxu0 0.0
    %1487 = vmatpush2.msra.mxu0 0.0
    %1488 = vmatprep.subr.mxu0 0.0
    %1489 = vmatpush2.msra.mxu0 0.0
    %1490 = vmatprep.subr.mxu0 0.0
    %1491 = vmatpush2.msra.mxu0 0.0
    %1492 = vmatprep.subr.mxu0 0.0
    %1493 = vmatpush2.msra.mxu0 0.0
    %1494 = vmatprep.subr.mxu0 0.0
    %1495 = vmatpush2.msra.mxu0 0.0
    %1496 = vmatprep.subr.mxu0 0.0
    %1497 = vmatpush2.msra.mxu0 0.0
    %1498 = vmatprep.subr.mxu0 0.0
    %1499 = vmatpush2.msra.mxu0 0.0
    %1500 = vmatprep.subr.mxu0 0.0
    %1501 = vmatpush2.msra.mxu0 0.0
    %1502 = vmatprep.subr.mxu0 0.0
    %1503 = vmatpush2.msra.mxu0 0.0
    %1504 = vmatprep.subr.mxu0 0.0
    %1505 = vmatpush2.msra.mxu0 0.0
    %1506 = vmatprep.subr.mxu0 0.0
    %1507 = vmatpush2.msra.mxu0 0.0
    %1508 = vmatprep.subr.mxu0 0.0
    %1509 = vmatpush2.msra.mxu0 0.0
    %1510 = vmatprep.subr.mxu0 0.0
    %1511 = vmatpush2.msra.mxu0 0.0
    %1512 = vmatprep.mubr.f32.mxu0 0.0
    %1513 = vmatmul.mubr.f32.gmra.mxu0 %v1236
    %v1514 = vpop.f32.mrf.mxu0
    %v1515 = vadd.f32 0.0, %v1514
    %v1516 = vpop.f32.mrf.mxu0
    %1517 = vdwg.mxu0
    %v1519 = vsel %vm94, %v26, 0
    %1521 = vmatprep.subr.mxu0 0.0
    %1522 = vmatpush1.msra.mxu0 0.0
    %1523 = vmatprep.subr.mxu0 0.0
    %1524 = vmatpush1.msra.mxu0 0.0
    %1525 = vmatprep.subr.mxu0 0.0
    %1526 = vmatpush1.msra.mxu0 0.0
    %1527 = vmatprep.subr.mxu0 0.0
    %1528 = vmatpush1.msra.mxu0 0.0
    %1529 = vmatprep.subr.mxu0 0.0
    %1530 = vmatpush1.msra.mxu0 0.0
    %1531 = vmatprep.subr.mxu0 0.0
    %1532 = vmatpush1.msra.mxu0 0.0
    %1533 = vmatprep.subr.mxu0 0.0
    %1534 = vmatpush1.msra.mxu0 0.0
    %1535 = vmatprep.subr.mxu0 0.0
    %1536 = vmatpush1.msra.mxu0 0.0
    %1537 = vmatprep.subr.mxu0 0.0
    %1538 = vmatpush1.msra.mxu0 0.0
    %1539 = vmatprep.subr.mxu0 0.0
    %1540 = vmatpush1.msra.mxu0 0.0
    %1541 = vmatprep.subr.mxu0 0.0
    %1542 = vmatpush1.msra.mxu0 0.0
    %1543 = vmatprep.subr.mxu0 0.0
    %1544 = vmatpush1.msra.mxu0 0.0
    %1545 = vmatprep.subr.mxu0 0.0
    %1546 = vmatpush1.msra.mxu0 %v64
    %1547 = vmatprep.subr.mxu0 0.0
    %1548 = vmatpush1.msra.mxu0 %v63
    %1549 = vmatprep.subr.mxu0 0.0
    %1550 = vmatpush1.msra.mxu0 %v62
    %1551 = vmatprep.subr.mxu0 0.0
    %1552 = vmatpush1.msra.mxu0 %v61
    %1553 = vmatprep.subr.mxu0 0.0
    %1554 = vmatpush2.msra.mxu0 0.0
    %1555 = vmatprep.subr.mxu0 0.0
    %1556 = vmatpush2.msra.mxu0 0.0
    %1557 = vmatprep.subr.mxu0 0.0
    %1558 = vmatpush2.msra.mxu0 0.0
    %1559 = vmatprep.subr.mxu0 0.0
    %1560 = vmatpush2.msra.mxu0 0.0
    %1561 = vmatprep.subr.mxu0 0.0
    %1562 = vmatpush2.msra.mxu0 0.0
    %1563 = vmatprep.subr.mxu0 0.0
    %1564 = vmatpush2.msra.mxu0 0.0
    %1565 = vmatprep.subr.mxu0 0.0
    %1566 = vmatpush2.msra.mxu0 0.0
    %1567 = vmatprep.subr.mxu0 0.0
    %1568 = vmatpush2.msra.mxu0 0.0
    %1569 = vmatprep.subr.mxu0 0.0
    %1570 = vmatpush2.msra.mxu0 0.0
    %1571 = vmatprep.subr.mxu0 0.0
    %1572 = vmatpush2.msra.mxu0 0.0
    %1573 = vmatprep.subr.mxu0 0.0
    %1574 = vmatpush2.msra.mxu0 0.0
    %1575 = vmatprep.subr.mxu0 0.0
    %1576 = vmatpush2.msra.mxu0 0.0
    %1577 = vmatprep.subr.mxu0 0.0
    %1578 = vmatpush2.msra.mxu0 0.0
    %1579 = vmatprep.subr.mxu0 0.0
    %1580 = vmatpush2.msra.mxu0 0.0
    %1581 = vmatprep.subr.mxu0 0.0
    %1582 = vmatpush2.msra.mxu0 0.0
    %1583 = vmatprep.subr.mxu0 0.0
    %1584 = vmatpush2.msra.mxu0 0.0
    %1585 = vmatprep.mubr.f32.mxu0 0.0
    %1586 = vmatmul.mubr.f32.gmra.mxu0 %v1519
    %v1587 = vpop.f32.mrf.mxu0
    %v1588 = vadd.f32 0.0, %v1587
    %v1589 = vpop.f32.mrf.mxu0
    %1590 = vdwg.mxu0
    %1591 = vmatprep.subr.mxu0 0.0
    %1592 = vmatpush1.msra.mxu0 0.0
    %1593 = vmatprep.subr.mxu0 0.0
    %1594 = vmatpush1.msra.mxu0 0.0
    %1595 = vmatprep.subr.mxu0 0.0
    %1596 = vmatpush1.msra.mxu0 0.0
    %1597 = vmatprep.subr.mxu0 0.0
    %1598 = vmatpush1.msra.mxu0 0.0
    %1599 = vmatprep.subr.mxu0 0.0
    %1600 = vmatpush1.msra.mxu0 0.0
    %1601 = vmatprep.subr.mxu0 0.0
    %1602 = vmatpush1.msra.mxu0 0.0
    %1603 = vmatprep.subr.mxu0 0.0
    %1604 = vmatpush1.msra.mxu0 0.0
    %1605 = vmatprep.subr.mxu0 0.0
    %1606 = vmatpush1.msra.mxu0 0.0
    %1607 = vmatprep.subr.mxu0 0.0
    %1608 = vmatpush1.msra.mxu0 0.0
    %1609 = vmatprep.subr.mxu0 0.0
    %1610 = vmatpush1.msra.mxu0 0.0
    %1611 = vmatprep.subr.mxu0 0.0
    %1612 = vmatpush1.msra.mxu0 0.0
    %1613 = vmatprep.subr.mxu0 0.0
    %1614 = vmatpush1.msra.mxu0 0.0
    %1615 = vmatprep.subr.mxu0 0.0
    %1616 = vmatpush1.msra.mxu0 %v68
    %1617 = vmatprep.subr.mxu0 0.0
    %1618 = vmatpush1.msra.mxu0 %v67
    %1619 = vmatprep.subr.mxu0 0.0
    %1620 = vmatpush1.msra.mxu0 %v66
    %1621 = vmatprep.subr.mxu0 0.0
    %1622 = vmatpush1.msra.mxu0 %v65
    %1623 = vmatprep.subr.mxu0 0.0
    %1624 = vmatpush2.msra.mxu0 0.0
    %1625 = vmatprep.subr.mxu0 0.0
    %1626 = vmatpush2.msra.mxu0 0.0
    %1627 = vmatprep.subr.mxu0 0.0
    %1628 = vmatpush2.msra.mxu0 0.0
    %1629 = vmatprep.subr.mxu0 0.0
    %1630 = vmatpush2.msra.mxu0 0.0
    %1631 = vmatprep.subr.mxu0 0.0
    %1632 = vmatpush2.msra.mxu0 0.0
    %1633 = vmatprep.subr.mxu0 0.0
    %1634 = vmatpush2.msra.mxu0 0.0
    %1635 = vmatprep.subr.mxu0 0.0
    %1636 = vmatpush2.msra.mxu0 0.0
    %1637 = vmatprep.subr.mxu0 0.0
    %1638 = vmatpush2.msra.mxu0 0.0
    %1639 = vmatprep.subr.mxu0 0.0
    %1640 = vmatpush2.msra.mxu0 0.0
    %1641 = vmatprep.subr.mxu0 0.0
    %1642 = vmatpush2.msra.mxu0 0.0
    %1643 = vmatprep.subr.mxu0 0.0
    %1644 = vmatpush2.msra.mxu0 0.0
    %1645 = vmatprep.subr.mxu0 0.0
    %1646 = vmatpush2.msra.mxu0 0.0
    %1647 = vmatprep.subr.mxu0 0.0
    %1648 = vmatpush2.msra.mxu0 0.0
    %1649 = vmatprep.subr.mxu0 0.0
    %1650 = vmatpush2.msra.mxu0 0.0
    %1651 = vmatprep.subr.mxu0 0.0
    %1652 = vmatpush2.msra.mxu0 0.0
    %1653 = vmatprep.subr.mxu0 0.0
    %1654 = vmatpush2.msra.mxu0 0.0
    %1655 = vmatprep.mubr.f32.mxu0 0.0
    %1656 = vmatmul.mubr.f32.gmra.mxu0 %v1519
    %v1657 = vpop.f32.mrf.mxu0
    %v1658 = vadd.f32 0.0, %v1657
    %v1659 = vpop.f32.mrf.mxu0
    %1660 = vdwg.mxu0
    %1661 = vmatprep.subr.mxu0 0.0
    %1662 = vmatpush1.msra.mxu0 0.0
    %1663 = vmatprep.subr.mxu0 0.0
    %1664 = vmatpush1.msra.mxu0 0.0
    %1665 = vmatprep.subr.mxu0 0.0
    %1666 = vmatpush1.msra.mxu0 0.0
    %1667 = vmatprep.subr.mxu0 0.0
    %1668 = vmatpush1.msra.mxu0 0.0
    %1669 = vmatprep.subr.mxu0 0.0
    %1670 = vmatpush1.msra.mxu0 0.0
    %1671 = vmatprep.subr.mxu0 0.0
    %1672 = vmatpush1.msra.mxu0 0.0
    %1673 = vmatprep.subr.mxu0 0.0
    %1674 = vmatpush1.msra.mxu0 0.0
    %1675 = vmatprep.subr.mxu0 0.0
    %1676 = vmatpush1.msra.mxu0 0.0
    %1677 = vmatprep.subr.mxu0 0.0
    %1678 = vmatpush1.msra.mxu0 0.0
    %1679 = vmatprep.subr.mxu0 0.0
    %1680 = vmatpush1.msra.mxu0 0.0
    %1681 = vmatprep.subr.mxu0 0.0
    %1682 = vmatpush1.msra.mxu0 0.0
    %1683 = vmatprep.subr.mxu0 0.0
    %1684 = vmatpush1.msra.mxu0 0.0
    %1685 = vmatprep.subr.mxu0 0.0
    %1686 = vmatpush1.msra.mxu0 %v72
    %1687 = vmatprep.subr.mxu0 0.0
    %1688 = vmatpush1.msra.mxu0 %v71
    %1689 = vmatprep.subr.mxu0 0.0
    %1690 = vmatpush1.msra.mxu0 %v70
    %1691 = vmatprep.subr.mxu0 0.0
    %1692 = vmatpush1.msra.mxu0 %v69
    %1693 = vmatprep.subr.mxu0 0.0
    %1694 = vmatpush2.msra.mxu0 0.0
    %1695 = vmatprep.subr.mxu0 0.0
    %1696 = vmatpush2.msra.mxu0 0.0
    %1697 = vmatprep.subr.mxu0 0.0
    %1698 = vmatpush2.msra.mxu0 0.0
    %1699 = vmatprep.subr.mxu0 0.0
    %1700 = vmatpush2.msra.mxu0 0.0
    %1701 = vmatprep.subr.mxu0 0.0
    %1702 = vmatpush2.msra.mxu0 0.0
    %1703 = vmatprep.subr.mxu0 0.0
    %1704 = vmatpush2.msra.mxu0 0.0
    %1705 = vmatprep.subr.mxu0 0.0
    %1706 = vmatpush2.msra.mxu0 0.0
    %1707 = vmatprep.subr.mxu0 0.0
    %1708 = vmatpush2.msra.mxu0 0.0
    %1709 = vmatprep.subr.mxu0 0.0
    %1710 = vmatpush2.msra.mxu0 0.0
    %1711 = vmatprep.subr.mxu0 0.0
    %1712 = vmatpush2.msra.mxu0 0.0
    %1713 = vmatprep.subr.mxu0 0.0
    %1714 = vmatpush2.msra.mxu0 0.0
    %1715 = vmatprep.subr.mxu0 0.0
    %1716 = vmatpush2.msra.mxu0 0.0
    %1717 = vmatprep.subr.mxu0 0.0
    %1718 = vmatpush2.msra.mxu0 0.0
    %1719 = vmatprep.subr.mxu0 0.0
    %1720 = vmatpush2.msra.mxu0 0.0
    %1721 = vmatprep.subr.mxu0 0.0
    %1722 = vmatpush2.msra.mxu0 0.0
    %1723 = vmatprep.subr.mxu0 0.0
    %1724 = vmatpush2.msra.mxu0 0.0
    %1725 = vmatprep.mubr.f32.mxu0 0.0
    %1726 = vmatmul.mubr.f32.gmra.mxu0 %v1519
    %v1727 = vpop.f32.mrf.mxu0
    %v1728 = vadd.f32 0.0, %v1727
    %v1729 = vpop.f32.mrf.mxu0
    %1730 = vdwg.mxu0
    %1731 = vmatprep.subr.mxu0 0.0
    %1732 = vmatpush1.msra.mxu0 0.0
    %1733 = vmatprep.subr.mxu0 0.0
    %1734 = vmatpush1.msra.mxu0 0.0
    %1735 = vmatprep.subr.mxu0 0.0
    %1736 = vmatpush1.msra.mxu0 0.0
    %1737 = vmatprep.subr.mxu0 0.0
    %1738 = vmatpush1.msra.mxu0 0.0
    %1739 = vmatprep.subr.mxu0 0.0
    %1740 = vmatpush1.msra.mxu0 0.0
    %1741 = vmatprep.subr.mxu0 0.0
    %1742 = vmatpush1.msra.mxu0 0.0
    %1743 = vmatprep.subr.mxu0 0.0
    %1744 = vmatpush1.msra.mxu0 0.0
    %1745 = vmatprep.subr.mxu0 0.0
    %1746 = vmatpush1.msra.mxu0 0.0
    %1747 = vmatprep.subr.mxu0 0.0
    %1748 = vmatpush1.msra.mxu0 0.0
    %1749 = vmatprep.subr.mxu0 0.0
    %1750 = vmatpush1.msra.mxu0 0.0
    %1751 = vmatprep.subr.mxu0 0.0
    %1752 = vmatpush1.msra.mxu0 0.0
    %1753 = vmatprep.subr.mxu0 0.0
    %1754 = vmatpush1.msra.mxu0 0.0
    %1755 = vmatprep.subr.mxu0 0.0
    %1756 = vmatpush1.msra.mxu0 %v76
    %1757 = vmatprep.subr.mxu0 0.0
    %1758 = vmatpush1.msra.mxu0 %v75
    %1759 = vmatprep.subr.mxu0 0.0
    %1760 = vmatpush1.msra.mxu0 %v74
    %1761 = vmatprep.subr.mxu0 0.0
    %1762 = vmatpush1.msra.mxu0 %v73
    %1763 = vmatprep.subr.mxu0 0.0
    %1764 = vmatpush2.msra.mxu0 0.0
    %1765 = vmatprep.subr.mxu0 0.0
    %1766 = vmatpush2.msra.mxu0 0.0
    %1767 = vmatprep.subr.mxu0 0.0
    %1768 = vmatpush2.msra.mxu0 0.0
    %1769 = vmatprep.subr.mxu0 0.0
    %1770 = vmatpush2.msra.mxu0 0.0
    %1771 = vmatprep.subr.mxu0 0.0
    %1772 = vmatpush2.msra.mxu0 0.0
    %1773 = vmatprep.subr.mxu0 0.0
    %1774 = vmatpush2.msra.mxu0 0.0
    %1775 = vmatprep.subr.mxu0 0.0
    %1776 = vmatpush2.msra.mxu0 0.0
    %1777 = vmatprep.subr.mxu0 0.0
    %1778 = vmatpush2.msra.mxu0 0.0
    %1779 = vmatprep.subr.mxu0 0.0
    %1780 = vmatpush2.msra.mxu0 0.0
    %1781 = vmatprep.subr.mxu0 0.0
    %1782 = vmatpush2.msra.mxu0 0.0
    %1783 = vmatprep.subr.mxu0 0.0
    %1784 = vmatpush2.msra.mxu0 0.0
    %1785 = vmatprep.subr.mxu0 0.0
    %1786 = vmatpush2.msra.mxu0 0.0
    %1787 = vmatprep.subr.mxu0 0.0
    %1788 = vmatpush2.msra.mxu0 0.0
    %1789 = vmatprep.subr.mxu0 0.0
    %1790 = vmatpush2.msra.mxu0 0.0
    %1791 = vmatprep.subr.mxu0 0.0
    %1792 = vmatpush2.msra.mxu0 0.0
    %1793 = vmatprep.subr.mxu0 0.0
    %1794 = vmatpush2.msra.mxu0 0.0
    %1795 = vmatprep.mubr.f32.mxu0 0.0
    %1796 = vmatmul.mubr.f32.gmra.mxu0 %v1519
    %v1797 = vpop.f32.mrf.mxu0
    %v1798 = vadd.f32 0.0, %v1797
    %v1799 = vpop.f32.mrf.mxu0
    %1800 = vdwg.mxu0
    %vm1801 = vcmask 64512
    %v1803 = vsel %vm1801, %v661, 0
    %v1806 = vsel %vm1801, %v739, 0
    %1808 = vmatprep.subr.mxu0 0.0
    %1809 = vmatpush1.xpose.msra.mxu0 0.0
    %1810 = vmatprep.subr.mxu0 0.0
    %1811 = vmatpush1.xpose.msra.mxu0 0.0
    %1812 = vmatprep.subr.mxu0 0.0
    %1813 = vmatpush1.xpose.msra.mxu0 0.0
    %1814 = vmatprep.subr.mxu0 0.0
    %1815 = vmatpush1.xpose.msra.mxu0 0.0
    %1816 = vmatprep.subr.mxu0 0.0
    %1817 = vmatpush1.xpose.msra.mxu0 0.0
    %1818 = vmatprep.subr.mxu0 0.0
    %1819 = vmatpush1.xpose.msra.mxu0 0.0
    %1820 = vmatprep.subr.mxu0 0.0
    %1821 = vmatpush1.xpose.msra.mxu0 0.0
    %1822 = vmatprep.subr.mxu0 0.0
    %1823 = vmatpush1.xpose.msra.mxu0 0.0
    %1824 = vmatprep.subr.mxu0 0.0
    %1825 = vmatpush1.xpose.msra.mxu0 0.0
    %1826 = vmatprep.subr.mxu0 0.0
    %1827 = vmatpush1.xpose.msra.mxu0 0.0
    %1828 = vmatprep.subr.mxu0 0.0
    %1829 = vmatpush1.xpose.msra.mxu0 0.0
    %1830 = vmatprep.subr.mxu0 0.0
    %1831 = vmatpush1.xpose.msra.mxu0 0.0
    %1832 = vmatprep.subr.mxu0 0.0
    %1833 = vmatpush1.xpose.msra.mxu0 0.0
    %1834 = vmatprep.subr.mxu0 0.0
    %1835 = vmatpush1.xpose.msra.mxu0 0.0
    %1836 = vmatprep.subr.mxu0 0.0
    %1837 = vmatpush1.xpose.msra.mxu0 0.0
    %1838 = vmatprep.subr.mxu0 0.0
    %1839 = vmatpush1.xpose.msra.mxu0 %v1806
    %1840 = vmatprep.subr.mxu0 0.0
    %1841 = vmatpush2.xpose.msra.mxu0 0.0
    %1842 = vmatprep.subr.mxu0 0.0
    %1843 = vmatpush2.xpose.msra.mxu0 0.0
    %1844 = vmatprep.subr.mxu0 0.0
    %1845 = vmatpush2.xpose.msra.mxu0 0.0
    %1846 = vmatprep.subr.mxu0 0.0
    %1847 = vmatpush2.xpose.msra.mxu0 0.0
    %1848 = vmatprep.subr.mxu0 0.0
    %1849 = vmatpush2.xpose.msra.mxu0 0.0
    %1850 = vmatprep.subr.mxu0 0.0
    %1851 = vmatpush2.xpose.msra.mxu0 0.0
    %1852 = vmatprep.subr.mxu0 0.0
    %1853 = vmatpush2.xpose.msra.mxu0 0.0
    %1854 = vmatprep.subr.mxu0 0.0
    %1855 = vmatpush2.xpose.msra.mxu0 0.0
    %1856 = vmatprep.subr.mxu0 0.0
    %1857 = vmatpush2.xpose.msra.mxu0 0.0
    %1858 = vmatprep.subr.mxu0 0.0
    %1859 = vmatpush2.xpose.msra.mxu0 0.0
    %1860 = vmatprep.subr.mxu0 0.0
    %1861 = vmatpush2.xpose.msra.mxu0 0.0
    %1862 = vmatprep.subr.mxu0 0.0
    %1863 = vmatpush2.xpose.msra.mxu0 0.0
    %1864 = vmatprep.subr.mxu0 0.0
    %1865 = vmatpush2.xpose.msra.mxu0 0.0
    %1866 = vmatprep.subr.mxu0 0.0
    %1867 = vmatpush2.xpose.msra.mxu0 0.0
    %1868 = vmatprep.subr.mxu0 0.0
    %1869 = vmatpush2.xpose.msra.mxu0 0.0
    %1870 = vmatprep.subr.mxu0 0.0
    %1871 = vmatpush2.xpose.msra.mxu0 0.0
    %1872 = vmatprep.mubr.f32.mxu0 0.0
    %1873 = vmatmul.mubr.f32.gmra.mxu0 %v1803
    %v1874 = vpop.f32.mrf.mxu0
    %v1875 = vadd.f32 0.0, %v1874
    %v1876 = vpop.f32.mrf.mxu0
    %1877 = vdwg.mxu0
    %v1879 = vsel %vm1801, %v662, 0
    %v1882 = vsel %vm1801, %v809, 0
    %1884 = vmatprep.subr.mxu0 0.0
    %1885 = vmatpush1.xpose.msra.mxu0 0.0
    %1886 = vmatprep.subr.mxu0 0.0
    %1887 = vmatpush1.xpose.msra.mxu0 0.0
    %1888 = vmatprep.subr.mxu0 0.0
    %1889 = vmatpush1.xpose.msra.mxu0 0.0
    %1890 = vmatprep.subr.mxu0 0.0
    %1891 = vmatpush1.xpose.msra.mxu0 0.0
    %1892 = vmatprep.subr.mxu0 0.0
    %1893 = vmatpush1.xpose.msra.mxu0 0.0
    %1894 = vmatprep.subr.mxu0 0.0
    %1895 = vmatpush1.xpose.msra.mxu0 0.0
    %1896 = vmatprep.subr.mxu0 0.0
    %1897 = vmatpush1.xpose.msra.mxu0 0.0
    %1898 = vmatprep.subr.mxu0 0.0
    %1899 = vmatpush1.xpose.msra.mxu0 0.0
    %1900 = vmatprep.subr.mxu0 0.0
    %1901 = vmatpush1.xpose.msra.mxu0 0.0
    %1902 = vmatprep.subr.mxu0 0.0
    %1903 = vmatpush1.xpose.msra.mxu0 0.0
    %1904 = vmatprep.subr.mxu0 0.0
    %1905 = vmatpush1.xpose.msra.mxu0 0.0
    %1906 = vmatprep.subr.mxu0 0.0
    %1907 = vmatpush1.xpose.msra.mxu0 0.0
    %1908 = vmatprep.subr.mxu0 0.0
    %1909 = vmatpush1.xpose.msra.mxu0 0.0
    %1910 = vmatprep.subr.mxu0 0.0
    %1911 = vmatpush1.xpose.msra.mxu0 0.0
    %1912 = vmatprep.subr.mxu0 0.0
    %1913 = vmatpush1.xpose.msra.mxu0 0.0
    %1914 = vmatprep.subr.mxu0 0.0
    %1915 = vmatpush1.xpose.msra.mxu0 %v1882
    %1916 = vmatprep.subr.mxu0 0.0
    %1917 = vmatpush2.xpose.msra.mxu0 0.0
    %1918 = vmatprep.subr.mxu0 0.0
    %1919 = vmatpush2.xpose.msra.mxu0 0.0
    %1920 = vmatprep.subr.mxu0 0.0
    %1921 = vmatpush2.xpose.msra.mxu0 0.0
    %1922 = vmatprep.subr.mxu0 0.0
    %1923 = vmatpush2.xpose.msra.mxu0 0.0
    %1924 = vmatprep.subr.mxu0 0.0
    %1925 = vmatpush2.xpose.msra.mxu0 0.0
    %1926 = vmatprep.subr.mxu0 0.0
    %1927 = vmatpush2.xpose.msra.mxu0 0.0
    %1928 = vmatprep.subr.mxu0 0.0
    %1929 = vmatpush2.xpose.msra.mxu0 0.0
    %1930 = vmatprep.subr.mxu0 0.0
    %1931 = vmatpush2.xpose.msra.mxu0 0.0
    %1932 = vmatprep.subr.mxu0 0.0
    %1933 = vmatpush2.xpose.msra.mxu0 0.0
    %1934 = vmatprep.subr.mxu0 0.0
    %1935 = vmatpush2.xpose.msra.mxu0 0.0
    %1936 = vmatprep.subr.mxu0 0.0
    %1937 = vmatpush2.xpose.msra.mxu0 0.0
    %1938 = vmatprep.subr.mxu0 0.0
    %1939 = vmatpush2.xpose.msra.mxu0 0.0
    %1940 = vmatprep.subr.mxu0 0.0
    %1941 = vmatpush2.xpose.msra.mxu0 0.0
    %1942 = vmatprep.subr.mxu0 0.0
    %1943 = vmatpush2.xpose.msra.mxu0 0.0
    %1944 = vmatprep.subr.mxu0 0.0
    %1945 = vmatpush2.xpose.msra.mxu0 0.0
    %1946 = vmatprep.subr.mxu0 0.0
    %1947 = vmatpush2.xpose.msra.mxu0 0.0
    %1948 = vmatprep.mubr.f32.mxu0 0.0
    %1949 = vmatmul.mubr.f32.gmra.mxu0 %v1879
    %v1950 = vpop.f32.mrf.mxu0
    %v1951 = vadd.f32 0.0, %v1950
    %v1952 = vpop.f32.mrf.mxu0
    %1953 = vdwg.mxu0
    %v1955 = vsel %vm1801, %v663, 0
    %v1958 = vsel %vm1801, %v879, 0
    %1960 = vmatprep.subr.mxu0 0.0
    %1961 = vmatpush1.xpose.msra.mxu0 0.0
    %1962 = vmatprep.subr.mxu0 0.0
    %1963 = vmatpush1.xpose.msra.mxu0 0.0
    %1964 = vmatprep.subr.mxu0 0.0
    %1965 = vmatpush1.xpose.msra.mxu0 0.0
    %1966 = vmatprep.subr.mxu0 0.0
    %1967 = vmatpush1.xpose.msra.mxu0 0.0
    %1968 = vmatprep.subr.mxu0 0.0
    %1969 = vmatpush1.xpose.msra.mxu0 0.0
    %1970 = vmatprep.subr.mxu0 0.0
    %1971 = vmatpush1.xpose.msra.mxu0 0.0
    %1972 = vmatprep.subr.mxu0 0.0
    %1973 = vmatpush1.xpose.msra.mxu0 0.0
    %1974 = vmatprep.subr.mxu0 0.0
    %1975 = vmatpush1.xpose.msra.mxu0 0.0
    %1976 = vmatprep.subr.mxu0 0.0
    %1977 = vmatpush1.xpose.msra.mxu0 0.0
    %1978 = vmatprep.subr.mxu0 0.0
    %1979 = vmatpush1.xpose.msra.mxu0 0.0
    %1980 = vmatprep.subr.mxu0 0.0
    %1981 = vmatpush1.xpose.msra.mxu0 0.0
    %1982 = vmatprep.subr.mxu0 0.0
    %1983 = vmatpush1.xpose.msra.mxu0 0.0
    %1984 = vmatprep.subr.mxu0 0.0
    %1985 = vmatpush1.xpose.msra.mxu0 0.0
    %1986 = vmatprep.subr.mxu0 0.0
    %1987 = vmatpush1.xpose.msra.mxu0 0.0
    %1988 = vmatprep.subr.mxu0 0.0
    %1989 = vmatpush1.xpose.msra.mxu0 0.0
    %1990 = vmatprep.subr.mxu0 0.0
    %1991 = vmatpush1.xpose.msra.mxu0 %v1958
    %1992 = vmatprep.subr.mxu0 0.0
    %1993 = vmatpush2.xpose.msra.mxu0 0.0
    %1994 = vmatprep.subr.mxu0 0.0
    %1995 = vmatpush2.xpose.msra.mxu0 0.0
    %1996 = vmatprep.subr.mxu0 0.0
    %1997 = vmatpush2.xpose.msra.mxu0 0.0
    %1998 = vmatprep.subr.mxu0 0.0
    %1999 = vmatpush2.xpose.msra.mxu0 0.0
    %2000 = vmatprep.subr.mxu0 0.0
    %2001 = vmatpush2.xpose.msra.mxu0 0.0
    %2002 = vmatprep.subr.mxu0 0.0
    %2003 = vmatpush2.xpose.msra.mxu0 0.0
    %2004 = vmatprep.subr.mxu0 0.0
    %2005 = vmatpush2.xpose.msra.mxu0 0.0
    %2006 = vmatprep.subr.mxu0 0.0
    %2007 = vmatpush2.xpose.msra.mxu0 0.0
    %2008 = vmatprep.subr.mxu0 0.0
    %2009 = vmatpush2.xpose.msra.mxu0 0.0
    %2010 = vmatprep.subr.mxu0 0.0
    %2011 = vmatpush2.xpose.msra.mxu0 0.0
    %2012 = vmatprep.subr.mxu0 0.0
    %2013 = vmatpush2.xpose.msra.mxu0 0.0
    %2014 = vmatprep.subr.mxu0 0.0
    %2015 = vmatpush2.xpose.msra.mxu0 0.0
    %2016 = vmatprep.subr.mxu0 0.0
    %2017 = vmatpush2.xpose.msra.mxu0 0.0
    %2018 = vmatprep.subr.mxu0 0.0
    %2019 = vmatpush2.xpose.msra.mxu0 0.0
    %2020 = vmatprep.subr.mxu0 0.0
    %2021 = vmatpush2.xpose.msra.mxu0 0.0
    %2022 = vmatprep.subr.mxu0 0.0
    %2023 = vmatpush2.xpose.msra.mxu0 0.0
    %2024 = vmatprep.mubr.f32.mxu0 0.0
    %2025 = vmatmul.mubr.f32.gmra.mxu0 %v1955
    %v2026 = vpop.f32.mrf.mxu0
    %v2027 = vadd.f32 0.0, %v2026
    %v2028 = vpop.f32.mrf.mxu0
    %2029 = vdwg.mxu0
    %v2031 = vsel %vm1801, %v664, 0
    %v2034 = vsel %vm1801, %v949, 0
    %2036 = vmatprep.subr.mxu0 0.0
    %2037 = vmatpush1.xpose.msra.mxu0 0.0
    %2038 = vmatprep.subr.mxu0 0.0
    %2039 = vmatpush1.xpose.msra.mxu0 0.0
    %2040 = vmatprep.subr.mxu0 0.0
    %2041 = vmatpush1.xpose.msra.mxu0 0.0
    %2042 = vmatprep.subr.mxu0 0.0
    %2043 = vmatpush1.xpose.msra.mxu0 0.0
    %2044 = vmatprep.subr.mxu0 0.0
    %2045 = vmatpush1.xpose.msra.mxu0 0.0
    %2046 = vmatprep.subr.mxu0 0.0
    %2047 = vmatpush1.xpose.msra.mxu0 0.0
    %2048 = vmatprep.subr.mxu0 0.0
    %2049 = vmatpush1.xpose.msra.mxu0 0.0
    %2050 = vmatprep.subr.mxu0 0.0
    %2051 = vmatpush1.xpose.msra.mxu0 0.0
    %2052 = vmatprep.subr.mxu0 0.0
    %2053 = vmatpush1.xpose.msra.mxu0 0.0
    %2054 = vmatprep.subr.mxu0 0.0
    %2055 = vmatpush1.xpose.msra.mxu0 0.0
    %2056 = vmatprep.subr.mxu0 0.0
    %2057 = vmatpush1.xpose.msra.mxu0 0.0
    %2058 = vmatprep.subr.mxu0 0.0
    %2059 = vmatpush1.xpose.msra.mxu0 0.0
    %2060 = vmatprep.subr.mxu0 0.0
    %2061 = vmatpush1.xpose.msra.mxu0 0.0
    %2062 = vmatprep.subr.mxu0 0.0
    %2063 = vmatpush1.xpose.msra.mxu0 0.0
    %2064 = vmatprep.subr.mxu0 0.0
    %2065 = vmatpush1.xpose.msra.mxu0 0.0
    %2066 = vmatprep.subr.mxu0 0.0
    %2067 = vmatpush1.xpose.msra.mxu0 %v2034
    %2068 = vmatprep.subr.mxu0 0.0
    %2069 = vmatpush2.xpose.msra.mxu0 0.0
    %2070 = vmatprep.subr.mxu0 0.0
    %2071 = vmatpush2.xpose.msra.mxu0 0.0
    %2072 = vmatprep.subr.mxu0 0.0
    %2073 = vmatpush2.xpose.msra.mxu0 0.0
    %2074 = vmatprep.subr.mxu0 0.0
    %2075 = vmatpush2.xpose.msra.mxu0 0.0
    %2076 = vmatprep.subr.mxu0 0.0
    %2077 = vmatpush2.xpose.msra.mxu0 0.0
    %2078 = vmatprep.subr.mxu0 0.0
    %2079 = vmatpush2.xpose.msra.mxu0 0.0
    %2080 = vmatprep.subr.mxu0 0.0
    %2081 = vmatpush2.xpose.msra.mxu0 0.0
    %2082 = vmatprep.subr.mxu0 0.0
    %2083 = vmatpush2.xpose.msra.mxu0 0.0
    %2084 = vmatprep.subr.mxu0 0.0
    %2085 = vmatpush2.xpose.msra.mxu0 0.0
    %2086 = vmatprep.subr.mxu0 0.0
    %2087 = vmatpush2.xpose.msra.mxu0 0.0
    %2088 = vmatprep.subr.mxu0 0.0
    %2089 = vmatpush2.xpose.msra.mxu0 0.0
    %2090 = vmatprep.subr.mxu0 0.0
    %2091 = vmatpush2.xpose.msra.mxu0 0.0
    %2092 = vmatprep.subr.mxu0 0.0
    %2093 = vmatpush2.xpose.msra.mxu0 0.0
    %2094 = vmatprep.subr.mxu0 0.0
    %2095 = vmatpush2.xpose.msra.mxu0 0.0
    %2096 = vmatprep.subr.mxu0 0.0
    %2097 = vmatpush2.xpose.msra.mxu0 0.0
    %2098 = vmatprep.subr.mxu0 0.0
    %2099 = vmatpush2.xpose.msra.mxu0 0.0
    %2100 = vmatprep.mubr.f32.mxu0 0.0
    %2101 = vmatmul.mubr.f32.gmra.mxu0 %v2031
    %v2102 = vpop.f32.mrf.mxu0
    %v2103 = vadd.f32 0.0, %v2102
    %v2104 = vpop.f32.mrf.mxu0
    %2105 = vdwg.mxu0
    %v2107 = vsel %vm1801, %v665, 0
    %v2110 = vsel %vm1801, %v1022, 0
    %2112 = vmatprep.subr.mxu0 0.0
    %2113 = vmatpush1.xpose.msra.mxu0 0.0
    %2114 = vmatprep.subr.mxu0 0.0
    %2115 = vmatpush1.xpose.msra.mxu0 0.0
    %2116 = vmatprep.subr.mxu0 0.0
    %2117 = vmatpush1.xpose.msra.mxu0 0.0
    %2118 = vmatprep.subr.mxu0 0.0
    %2119 = vmatpush1.xpose.msra.mxu0 0.0
    %2120 = vmatprep.subr.mxu0 0.0
    %2121 = vmatpush1.xpose.msra.mxu0 0.0
    %2122 = vmatprep.subr.mxu0 0.0
    %2123 = vmatpush1.xpose.msra.mxu0 0.0
    %2124 = vmatprep.subr.mxu0 0.0
    %2125 = vmatpush1.xpose.msra.mxu0 0.0
    %2126 = vmatprep.subr.mxu0 0.0
    %2127 = vmatpush1.xpose.msra.mxu0 0.0
    %2128 = vmatprep.subr.mxu0 0.0
    %2129 = vmatpush1.xpose.msra.mxu0 0.0
    %2130 = vmatprep.subr.mxu0 0.0
    %2131 = vmatpush1.xpose.msra.mxu0 0.0
    %2132 = vmatprep.subr.mxu0 0.0
    %2133 = vmatpush1.xpose.msra.mxu0 0.0
    %2134 = vmatprep.subr.mxu0 0.0
    %2135 = vmatpush1.xpose.msra.mxu0 0.0
    %2136 = vmatprep.subr.mxu0 0.0
    %2137 = vmatpush1.xpose.msra.mxu0 0.0
    %2138 = vmatprep.subr.mxu0 0.0
    %2139 = vmatpush1.xpose.msra.mxu0 0.0
    %2140 = vmatprep.subr.mxu0 0.0
    %2141 = vmatpush1.xpose.msra.mxu0 0.0
    %2142 = vmatprep.subr.mxu0 0.0
    %2143 = vmatpush1.xpose.msra.mxu0 %v2110
    %2144 = vmatprep.subr.mxu0 0.0
    %2145 = vmatpush2.xpose.msra.mxu0 0.0
    %2146 = vmatprep.subr.mxu0 0.0
    %2147 = vmatpush2.xpose.msra.mxu0 0.0
    %2148 = vmatprep.subr.mxu0 0.0
    %2149 = vmatpush2.xpose.msra.mxu0 0.0
    %2150 = vmatprep.subr.mxu0 0.0
    %2151 = vmatpush2.xpose.msra.mxu0 0.0
    %2152 = vmatprep.subr.mxu0 0.0
    %2153 = vmatpush2.xpose.msra.mxu0 0.0
    %2154 = vmatprep.subr.mxu0 0.0
    %2155 = vmatpush2.xpose.msra.mxu0 0.0
    %2156 = vmatprep.subr.mxu0 0.0
    %2157 = vmatpush2.xpose.msra.mxu0 0.0
    %2158 = vmatprep.subr.mxu0 0.0
    %2159 = vmatpush2.xpose.msra.mxu0 0.0
    %2160 = vmatprep.subr.mxu0 0.0
    %2161 = vmatpush2.xpose.msra.mxu0 0.0
    %2162 = vmatprep.subr.mxu0 0.0
    %2163 = vmatpush2.xpose.msra.mxu0 0.0
    %2164 = vmatprep.subr.mxu0 0.0
    %2165 = vmatpush2.xpose.msra.mxu0 0.0
    %2166 = vmatprep.subr.mxu0 0.0
    %2167 = vmatpush2.xpose.msra.mxu0 0.0
    %2168 = vmatprep.subr.mxu0 0.0
    %2169 = vmatpush2.xpose.msra.mxu0 0.0
    %2170 = vmatprep.subr.mxu0 0.0
    %2171 = vmatpush2.xpose.msra.mxu0 0.0
    %2172 = vmatprep.subr.mxu0 0.0
    %2173 = vmatpush2.xpose.msra.mxu0 0.0
    %2174 = vmatprep.subr.mxu0 0.0
    %2175 = vmatpush2.xpose.msra.mxu0 0.0
    %2176 = vmatprep.mubr.f32.mxu0 0.0
    %2177 = vmatmul.mubr.f32.gmra.mxu0 %v2107
    %v2178 = vpop.f32.mrf.mxu0
    %v2179 = vadd.f32 0.0, %v2178
    %v2180 = vpop.f32.mrf.mxu0
    %2181 = vdwg.mxu0
    %v2183 = vsel %vm1801, %v666, 0
    %v2186 = vsel %vm1801, %v1092, 0
    %2188 = vmatprep.subr.mxu0 0.0
    %2189 = vmatpush1.xpose.msra.mxu0 0.0
    %2190 = vmatprep.subr.mxu0 0.0
    %2191 = vmatpush1.xpose.msra.mxu0 0.0
    %2192 = vmatprep.subr.mxu0 0.0
    %2193 = vmatpush1.xpose.msra.mxu0 0.0
    %2194 = vmatprep.subr.mxu0 0.0
    %2195 = vmatpush1.xpose.msra.mxu0 0.0
    %2196 = vmatprep.subr.mxu0 0.0
    %2197 = vmatpush1.xpose.msra.mxu0 0.0
    %2198 = vmatprep.subr.mxu0 0.0
    %2199 = vmatpush1.xpose.msra.mxu0 0.0
    %2200 = vmatprep.subr.mxu0 0.0
    %2201 = vmatpush1.xpose.msra.mxu0 0.0
    %2202 = vmatprep.subr.mxu0 0.0
    %2203 = vmatpush1.xpose.msra.mxu0 0.0
    %2204 = vmatprep.subr.mxu0 0.0
    %2205 = vmatpush1.xpose.msra.mxu0 0.0
    %2206 = vmatprep.subr.mxu0 0.0
    %2207 = vmatpush1.xpose.msra.mxu0 0.0
    %2208 = vmatprep.subr.mxu0 0.0
    %2209 = vmatpush1.xpose.msra.mxu0 0.0
    %2210 = vmatprep.subr.mxu0 0.0
    %2211 = vmatpush1.xpose.msra.mxu0 0.0
    %2212 = vmatprep.subr.mxu0 0.0
    %2213 = vmatpush1.xpose.msra.mxu0 0.0
    %2214 = vmatprep.subr.mxu0 0.0
    %2215 = vmatpush1.xpose.msra.mxu0 0.0
    %2216 = vmatprep.subr.mxu0 0.0
    %2217 = vmatpush1.xpose.msra.mxu0 0.0
    %2218 = vmatprep.subr.mxu0 0.0
    %2219 = vmatpush1.xpose.msra.mxu0 %v2186
    %2220 = vmatprep.subr.mxu0 0.0
    %2221 = vmatpush2.xpose.msra.mxu0 0.0
    %2222 = vmatprep.subr.mxu0 0.0
    %2223 = vmatpush2.xpose.msra.mxu0 0.0
    %2224 = vmatprep.subr.mxu0 0.0
    %2225 = vmatpush2.xpose.msra.mxu0 0.0
    %2226 = vmatprep.subr.mxu0 0.0
    %2227 = vmatpush2.xpose.msra.mxu0 0.0
    %2228 = vmatprep.subr.mxu0 0.0
    %2229 = vmatpush2.xpose.msra.mxu0 0.0
    %2230 = vmatprep.subr.mxu0 0.0
    %2231 = vmatpush2.xpose.msra.mxu0 0.0
    %2232 = vmatprep.subr.mxu0 0.0
    %2233 = vmatpush2.xpose.msra.mxu0 0.0
    %2234 = vmatprep.subr.mxu0 0.0
    %2235 = vmatpush2.xpose.msra.mxu0 0.0
    %2236 = vmatprep.subr.mxu0 0.0
    %2237 = vmatpush2.xpose.msra.mxu0 0.0
    %2238 = vmatprep.subr.mxu0 0.0
    %2239 = vmatpush2.xpose.msra.mxu0 0.0
    %2240 = vmatprep.subr.mxu0 0.0
    %2241 = vmatpush2.xpose.msra.mxu0 0.0
    %2242 = vmatprep.subr.mxu0 0.0
    %2243 = vmatpush2.xpose.msra.mxu0 0.0
    %2244 = vmatprep.subr.mxu0 0.0
    %2245 = vmatpush2.xpose.msra.mxu0 0.0
    %2246 = vmatprep.subr.mxu0 0.0
    %2247 = vmatpush2.xpose.msra.mxu0 0.0
    %2248 = vmatprep.subr.mxu0 0.0
    %2249 = vmatpush2.xpose.msra.mxu0 0.0
    %2250 = vmatprep.subr.mxu0 0.0
    %2251 = vmatpush2.xpose.msra.mxu0 0.0
    %2252 = vmatprep.mubr.f32.mxu0 0.0
    %2253 = vmatmul.mubr.f32.gmra.mxu0 %v2183
    %v2254 = vpop.f32.mrf.mxu0
    %v2255 = vadd.f32 0.0, %v2254
    %v2256 = vpop.f32.mrf.mxu0
    %2257 = vdwg.mxu0
    %v2259 = vsel %vm1801, %v667, 0
    %v2262 = vsel %vm1801, %v1162, 0
    %2264 = vmatprep.subr.mxu0 0.0
    %2265 = vmatpush1.xpose.msra.mxu0 0.0
    %2266 = vmatprep.subr.mxu0 0.0
    %2267 = vmatpush1.xpose.msra.mxu0 0.0
    %2268 = vmatprep.subr.mxu0 0.0
    %2269 = vmatpush1.xpose.msra.mxu0 0.0
    %2270 = vmatprep.subr.mxu0 0.0
    %2271 = vmatpush1.xpose.msra.mxu0 0.0
    %2272 = vmatprep.subr.mxu0 0.0
    %2273 = vmatpush1.xpose.msra.mxu0 0.0
    %2274 = vmatprep.subr.mxu0 0.0
    %2275 = vmatpush1.xpose.msra.mxu0 0.0
    %2276 = vmatprep.subr.mxu0 0.0
    %2277 = vmatpush1.xpose.msra.mxu0 0.0
    %2278 = vmatprep.subr.mxu0 0.0
    %2279 = vmatpush1.xpose.msra.mxu0 0.0
    %2280 = vmatprep.subr.mxu0 0.0
    %2281 = vmatpush1.xpose.msra.mxu0 0.0
    %2282 = vmatprep.subr.mxu0 0.0
    %2283 = vmatpush1.xpose.msra.mxu0 0.0
    %2284 = vmatprep.subr.mxu0 0.0
    %2285 = vmatpush1.xpose.msra.mxu0 0.0
    %2286 = vmatprep.subr.mxu0 0.0
    %2287 = vmatpush1.xpose.msra.mxu0 0.0
    %2288 = vmatprep.subr.mxu0 0.0
    %2289 = vmatpush1.xpose.msra.mxu0 0.0
    %2290 = vmatprep.subr.mxu0 0.0
    %2291 = vmatpush1.xpose.msra.mxu0 0.0
    %2292 = vmatprep.subr.mxu0 0.0
    %2293 = vmatpush1.xpose.msra.mxu0 0.0
    %2294 = vmatprep.subr.mxu0 0.0
    %2295 = vmatpush1.xpose.msra.mxu0 %v2262
    %2296 = vmatprep.subr.mxu0 0.0
    %2297 = vmatpush2.xpose.msra.mxu0 0.0
    %2298 = vmatprep.subr.mxu0 0.0
    %2299 = vmatpush2.xpose.msra.mxu0 0.0
    %2300 = vmatprep.subr.mxu0 0.0
    %2301 = vmatpush2.xpose.msra.mxu0 0.0
    %2302 = vmatprep.subr.mxu0 0.0
    %2303 = vmatpush2.xpose.msra.mxu0 0.0
    %2304 = vmatprep.subr.mxu0 0.0
    %2305 = vmatpush2.xpose.msra.mxu0 0.0
    %2306 = vmatprep.subr.mxu0 0.0
    %2307 = vmatpush2.xpose.msra.mxu0 0.0
    %2308 = vmatprep.subr.mxu0 0.0
    %2309 = vmatpush2.xpose.msra.mxu0 0.0
    %2310 = vmatprep.subr.mxu0 0.0
    %2311 = vmatpush2.xpose.msra.mxu0 0.0
    %2312 = vmatprep.subr.mxu0 0.0
    %2313 = vmatpush2.xpose.msra.mxu0 0.0
    %2314 = vmatprep.subr.mxu0 0.0
    %2315 = vmatpush2.xpose.msra.mxu0 0.0
    %2316 = vmatprep.subr.mxu0 0.0
    %2317 = vmatpush2.xpose.msra.mxu0 0.0
    %2318 = vmatprep.subr.mxu0 0.0
    %2319 = vmatpush2.xpose.msra.mxu0 0.0
    %2320 = vmatprep.subr.mxu0 0.0
    %2321 = vmatpush2.xpose.msra.mxu0 0.0
    %2322 = vmatprep.subr.mxu0 0.0
    %2323 = vmatpush2.xpose.msra.mxu0 0.0
    %2324 = vmatprep.subr.mxu0 0.0
    %2325 = vmatpush2.xpose.msra.mxu0 0.0
    %2326 = vmatprep.subr.mxu0 0.0
    %2327 = vmatpush2.xpose.msra.mxu0 0.0
    %2328 = vmatprep.mubr.f32.mxu0 0.0
    %2329 = vmatmul.mubr.f32.gmra.mxu0 %v2259
    %v2330 = vpop.f32.mrf.mxu0
    %v2331 = vadd.f32 0.0, %v2330
    %v2332 = vpop.f32.mrf.mxu0
    %2333 = vdwg.mxu0
    %v2335 = vsel %vm1801, %v668, 0
    %v2338 = vsel %vm1801, %v1232, 0
    %2340 = vmatprep.subr.mxu0 0.0
    %2341 = vmatpush1.xpose.msra.mxu0 0.0
    %2342 = vmatprep.subr.mxu0 0.0
    %2343 = vmatpush1.xpose.msra.mxu0 0.0
    %2344 = vmatprep.subr.mxu0 0.0
    %2345 = vmatpush1.xpose.msra.mxu0 0.0
    %2346 = vmatprep.subr.mxu0 0.0
    %2347 = vmatpush1.xpose.msra.mxu0 0.0
    %2348 = vmatprep.subr.mxu0 0.0
    %2349 = vmatpush1.xpose.msra.mxu0 0.0
    %2350 = vmatprep.subr.mxu0 0.0
    %2351 = vmatpush1.xpose.msra.mxu0 0.0
    %2352 = vmatprep.subr.mxu0 0.0
    %2353 = vmatpush1.xpose.msra.mxu0 0.0
    %2354 = vmatprep.subr.mxu0 0.0
    %2355 = vmatpush1.xpose.msra.mxu0 0.0
    %2356 = vmatprep.subr.mxu0 0.0
    %2357 = vmatpush1.xpose.msra.mxu0 0.0
    %2358 = vmatprep.subr.mxu0 0.0
    %2359 = vmatpush1.xpose.msra.mxu0 0.0
    %2360 = vmatprep.subr.mxu0 0.0
    %2361 = vmatpush1.xpose.msra.mxu0 0.0
    %2362 = vmatprep.subr.mxu0 0.0
    %2363 = vmatpush1.xpose.msra.mxu0 0.0
    %2364 = vmatprep.subr.mxu0 0.0
    %2365 = vmatpush1.xpose.msra.mxu0 0.0
    %2366 = vmatprep.subr.mxu0 0.0
    %2367 = vmatpush1.xpose.msra.mxu0 0.0
    %2368 = vmatprep.subr.mxu0 0.0
    %2369 = vmatpush1.xpose.msra.mxu0 0.0
    %2370 = vmatprep.subr.mxu0 0.0
    %2371 = vmatpush1.xpose.msra.mxu0 %v2338
    %2372 = vmatprep.subr.mxu0 0.0
    %2373 = vmatpush2.xpose.msra.mxu0 0.0
    %2374 = vmatprep.subr.mxu0 0.0
    %2375 = vmatpush2.xpose.msra.mxu0 0.0
    %2376 = vmatprep.subr.mxu0 0.0
    %2377 = vmatpush2.xpose.msra.mxu0 0.0
    %2378 = vmatprep.subr.mxu0 0.0
    %2379 = vmatpush2.xpose.msra.mxu0 0.0
    %2380 = vmatprep.subr.mxu0 0.0
    %2381 = vmatpush2.xpose.msra.mxu0 0.0
    %2382 = vmatprep.subr.mxu0 0.0
    %2383 = vmatpush2.xpose.msra.mxu0 0.0
    %2384 = vmatprep.subr.mxu0 0.0
    %2385 = vmatpush2.xpose.msra.mxu0 0.0
    %2386 = vmatprep.subr.mxu0 0.0
    %2387 = vmatpush2.xpose.msra.mxu0 0.0
    %2388 = vmatprep.subr.mxu0 0.0
    %2389 = vmatpush2.xpose.msra.mxu0 0.0
    %2390 = vmatprep.subr.mxu0 0.0
    %2391 = vmatpush2.xpose.msra.mxu0 0.0
    %2392 = vmatprep.subr.mxu0 0.0
    %2393 = vmatpush2.xpose.msra.mxu0 0.0
    %2394 = vmatprep.subr.mxu0 0.0
    %2395 = vmatpush2.xpose.msra.mxu0 0.0
    %2396 = vmatprep.subr.mxu0 0.0
    %2397 = vmatpush2.xpose.msra.mxu0 0.0
    %2398 = vmatprep.subr.mxu0 0.0
    %2399 = vmatpush2.xpose.msra.mxu0 0.0
    %2400 = vmatprep.subr.mxu0 0.0
    %2401 = vmatpush2.xpose.msra.mxu0 0.0
    %2402 = vmatprep.subr.mxu0 0.0
    %2403 = vmatpush2.xpose.msra.mxu0 0.0
    %2404 = vmatprep.mubr.f32.mxu0 0.0
    %2405 = vmatmul.mubr.f32.gmra.mxu0 %v2335
    %v2406 = vpop.f32.mrf.mxu0
    %v2407 = vadd.f32 0.0, %v2406
    %v2408 = vpop.f32.mrf.mxu0
    %2409 = vdwg.mxu0
    %v2410 = vsel %vm1801, %v1875, -inf
    %2411 = vmax.xlane.f32.xlu0 %v2410
    %v2412 = vpop.xlane.xlu0 %2411
    %v2413 = vsel %vm1801, %v1951, -inf
    %2414 = vmax.xlane.f32.xlu0 %v2413
    %v2415 = vpop.xlane.xlu0 %2414
    %v2416 = vsel %vm1801, %v2027, -inf
    %2417 = vmax.xlane.f32.xlu0 %v2416
    %v2418 = vpop.xlane.xlu0 %2417
    %v2419 = vsel %vm1801, %v2103, -inf
    %2420 = vmax.xlane.f32.xlu0 %v2419
    %v2421 = vpop.xlane.xlu0 %2420
    %v2422 = vsel %vm1801, %v2179, -inf
    %2423 = vmax.xlane.f32.xlu0 %v2422
    %v2424 = vpop.xlane.xlu0 %2423
    %v2425 = vsel %vm1801, %v2255, -inf
    %2426 = vmax.xlane.f32.xlu0 %v2425
    %v2427 = vpop.xlane.xlu0 %2426
    %v2428 = vsel %vm1801, %v2331, -inf
    %2429 = vmax.xlane.f32.xlu0 %v2428
    %v2430 = vpop.xlane.xlu0 %2429
    %v2431 = vsel %vm1801, %v2407, -inf
    %2432 = vmax.xlane.f32.xlu0 %v2431
    %v2433 = vpop.xlane.xlu0 %2432
    %v2434 = vsub.f32 %v1875, %v2412
    %v2435 = vsub.f32 %v1951, %v2415
    %v2436 = vsub.f32 %v2027, %v2418
    %v2437 = vsub.f32 %v2103, %v2421
    %v2438 = vsub.f32 %v2179, %v2424
    %v2439 = vsub.f32 %v2255, %v2427
    %v2440 = vsub.f32 %v2331, %v2430
    %v2441 = vsub.f32 %v2407, %v2433
    %v2442 = vmul.f32 %v2434, 1.442695
    %v2443 = vpow.pop %v2442
    %v2444 = vmul.f32 %v2435, 1.442695
    %v2445 = vpow.pop %v2444
    %v2446 = vmul.f32 %v2436, 1.442695
    %v2447 = vpow.pop %v2446
    %v2448 = vmul.f32 %v2437, 1.442695
    %v2449 = vpow.pop %v2448
    %v2450 = vmul.f32 %v2438, 1.442695
    %v2451 = vpow.pop %v2450
    %v2452 = vmul.f32 %v2439, 1.442695
    %v2453 = vpow.pop %v2452
    %v2454 = vmul.f32 %v2440, 1.442695
    %v2455 = vpow.pop %v2454
    %v2456 = vmul.f32 %v2441, 1.442695
    %v2457 = vpow.pop %v2456
    %v2458 = vsel %vm1801, %v2443, 0.0
    %2459 = vadd.xlane.f32.xlu0 %v2458
    %v2460 = vpop.xlane.xlu0 %2459
    %v2461 = vsel %vm1801, %v2445, 0.0
    %2462 = vadd.xlane.f32.xlu0 %v2461
    %v2463 = vpop.xlane.xlu0 %2462
    %v2464 = vsel %vm1801, %v2447, 0.0
    %2465 = vadd.xlane.f32.xlu0 %v2464
    %v2466 = vpop.xlane.xlu0 %2465
    %v2467 = vsel %vm1801, %v2449, 0.0
    %2468 = vadd.xlane.f32.xlu0 %v2467
    %v2469 = vpop.xlane.xlu0 %2468
    %v2470 = vsel %vm1801, %v2451, 0.0
    %2471 = vadd.xlane.f32.xlu0 %v2470
    %v2472 = vpop.xlane.xlu0 %2471
    %v2473 = vsel %vm1801, %v2453, 0.0
    %2474 = vadd.xlane.f32.xlu0 %v2473
    %v2475 = vpop.xlane.xlu0 %2474
    %v2476 = vsel %vm1801, %v2455, 0.0
    %2477 = vadd.xlane.f32.xlu0 %v2476
    %v2478 = vpop.xlane.xlu0 %2477
    %v2479 = vsel %vm1801, %v2457, 0.0
    %2480 = vadd.xlane.f32.xlu0 %v2479
    %v2481 = vpop.xlane.xlu0 %2480
    %v2482 = vrcp.pop %v2460
    %v2483 = vmul.f32 %v2443, %v2482
    %v2484 = vrcp.pop %v2463
    %v2485 = vmul.f32 %v2445, %v2484
    %v2486 = vrcp.pop %v2466
    %v2487 = vmul.f32 %v2447, %v2486
    %v2488 = vrcp.pop %v2469
    %v2489 = vmul.f32 %v2449, %v2488
    %v2490 = vrcp.pop %v2472
    %v2491 = vmul.f32 %v2451, %v2490
    %v2492 = vrcp.pop %v2475
    %v2493 = vmul.f32 %v2453, %v2492
    %v2494 = vrcp.pop %v2478
    %v2495 = vmul.f32 %v2455, %v2494
    %v2496 = vrcp.pop %v2481
    %v2497 = vmul.f32 %v2457, %v2496
    %v2499 = vsel %vm1801, %v2483, 0
    %2501 = vmatprep.subr.mxu0 0.0
    %2502 = vmatpush1.msra.mxu0 0.0
    %2503 = vmatprep.subr.mxu0 0.0
    %2504 = vmatpush1.msra.mxu0 0.0
    %2505 = vmatprep.subr.mxu0 0.0
    %2506 = vmatpush1.msra.mxu0 0.0
    %2507 = vmatprep.subr.mxu0 0.0
    %2508 = vmatpush1.msra.mxu0 0.0
    %2509 = vmatprep.subr.mxu0 0.0
    %2510 = vmatpush1.msra.mxu0 0.0
    %2511 = vmatprep.subr.mxu0 0.0
    %2512 = vmatpush1.msra.mxu0 0.0
    %2513 = vmatprep.subr.mxu0 0.0
    %2514 = vmatpush1.msra.mxu0 0.0
    %2515 = vmatprep.subr.mxu0 0.0
    %2516 = vmatpush1.msra.mxu0 0.0
    %2517 = vmatprep.subr.mxu0 0.0
    %2518 = vmatpush1.msra.mxu0 0.0
    %2519 = vmatprep.subr.mxu0 0.0
    %2520 = vmatpush1.msra.mxu0 0.0
    %2521 = vmatprep.subr.mxu0 0.0
    %2522 = vmatpush1.msra.mxu0 0.0
    %2523 = vmatprep.subr.mxu0 0.0
    %2524 = vmatpush1.msra.mxu0 0.0
    %2525 = vmatprep.subr.mxu0 0.0
    %2526 = vmatpush1.msra.mxu0 0.0
    %2527 = vmatprep.subr.mxu0 0.0
    %2528 = vmatpush1.msra.mxu0 0.0
    %2529 = vmatprep.subr.mxu0 0.0
    %2530 = vmatpush1.msra.mxu0 0.0
    %2531 = vmatprep.subr.mxu0 0.0
    %2532 = vmatpush1.msra.mxu0 %v1305
    %2533 = vmatprep.subr.mxu0 0.0
    %2534 = vmatpush2.msra.mxu0 0.0
    %2535 = vmatprep.subr.mxu0 0.0
    %2536 = vmatpush2.msra.mxu0 0.0
    %2537 = vmatprep.subr.mxu0 0.0
    %2538 = vmatpush2.msra.mxu0 0.0
    %2539 = vmatprep.subr.mxu0 0.0
    %2540 = vmatpush2.msra.mxu0 0.0
    %2541 = vmatprep.subr.mxu0 0.0
    %2542 = vmatpush2.msra.mxu0 0.0
    %2543 = vmatprep.subr.mxu0 0.0
    %2544 = vmatpush2.msra.mxu0 0.0
    %2545 = vmatprep.subr.mxu0 0.0
    %2546 = vmatpush2.msra.mxu0 0.0
    %2547 = vmatprep.subr.mxu0 0.0
    %2548 = vmatpush2.msra.mxu0 0.0
    %2549 = vmatprep.subr.mxu0 0.0
    %2550 = vmatpush2.msra.mxu0 0.0
    %2551 = vmatprep.subr.mxu0 0.0
    %2552 = vmatpush2.msra.mxu0 0.0
    %2553 = vmatprep.subr.mxu0 0.0
    %2554 = vmatpush2.msra.mxu0 0.0
    %2555 = vmatprep.subr.mxu0 0.0
    %2556 = vmatpush2.msra.mxu0 0.0
    %2557 = vmatprep.subr.mxu0 0.0
    %2558 = vmatpush2.msra.mxu0 0.0
    %2559 = vmatprep.subr.mxu0 0.0
    %2560 = vmatpush2.msra.mxu0 0.0
    %2561 = vmatprep.subr.mxu0 0.0
    %2562 = vmatpush2.msra.mxu0 0.0
    %2563 = vmatprep.subr.mxu0 0.0
    %2564 = vmatpush2.msra.mxu0 0.0
    %2565 = vmatprep.mubr.f32.mxu0 0.0
    %2566 = vmatmul.mubr.f32.gmra.mxu0 %v2499
    %v2567 = vpop.f32.mrf.mxu0
    %v2568 = vadd.f32 0.0, %v2567
    %v2569 = vpop.f32.mrf.mxu0
    %2570 = vdwg.mxu0
    %v2572 = vsel %vm1801, %v2485, 0
    %2574 = vmatprep.subr.mxu0 0.0
    %2575 = vmatpush1.msra.mxu0 0.0
    %2576 = vmatprep.subr.mxu0 0.0
    %2577 = vmatpush1.msra.mxu0 0.0
    %2578 = vmatprep.subr.mxu0 0.0
    %2579 = vmatpush1.msra.mxu0 0.0
    %2580 = vmatprep.subr.mxu0 0.0
    %2581 = vmatpush1.msra.mxu0 0.0
    %2582 = vmatprep.subr.mxu0 0.0
    %2583 = vmatpush1.msra.mxu0 0.0
    %2584 = vmatprep.subr.mxu0 0.0
    %2585 = vmatpush1.msra.mxu0 0.0
    %2586 = vmatprep.subr.mxu0 0.0
    %2587 = vmatpush1.msra.mxu0 0.0
    %2588 = vmatprep.subr.mxu0 0.0
    %2589 = vmatpush1.msra.mxu0 0.0
    %2590 = vmatprep.subr.mxu0 0.0
    %2591 = vmatpush1.msra.mxu0 0.0
    %2592 = vmatprep.subr.mxu0 0.0
    %2593 = vmatpush1.msra.mxu0 0.0
    %2594 = vmatprep.subr.mxu0 0.0
    %2595 = vmatpush1.msra.mxu0 0.0
    %2596 = vmatprep.subr.mxu0 0.0
    %2597 = vmatpush1.msra.mxu0 0.0
    %2598 = vmatprep.subr.mxu0 0.0
    %2599 = vmatpush1.msra.mxu0 0.0
    %2600 = vmatprep.subr.mxu0 0.0
    %2601 = vmatpush1.msra.mxu0 0.0
    %2602 = vmatprep.subr.mxu0 0.0
    %2603 = vmatpush1.msra.mxu0 0.0
    %2604 = vmatprep.subr.mxu0 0.0
    %2605 = vmatpush1.msra.mxu0 %v1375
    %2606 = vmatprep.subr.mxu0 0.0
    %2607 = vmatpush2.msra.mxu0 0.0
    %2608 = vmatprep.subr.mxu0 0.0
    %2609 = vmatpush2.msra.mxu0 0.0
    %2610 = vmatprep.subr.mxu0 0.0
    %2611 = vmatpush2.msra.mxu0 0.0
    %2612 = vmatprep.subr.mxu0 0.0
    %2613 = vmatpush2.msra.mxu0 0.0
    %2614 = vmatprep.subr.mxu0 0.0
    %2615 = vmatpush2.msra.mxu0 0.0
    %2616 = vmatprep.subr.mxu0 0.0
    %2617 = vmatpush2.msra.mxu0 0.0
    %2618 = vmatprep.subr.mxu0 0.0
    %2619 = vmatpush2.msra.mxu0 0.0
    %2620 = vmatprep.subr.mxu0 0.0
    %2621 = vmatpush2.msra.mxu0 0.0
    %2622 = vmatprep.subr.mxu0 0.0
    %2623 = vmatpush2.msra.mxu0 0.0
    %2624 = vmatprep.subr.mxu0 0.0
    %2625 = vmatpush2.msra.mxu0 0.0
    %2626 = vmatprep.subr.mxu0 0.0
    %2627 = vmatpush2.msra.mxu0 0.0
    %2628 = vmatprep.subr.mxu0 0.0
    %2629 = vmatpush2.msra.mxu0 0.0
    %2630 = vmatprep.subr.mxu0 0.0
    %2631 = vmatpush2.msra.mxu0 0.0
    %2632 = vmatprep.subr.mxu0 0.0
    %2633 = vmatpush2.msra.mxu0 0.0
    %2634 = vmatprep.subr.mxu0 0.0
    %2635 = vmatpush2.msra.mxu0 0.0
    %2636 = vmatprep.subr.mxu0 0.0
    %2637 = vmatpush2.msra.mxu0 0.0
    %2638 = vmatprep.mubr.f32.mxu0 0.0
    %2639 = vmatmul.mubr.f32.gmra.mxu0 %v2572
    %v2640 = vpop.f32.mrf.mxu0
    %v2641 = vadd.f32 0.0, %v2640
    %v2642 = vpop.f32.mrf.mxu0
    %2643 = vdwg.mxu0
    %v2645 = vsel %vm1801, %v2487, 0
    %2647 = vmatprep.subr.mxu0 0.0
    %2648 = vmatpush1.msra.mxu0 0.0
    %2649 = vmatprep.subr.mxu0 0.0
    %2650 = vmatpush1.msra.mxu0 0.0
    %2651 = vmatprep.subr.mxu0 0.0
    %2652 = vmatpush1.msra.mxu0 0.0
    %2653 = vmatprep.subr.mxu0 0.0
    %2654 = vmatpush1.msra.mxu0 0.0
    %2655 = vmatprep.subr.mxu0 0.0
    %2656 = vmatpush1.msra.mxu0 0.0
    %2657 = vmatprep.subr.mxu0 0.0
    %2658 = vmatpush1.msra.mxu0 0.0
    %2659 = vmatprep.subr.mxu0 0.0
    %2660 = vmatpush1.msra.mxu0 0.0
    %2661 = vmatprep.subr.mxu0 0.0
    %2662 = vmatpush1.msra.mxu0 0.0
    %2663 = vmatprep.subr.mxu0 0.0
    %2664 = vmatpush1.msra.mxu0 0.0
    %2665 = vmatprep.subr.mxu0 0.0
    %2666 = vmatpush1.msra.mxu0 0.0
    %2667 = vmatprep.subr.mxu0 0.0
    %2668 = vmatpush1.msra.mxu0 0.0
    %2669 = vmatprep.subr.mxu0 0.0
    %2670 = vmatpush1.msra.mxu0 0.0
    %2671 = vmatprep.subr.mxu0 0.0
    %2672 = vmatpush1.msra.mxu0 0.0
    %2673 = vmatprep.subr.mxu0 0.0
    %2674 = vmatpush1.msra.mxu0 0.0
    %2675 = vmatprep.subr.mxu0 0.0
    %2676 = vmatpush1.msra.mxu0 0.0
    %2677 = vmatprep.subr.mxu0 0.0
    %2678 = vmatpush1.msra.mxu0 %v1445
    %2679 = vmatprep.subr.mxu0 0.0
    %2680 = vmatpush2.msra.mxu0 0.0
    %2681 = vmatprep.subr.mxu0 0.0
    %2682 = vmatpush2.msra.mxu0 0.0
    %2683 = vmatprep.subr.mxu0 0.0
    %2684 = vmatpush2.msra.mxu0 0.0
    %2685 = vmatprep.subr.mxu0 0.0
    %2686 = vmatpush2.msra.mxu0 0.0
    %2687 = vmatprep.subr.mxu0 0.0
    %2688 = vmatpush2.msra.mxu0 0.0
    %2689 = vmatprep.subr.mxu0 0.0
    %2690 = vmatpush2.msra.mxu0 0.0
    %2691 = vmatprep.subr.mxu0 0.0
    %2692 = vmatpush2.msra.mxu0 0.0
    %2693 = vmatprep.subr.mxu0 0.0
    %2694 = vmatpush2.msra.mxu0 0.0
    %2695 = vmatprep.subr.mxu0 0.0
    %2696 = vmatpush2.msra.mxu0 0.0
    %2697 = vmatprep.subr.mxu0 0.0
    %2698 = vmatpush2.msra.mxu0 0.0
    %2699 = vmatprep.subr.mxu0 0.0
    %2700 = vmatpush2.msra.mxu0 0.0
    %2701 = vmatprep.subr.mxu0 0.0
    %2702 = vmatpush2.msra.mxu0 0.0
    %2703 = vmatprep.subr.mxu0 0.0
    %2704 = vmatpush2.msra.mxu0 0.0
    %2705 = vmatprep.subr.mxu0 0.0
    %2706 = vmatpush2.msra.mxu0 0.0
    %2707 = vmatprep.subr.mxu0 0.0
    %2708 = vmatpush2.msra.mxu0 0.0
    %2709 = vmatprep.subr.mxu0 0.0
    %2710 = vmatpush2.msra.mxu0 0.0
    %2711 = vmatprep.mubr.f32.mxu0 0.0
    %2712 = vmatmul.mubr.f32.gmra.mxu0 %v2645
    %v2713 = vpop.f32.mrf.mxu0
    %v2714 = vadd.f32 0.0, %v2713
    %v2715 = vpop.f32.mrf.mxu0
    %2716 = vdwg.mxu0
    %v2718 = vsel %vm1801, %v2489, 0
    %2720 = vmatprep.subr.mxu0 0.0
    %2721 = vmatpush1.msra.mxu0 0.0
    %2722 = vmatprep.subr.mxu0 0.0
    %2723 = vmatpush1.msra.mxu0 0.0
    %2724 = vmatprep.subr.mxu0 0.0
    %2725 = vmatpush1.msra.mxu0 0.0
    %2726 = vmatprep.subr.mxu0 0.0
    %2727 = vmatpush1.msra.mxu0 0.0
    %2728 = vmatprep.subr.mxu0 0.0
    %2729 = vmatpush1.msra.mxu0 0.0
    %2730 = vmatprep.subr.mxu0 0.0
    %2731 = vmatpush1.msra.mxu0 0.0
    %2732 = vmatprep.subr.mxu0 0.0
    %2733 = vmatpush1.msra.mxu0 0.0
    %2734 = vmatprep.subr.mxu0 0.0
    %2735 = vmatpush1.msra.mxu0 0.0
    %2736 = vmatprep.subr.mxu0 0.0
    %2737 = vmatpush1.msra.mxu0 0.0
    %2738 = vmatprep.subr.mxu0 0.0
    %2739 = vmatpush1.msra.mxu0 0.0
    %2740 = vmatprep.subr.mxu0 0.0
    %2741 = vmatpush1.msra.mxu0 0.0
    %2742 = vmatprep.subr.mxu0 0.0
    %2743 = vmatpush1.msra.mxu0 0.0
    %2744 = vmatprep.subr.mxu0 0.0
    %2745 = vmatpush1.msra.mxu0 0.0
    %2746 = vmatprep.subr.mxu0 0.0
    %2747 = vmatpush1.msra.mxu0 0.0
    %2748 = vmatprep.subr.mxu0 0.0
    %2749 = vmatpush1.msra.mxu0 0.0
    %2750 = vmatprep.subr.mxu0 0.0
    %2751 = vmatpush1.msra.mxu0 %v1515
    %2752 = vmatprep.subr.mxu0 0.0
    %2753 = vmatpush2.msra.mxu0 0.0
    %2754 = vmatprep.subr.mxu0 0.0
    %2755 = vmatpush2.msra.mxu0 0.0
    %2756 = vmatprep.subr.mxu0 0.0
    %2757 = vmatpush2.msra.mxu0 0.0
    %2758 = vmatprep.subr.mxu0 0.0
    %2759 = vmatpush2.msra.mxu0 0.0
    %2760 = vmatprep.subr.mxu0 0.0
    %2761 = vmatpush2.msra.mxu0 0.0
    %2762 = vmatprep.subr.mxu0 0.0
    %2763 = vmatpush2.msra.mxu0 0.0
    %2764 = vmatprep.subr.mxu0 0.0
    %2765 = vmatpush2.msra.mxu0 0.0
    %2766 = vmatprep.subr.mxu0 0.0
    %2767 = vmatpush2.msra.mxu0 0.0
    %2768 = vmatprep.subr.mxu0 0.0
    %2769 = vmatpush2.msra.mxu0 0.0
    %2770 = vmatprep.subr.mxu0 0.0
    %2771 = vmatpush2.msra.mxu0 0.0
    %2772 = vmatprep.subr.mxu0 0.0
    %2773 = vmatpush2.msra.mxu0 0.0
    %2774 = vmatprep.subr.mxu0 0.0
    %2775 = vmatpush2.msra.mxu0 0.0
    %2776 = vmatprep.subr.mxu0 0.0
    %2777 = vmatpush2.msra.mxu0 0.0
    %2778 = vmatprep.subr.mxu0 0.0
    %2779 = vmatpush2.msra.mxu0 0.0
    %2780 = vmatprep.subr.mxu0 0.0
    %2781 = vmatpush2.msra.mxu0 0.0
    %2782 = vmatprep.subr.mxu0 0.0
    %2783 = vmatpush2.msra.mxu0 0.0
    %2784 = vmatprep.mubr.f32.mxu0 0.0
    %2785 = vmatmul.mubr.f32.gmra.mxu0 %v2718
    %v2786 = vpop.f32.mrf.mxu0
    %v2787 = vadd.f32 0.0, %v2786
    %v2788 = vpop.f32.mrf.mxu0
    %2789 = vdwg.mxu0
    %v2791 = vsel %vm1801, %v2491, 0
    %2793 = vmatprep.subr.mxu0 0.0
    %2794 = vmatpush1.msra.mxu0 0.0
    %2795 = vmatprep.subr.mxu0 0.0
    %2796 = vmatpush1.msra.mxu0 0.0
    %2797 = vmatprep.subr.mxu0 0.0
    %2798 = vmatpush1.msra.mxu0 0.0
    %2799 = vmatprep.subr.mxu0 0.0
    %2800 = vmatpush1.msra.mxu0 0.0
    %2801 = vmatprep.subr.mxu0 0.0
    %2802 = vmatpush1.msra.mxu0 0.0
    %2803 = vmatprep.subr.mxu0 0.0
    %2804 = vmatpush1.msra.mxu0 0.0
    %2805 = vmatprep.subr.mxu0 0.0
    %2806 = vmatpush1.msra.mxu0 0.0
    %2807 = vmatprep.subr.mxu0 0.0
    %2808 = vmatpush1.msra.mxu0 0.0
    %2809 = vmatprep.subr.mxu0 0.0
    %2810 = vmatpush1.msra.mxu0 0.0
    %2811 = vmatprep.subr.mxu0 0.0
    %2812 = vmatpush1.msra.mxu0 0.0
    %2813 = vmatprep.subr.mxu0 0.0
    %2814 = vmatpush1.msra.mxu0 0.0
    %2815 = vmatprep.subr.mxu0 0.0
    %2816 = vmatpush1.msra.mxu0 0.0
    %2817 = vmatprep.subr.mxu0 0.0
    %2818 = vmatpush1.msra.mxu0 0.0
    %2819 = vmatprep.subr.mxu0 0.0
    %2820 = vmatpush1.msra.mxu0 0.0
    %2821 = vmatprep.subr.mxu0 0.0
    %2822 = vmatpush1.msra.mxu0 0.0
    %2823 = vmatprep.subr.mxu0 0.0
    %2824 = vmatpush1.msra.mxu0 %v1588
    %2825 = vmatprep.subr.mxu0 0.0
    %2826 = vmatpush2.msra.mxu0 0.0
    %2827 = vmatprep.subr.mxu0 0.0
    %2828 = vmatpush2.msra.mxu0 0.0
    %2829 = vmatprep.subr.mxu0 0.0
    %2830 = vmatpush2.msra.mxu0 0.0
    %2831 = vmatprep.subr.mxu0 0.0
    %2832 = vmatpush2.msra.mxu0 0.0
    %2833 = vmatprep.subr.mxu0 0.0
    %2834 = vmatpush2.msra.mxu0 0.0
    %2835 = vmatprep.subr.mxu0 0.0
    %2836 = vmatpush2.msra.mxu0 0.0
    %2837 = vmatprep.subr.mxu0 0.0
    %2838 = vmatpush2.msra.mxu0 0.0
    %2839 = vmatprep.subr.mxu0 0.0
    %2840 = vmatpush2.msra.mxu0 0.0
    %2841 = vmatprep.subr.mxu0 0.0
    %2842 = vmatpush2.msra.mxu0 0.0
    %2843 = vmatprep.subr.mxu0 0.0
    %2844 = vmatpush2.msra.mxu0 0.0
    %2845 = vmatprep.subr.mxu0 0.0
    %2846 = vmatpush2.msra.mxu0 0.0
    %2847 = vmatprep.subr.mxu0 0.0
    %2848 = vmatpush2.msra.mxu0 0.0
    %2849 = vmatprep.subr.mxu0 0.0
    %2850 = vmatpush2.msra.mxu0 0.0
    %2851 = vmatprep.subr.mxu0 0.0
    %2852 = vmatpush2.msra.mxu0 0.0
    %2853 = vmatprep.subr.mxu0 0.0
    %2854 = vmatpush2.msra.mxu0 0.0
    %2855 = vmatprep.subr.mxu0 0.0
    %2856 = vmatpush2.msra.mxu0 0.0
    %2857 = vmatprep.mubr.f32.mxu0 0.0
    %2858 = vmatmul.mubr.f32.gmra.mxu0 %v2791
    %v2859 = vpop.f32.mrf.mxu0
    %v2860 = vadd.f32 0.0, %v2859
    %v2861 = vpop.f32.mrf.mxu0
    %2862 = vdwg.mxu0
    %v2864 = vsel %vm1801, %v2493, 0
    %2866 = vmatprep.subr.mxu0 0.0
    %2867 = vmatpush1.msra.mxu0 0.0
    %2868 = vmatprep.subr.mxu0 0.0
    %2869 = vmatpush1.msra.mxu0 0.0
    %2870 = vmatprep.subr.mxu0 0.0
    %2871 = vmatpush1.msra.mxu0 0.0
    %2872 = vmatprep.subr.mxu0 0.0
    %2873 = vmatpush1.msra.mxu0 0.0
    %2874 = vmatprep.subr.mxu0 0.0
    %2875 = vmatpush1.msra.mxu0 0.0
    %2876 = vmatprep.subr.mxu0 0.0
    %2877 = vmatpush1.msra.mxu0 0.0
    %2878 = vmatprep.subr.mxu0 0.0
    %2879 = vmatpush1.msra.mxu0 0.0
    %2880 = vmatprep.subr.mxu0 0.0
    %2881 = vmatpush1.msra.mxu0 0.0
    %2882 = vmatprep.subr.mxu0 0.0
    %2883 = vmatpush1.msra.mxu0 0.0
    %2884 = vmatprep.subr.mxu0 0.0
    %2885 = vmatpush1.msra.mxu0 0.0
    %2886 = vmatprep.subr.mxu0 0.0
    %2887 = vmatpush1.msra.mxu0 0.0
    %2888 = vmatprep.subr.mxu0 0.0
    %2889 = vmatpush1.msra.mxu0 0.0
    %2890 = vmatprep.subr.mxu0 0.0
    %2891 = vmatpush1.msra.mxu0 0.0
    %2892 = vmatprep.subr.mxu0 0.0
    %2893 = vmatpush1.msra.mxu0 0.0
    %2894 = vmatprep.subr.mxu0 0.0
    %2895 = vmatpush1.msra.mxu0 0.0
    %2896 = vmatprep.subr.mxu0 0.0
    %2897 = vmatpush1.msra.mxu0 %v1658
    %2898 = vmatprep.subr.mxu0 0.0
    %2899 = vmatpush2.msra.mxu0 0.0
    %2900 = vmatprep.subr.mxu0 0.0
    %2901 = vmatpush2.msra.mxu0 0.0
    %2902 = vmatprep.subr.mxu0 0.0
    %2903 = vmatpush2.msra.mxu0 0.0
    %2904 = vmatprep.subr.mxu0 0.0
    %2905 = vmatpush2.msra.mxu0 0.0
    %2906 = vmatprep.subr.mxu0 0.0
    %2907 = vmatpush2.msra.mxu0 0.0
    %2908 = vmatprep.subr.mxu0 0.0
    %2909 = vmatpush2.msra.mxu0 0.0
    %2910 = vmatprep.subr.mxu0 0.0
    %2911 = vmatpush2.msra.mxu0 0.0
    %2912 = vmatprep.subr.mxu0 0.0
    %2913 = vmatpush2.msra.mxu0 0.0
    %2914 = vmatprep.subr.mxu0 0.0
    %2915 = vmatpush2.msra.mxu0 0.0
    %2916 = vmatprep.subr.mxu0 0.0
    %2917 = vmatpush2.msra.mxu0 0.0
    %2918 = vmatprep.subr.mxu0 0.0
    %2919 = vmatpush2.msra.mxu0 0.0
    %2920 = vmatprep.subr.mxu0 0.0
    %2921 = vmatpush2.msra.mxu0 0.0
    %2922 = vmatprep.subr.mxu0 0.0
    %2923 = vmatpush2.msra.mxu0 0.0
    %2924 = vmatprep.subr.mxu0 0.0
    %2925 = vmatpush2.msra.mxu0 0.0
    %2926 = vmatprep.subr.mxu0 0.0
    %2927 = vmatpush2.msra.mxu0 0.0
    %2928 = vmatprep.subr.mxu0 0.0
    %2929 = vmatpush2.msra.mxu0 0.0
    %2930 = vmatprep.mubr.f32.mxu0 0.0
    %2931 = vmatmul.mubr.f32.gmra.mxu0 %v2864
    %v2932 = vpop.f32.mrf.mxu0
    %v2933 = vadd.f32 0.0, %v2932
    %v2934 = vpop.f32.mrf.mxu0
    %2935 = vdwg.mxu0
    %v2937 = vsel %vm1801, %v2495, 0
    %2939 = vmatprep.subr.mxu0 0.0
    %2940 = vmatpush1.msra.mxu0 0.0
    %2941 = vmatprep.subr.mxu0 0.0
    %2942 = vmatpush1.msra.mxu0 0.0
    %2943 = vmatprep.subr.mxu0 0.0
    %2944 = vmatpush1.msra.mxu0 0.0
    %2945 = vmatprep.subr.mxu0 0.0
    %2946 = vmatpush1.msra.mxu0 0.0
    %2947 = vmatprep.subr.mxu0 0.0
    %2948 = vmatpush1.msra.mxu0 0.0
    %2949 = vmatprep.subr.mxu0 0.0
    %2950 = vmatpush1.msra.mxu0 0.0
    %2951 = vmatprep.subr.mxu0 0.0
    %2952 = vmatpush1.msra.mxu0 0.0
    %2953 = vmatprep.subr.mxu0 0.0
    %2954 = vmatpush1.msra.mxu0 0.0
    %2955 = vmatprep.subr.mxu0 0.0
    %2956 = vmatpush1.msra.mxu0 0.0
    %2957 = vmatprep.subr.mxu0 0.0
    %2958 = vmatpush1.msra.mxu0 0.0
    %2959 = vmatprep.subr.mxu0 0.0
    %2960 = vmatpush1.msra.mxu0 0.0
    %2961 = vmatprep.subr.mxu0 0.0
    %2962 = vmatpush1.msra.mxu0 0.0
    %2963 = vmatprep.subr.mxu0 0.0
    %2964 = vmatpush1.msra.mxu0 0.0
    %2965 = vmatprep.subr.mxu0 0.0
    %2966 = vmatpush1.msra.mxu0 0.0
    %2967 = vmatprep.subr.mxu0 0.0
    %2968 = vmatpush1.msra.mxu0 0.0
    %2969 = vmatprep.subr.mxu0 0.0
    %2970 = vmatpush1.msra.mxu0 %v1728
    %2971 = vmatprep.subr.mxu0 0.0
    %2972 = vmatpush2.msra.mxu0 0.0
    %2973 = vmatprep.subr.mxu0 0.0
    %2974 = vmatpush2.msra.mxu0 0.0
    %2975 = vmatprep.subr.mxu0 0.0
    %2976 = vmatpush2.msra.mxu0 0.0
    %2977 = vmatprep.subr.mxu0 0.0
    %2978 = vmatpush2.msra.mxu0 0.0
    %2979 = vmatprep.subr.mxu0 0.0
    %2980 = vmatpush2.msra.mxu0 0.0
    %2981 = vmatprep.subr.mxu0 0.0
    %2982 = vmatpush2.msra.mxu0 0.0
    %2983 = vmatprep.subr.mxu0 0.0
    %2984 = vmatpush2.msra.mxu0 0.0
    %2985 = vmatprep.subr.mxu0 0.0
    %2986 = vmatpush2.msra.mxu0 0.0
    %2987 = vmatprep.subr.mxu0 0.0
    %2988 = vmatpush2.msra.mxu0 0.0
    %2989 = vmatprep.subr.mxu0 0.0
    %2990 = vmatpush2.msra.mxu0 0.0
    %2991 = vmatprep.subr.mxu0 0.0
    %2992 = vmatpush2.msra.mxu0 0.0
    %2993 = vmatprep.subr.mxu0 0.0
    %2994 = vmatpush2.msra.mxu0 0.0
    %2995 = vmatprep.subr.mxu0 0.0
    %2996 = vmatpush2.msra.mxu0 0.0
    %2997 = vmatprep.subr.mxu0 0.0
    %2998 = vmatpush2.msra.mxu0 0.0
    %2999 = vmatprep.subr.mxu0 0.0
    %3000 = vmatpush2.msra.mxu0 0.0
    %3001 = vmatprep.subr.mxu0 0.0
    %3002 = vmatpush2.msra.mxu0 0.0
    %3003 = vmatprep.mubr.f32.mxu0 0.0
    %3004 = vmatmul.mubr.f32.gmra.mxu0 %v2937
    %v3005 = vpop.f32.mrf.mxu0
    %v3006 = vadd.f32 0.0, %v3005
    %v3007 = vpop.f32.mrf.mxu0
    %3008 = vdwg.mxu0
    %v3010 = vsel %vm1801, %v2497, 0
    %3012 = vmatprep.subr.mxu0 0.0
    %3013 = vmatpush1.msra.mxu0 0.0
    %3014 = vmatprep.subr.mxu0 0.0
    %3015 = vmatpush1.msra.mxu0 0.0
    %3016 = vmatprep.subr.mxu0 0.0
    %3017 = vmatpush1.msra.mxu0 0.0
    %3018 = vmatprep.subr.mxu0 0.0
    %3019 = vmatpush1.msra.mxu0 0.0
    %3020 = vmatprep.subr.mxu0 0.0
    %3021 = vmatpush1.msra.mxu0 0.0
    %3022 = vmatprep.subr.mxu0 0.0
    %3023 = vmatpush1.msra.mxu0 0.0
    %3024 = vmatprep.subr.mxu0 0.0
    %3025 = vmatpush1.msra.mxu0 0.0
    %3026 = vmatprep.subr.mxu0 0.0
    %3027 = vmatpush1.msra.mxu0 0.0
    %3028 = vmatprep.subr.mxu0 0.0
    %3029 = vmatpush1.msra.mxu0 0.0
    %3030 = vmatprep.subr.mxu0 0.0
    %3031 = vmatpush1.msra.mxu0 0.0
    %3032 = vmatprep.subr.mxu0 0.0
    %3033 = vmatpush1.msra.mxu0 0.0
    %3034 = vmatprep.subr.mxu0 0.0
    %3035 = vmatpush1.msra.mxu0 0.0
    %3036 = vmatprep.subr.mxu0 0.0
    %3037 = vmatpush1.msra.mxu0 0.0
    %3038 = vmatprep.subr.mxu0 0.0
    %3039 = vmatpush1.msra.mxu0 0.0
    %3040 = vmatprep.subr.mxu0 0.0
    %3041 = vmatpush1.msra.mxu0 0.0
    %3042 = vmatprep.subr.mxu0 0.0
    %3043 = vmatpush1.msra.mxu0 %v1798
    %3044 = vmatprep.subr.mxu0 0.0
    %3045 = vmatpush2.msra.mxu0 0.0
    %3046 = vmatprep.subr.mxu0 0.0
    %3047 = vmatpush2.msra.mxu0 0.0
    %3048 = vmatprep.subr.mxu0 0.0
    %3049 = vmatpush2.msra.mxu0 0.0
    %3050 = vmatprep.subr.mxu0 0.0
    %3051 = vmatpush2.msra.mxu0 0.0
    %3052 = vmatprep.subr.mxu0 0.0
    %3053 = vmatpush2.msra.mxu0 0.0
    %3054 = vmatprep.subr.mxu0 0.0
    %3055 = vmatpush2.msra.mxu0 0.0
    %3056 = vmatprep.subr.mxu0 0.0
    %3057 = vmatpush2.msra.mxu0 0.0
    %3058 = vmatprep.subr.mxu0 0.0
    %3059 = vmatpush2.msra.mxu0 0.0
    %3060 = vmatprep.subr.mxu0 0.0
    %3061 = vmatpush2.msra.mxu0 0.0
    %3062 = vmatprep.subr.mxu0 0.0
    %3063 = vmatpush2.msra.mxu0 0.0
    %3064 = vmatprep.subr.mxu0 0.0
    %3065 = vmatpush2.msra.mxu0 0.0
    %3066 = vmatprep.subr.mxu0 0.0
    %3067 = vmatpush2.msra.mxu0 0.0
    %3068 = vmatprep.subr.mxu0 0.0
    %3069 = vmatpush2.msra.mxu0 0.0
    %3070 = vmatprep.subr.mxu0 0.0
    %3071 = vmatpush2.msra.mxu0 0.0
    %3072 = vmatprep.subr.mxu0 0.0
    %3073 = vmatpush2.msra.mxu0 0.0
    %3074 = vmatprep.subr.mxu0 0.0
    %3075 = vmatpush2.msra.mxu0 0.0
    %3076 = vmatprep.mubr.f32.mxu0 0.0
    %3077 = vmatmul.mubr.f32.gmra.mxu0 %v3010
    %v3078 = vpop.f32.mrf.mxu0
    %v3079 = vadd.f32 0.0, %v3078
    %v3080 = vpop.f32.mrf.mxu0
    %3081 = vdwg.mxu0
    %v3083 = vsel %vm1801, %v2568, 0
    %v3086 = vsel %vm1801, %v78, 0
    %v3089 = vsel %vm1801, %v79, 0
    %v3092 = vsel %vm1801, %v80, 0
    %v3095 = vsel %vm1801, %v81, 0
    %3097 = vmatprep.subr.mxu0 0.0
    %3098 = vmatpush1.xpose.msra.mxu0 0.0
    %3099 = vmatprep.subr.mxu0 0.0
    %3100 = vmatpush1.xpose.msra.mxu0 0.0
    %3101 = vmatprep.subr.mxu0 0.0
    %3102 = vmatpush1.xpose.msra.mxu0 0.0
    %3103 = vmatprep.subr.mxu0 0.0
    %3104 = vmatpush1.xpose.msra.mxu0 0.0
    %3105 = vmatprep.subr.mxu0 0.0
    %3106 = vmatpush1.xpose.msra.mxu0 0.0
    %3107 = vmatprep.subr.mxu0 0.0
    %3108 = vmatpush1.xpose.msra.mxu0 0.0
    %3109 = vmatprep.subr.mxu0 0.0
    %3110 = vmatpush1.xpose.msra.mxu0 0.0
    %3111 = vmatprep.subr.mxu0 0.0
    %3112 = vmatpush1.xpose.msra.mxu0 0.0
    %3113 = vmatprep.subr.mxu0 0.0
    %3114 = vmatpush1.xpose.msra.mxu0 0.0
    %3115 = vmatprep.subr.mxu0 0.0
    %3116 = vmatpush1.xpose.msra.mxu0 0.0
    %3117 = vmatprep.subr.mxu0 0.0
    %3118 = vmatpush1.xpose.msra.mxu0 0.0
    %3119 = vmatprep.subr.mxu0 0.0
    %3120 = vmatpush1.xpose.msra.mxu0 0.0
    %3121 = vmatprep.subr.mxu0 0.0
    %3122 = vmatpush1.xpose.msra.mxu0 %v3095
    %3123 = vmatprep.subr.mxu0 0.0
    %3124 = vmatpush1.xpose.msra.mxu0 %v3092
    %3125 = vmatprep.subr.mxu0 0.0
    %3126 = vmatpush1.xpose.msra.mxu0 %v3089
    %3127 = vmatprep.subr.mxu0 0.0
    %3128 = vmatpush1.xpose.msra.mxu0 %v3086
    %3129 = vmatprep.subr.mxu0 0.0
    %3130 = vmatpush2.xpose.msra.mxu0 0.0
    %3131 = vmatprep.subr.mxu0 0.0
    %3132 = vmatpush2.xpose.msra.mxu0 0.0
    %3133 = vmatprep.subr.mxu0 0.0
    %3134 = vmatpush2.xpose.msra.mxu0 0.0
    %3135 = vmatprep.subr.mxu0 0.0
    %3136 = vmatpush2.xpose.msra.mxu0 0.0
    %3137 = vmatprep.subr.mxu0 0.0
    %3138 = vmatpush2.xpose.msra.mxu0 0.0
    %3139 = vmatprep.subr.mxu0 0.0
    %3140 = vmatpush2.xpose.msra.mxu0 0.0
    %3141 = vmatprep.subr.mxu0 0.0
    %3142 = vmatpush2.xpose.msra.mxu0 0.0
    %3143 = vmatprep.subr.mxu0 0.0
    %3144 = vmatpush2.xpose.msra.mxu0 0.0
    %3145 = vmatprep.subr.mxu0 0.0
    %3146 = vmatpush2.xpose.msra.mxu0 0.0
    %3147 = vmatprep.subr.mxu0 0.0
    %3148 = vmatpush2.xpose.msra.mxu0 0.0
    %3149 = vmatprep.subr.mxu0 0.0
    %3150 = vmatpush2.xpose.msra.mxu0 0.0
    %3151 = vmatprep.subr.mxu0 0.0
    %3152 = vmatpush2.xpose.msra.mxu0 0.0
    %3153 = vmatprep.subr.mxu0 0.0
    %3154 = vmatpush2.xpose.msra.mxu0 0.0
    %3155 = vmatprep.subr.mxu0 0.0
    %3156 = vmatpush2.xpose.msra.mxu0 0.0
    %3157 = vmatprep.subr.mxu0 0.0
    %3158 = vmatpush2.xpose.msra.mxu0 0.0
    %3159 = vmatprep.subr.mxu0 0.0
    %3160 = vmatpush2.xpose.msra.mxu0 0.0
    %3161 = vmatprep.mubr.f32.mxu0 0.0
    %3162 = vmatmul.mubr.f32.gmra.mxu0 %v3083
    %v3163 = vpop.f32.mrf.mxu0
    %v3164 = vadd.f32 0.0, %v3163
    %v3165 = vpop.f32.mrf.mxu0
    %3166 = vdwg.mxu0
    %v3168 = vsel %vm1801, %v2641, 0
    %v3171 = vsel %vm1801, %v82, 0
    %v3174 = vsel %vm1801, %v83, 0
    %v3177 = vsel %vm1801, %v84, 0
    %v3180 = vsel %vm1801, %v85, 0
    %3182 = vmatprep.subr.mxu0 0.0
    %3183 = vmatpush1.xpose.msra.mxu0 0.0
    %3184 = vmatprep.subr.mxu0 0.0
    %3185 = vmatpush1.xpose.msra.mxu0 0.0
    %3186 = vmatprep.subr.mxu0 0.0
    %3187 = vmatpush1.xpose.msra.mxu0 0.0
    %3188 = vmatprep.subr.mxu0 0.0
    %3189 = vmatpush1.xpose.msra.mxu0 0.0
    %3190 = vmatprep.subr.mxu0 0.0
    %3191 = vmatpush1.xpose.msra.mxu0 0.0
    %3192 = vmatprep.subr.mxu0 0.0
    %3193 = vmatpush1.xpose.msra.mxu0 0.0
    %3194 = vmatprep.subr.mxu0 0.0
    %3195 = vmatpush1.xpose.msra.mxu0 0.0
    %3196 = vmatprep.subr.mxu0 0.0
    %3197 = vmatpush1.xpose.msra.mxu0 0.0
    %3198 = vmatprep.subr.mxu0 0.0
    %3199 = vmatpush1.xpose.msra.mxu0 0.0
    %3200 = vmatprep.subr.mxu0 0.0
    %3201 = vmatpush1.xpose.msra.mxu0 0.0
    %3202 = vmatprep.subr.mxu0 0.0
    %3203 = vmatpush1.xpose.msra.mxu0 0.0
    %3204 = vmatprep.subr.mxu0 0.0
    %3205 = vmatpush1.xpose.msra.mxu0 0.0
    %3206 = vmatprep.subr.mxu0 0.0
    %3207 = vmatpush1.xpose.msra.mxu0 %v3180
    %3208 = vmatprep.subr.mxu0 0.0
    %3209 = vmatpush1.xpose.msra.mxu0 %v3177
    %3210 = vmatprep.subr.mxu0 0.0
    %3211 = vmatpush1.xpose.msra.mxu0 %v3174
    %3212 = vmatprep.subr.mxu0 0.0
    %3213 = vmatpush1.xpose.msra.mxu0 %v3171
    %3214 = vmatprep.subr.mxu0 0.0
    %3215 = vmatpush2.xpose.msra.mxu0 0.0
    %3216 = vmatprep.subr.mxu0 0.0
    %3217 = vmatpush2.xpose.msra.mxu0 0.0
    %3218 = vmatprep.subr.mxu0 0.0
    %3219 = vmatpush2.xpose.msra.mxu0 0.0
    %3220 = vmatprep.subr.mxu0 0.0
    %3221 = vmatpush2.xpose.msra.mxu0 0.0
    %3222 = vmatprep.subr.mxu0 0.0
    %3223 = vmatpush2.xpose.msra.mxu0 0.0
    %3224 = vmatprep.subr.mxu0 0.0
    %3225 = vmatpush2.xpose.msra.mxu0 0.0
    %3226 = vmatprep.subr.mxu0 0.0
    %3227 = vmatpush2.xpose.msra.mxu0 0.0
    %3228 = vmatprep.subr.mxu0 0.0
    %3229 = vmatpush2.xpose.msra.mxu0 0.0
    %3230 = vmatprep.subr.mxu0 0.0
    %3231 = vmatpush2.xpose.msra.mxu0 0.0
    %3232 = vmatprep.subr.mxu0 0.0
    %3233 = vmatpush2.xpose.msra.mxu0 0.0
    %3234 = vmatprep.subr.mxu0 0.0
    %3235 = vmatpush2.xpose.msra.mxu0 0.0
    %3236 = vmatprep.subr.mxu0 0.0
    %3237 = vmatpush2.xpose.msra.mxu0 0.0
    %3238 = vmatprep.subr.mxu0 0.0
    %3239 = vmatpush2.xpose.msra.mxu0 0.0
    %3240 = vmatprep.subr.mxu0 0.0
    %3241 = vmatpush2.xpose.msra.mxu0 0.0
    %3242 = vmatprep.subr.mxu0 0.0
    %3243 = vmatpush2.xpose.msra.mxu0 0.0
    %3244 = vmatprep.subr.mxu0 0.0
    %3245 = vmatpush2.xpose.msra.mxu0 0.0
    %3246 = vmatprep.mubr.f32.mxu0 0.0
    %3247 = vmatmul.mubr.f32.gmra.mxu0 %v3168
    %v3248 = vpop.f32.mrf.mxu0
    %v3249 = vadd.f32 0.0, %v3248
    %v3250 = vpop.f32.mrf.mxu0
    %3251 = vdwg.mxu0
    %v3253 = vsel %vm1801, %v2714, 0
    %v3256 = vsel %vm1801, %v86, 0
    %v3259 = vsel %vm1801, %v87, 0
    %v3262 = vsel %vm1801, %v88, 0
    %v3265 = vsel %vm1801, %v89, 0
    %3267 = vmatprep.subr.mxu0 0.0
    %3268 = vmatpush1.xpose.msra.mxu0 0.0
    %3269 = vmatprep.subr.mxu0 0.0
    %3270 = vmatpush1.xpose.msra.mxu0 0.0
    %3271 = vmatprep.subr.mxu0 0.0
    %3272 = vmatpush1.xpose.msra.mxu0 0.0
    %3273 = vmatprep.subr.mxu0 0.0
    %3274 = vmatpush1.xpose.msra.mxu0 0.0
    %3275 = vmatprep.subr.mxu0 0.0
    %3276 = vmatpush1.xpose.msra.mxu0 0.0
    %3277 = vmatprep.subr.mxu0 0.0
    %3278 = vmatpush1.xpose.msra.mxu0 0.0
    %3279 = vmatprep.subr.mxu0 0.0
    %3280 = vmatpush1.xpose.msra.mxu0 0.0
    %3281 = vmatprep.subr.mxu0 0.0
    %3282 = vmatpush1.xpose.msra.mxu0 0.0
    %3283 = vmatprep.subr.mxu0 0.0
    %3284 = vmatpush1.xpose.msra.mxu0 0.0
    %3285 = vmatprep.subr.mxu0 0.0
    %3286 = vmatpush1.xpose.msra.mxu0 0.0
    %3287 = vmatprep.subr.mxu0 0.0
    %3288 = vmatpush1.xpose.msra.mxu0 0.0
    %3289 = vmatprep.subr.mxu0 0.0
    %3290 = vmatpush1.xpose.msra.mxu0 0.0
    %3291 = vmatprep.subr.mxu0 0.0
    %3292 = vmatpush1.xpose.msra.mxu0 %v3265
    %3293 = vmatprep.subr.mxu0 0.0
    %3294 = vmatpush1.xpose.msra.mxu0 %v3262
    %3295 = vmatprep.subr.mxu0 0.0
    %3296 = vmatpush1.xpose.msra.mxu0 %v3259
    %3297 = vmatprep.subr.mxu0 0.0
    %3298 = vmatpush1.xpose.msra.mxu0 %v3256
    %3299 = vmatprep.subr.mxu0 0.0
    %3300 = vmatpush2.xpose.msra.mxu0 0.0
    %3301 = vmatprep.subr.mxu0 0.0
    %3302 = vmatpush2.xpose.msra.mxu0 0.0
    %3303 = vmatprep.subr.mxu0 0.0
    %3304 = vmatpush2.xpose.msra.mxu0 0.0
    %3305 = vmatprep.subr.mxu0 0.0
    %3306 = vmatpush2.xpose.msra.mxu0 0.0
    %3307 = vmatprep.subr.mxu0 0.0
    %3308 = vmatpush2.xpose.msra.mxu0 0.0
    %3309 = vmatprep.subr.mxu0 0.0
    %3310 = vmatpush2.xpose.msra.mxu0 0.0
    %3311 = vmatprep.subr.mxu0 0.0
    %3312 = vmatpush2.xpose.msra.mxu0 0.0
    %3313 = vmatprep.subr.mxu0 0.0
    %3314 = vmatpush2.xpose.msra.mxu0 0.0
    %3315 = vmatprep.subr.mxu0 0.0
    %3316 = vmatpush2.xpose.msra.mxu0 0.0
    %3317 = vmatprep.subr.mxu0 0.0
    %3318 = vmatpush2.xpose.msra.mxu0 0.0
    %3319 = vmatprep.subr.mxu0 0.0
    %3320 = vmatpush2.xpose.msra.mxu0 0.0
    %3321 = vmatprep.subr.mxu0 0.0
    %3322 = vmatpush2.xpose.msra.mxu0 0.0
    %3323 = vmatprep.subr.mxu0 0.0
    %3324 = vmatpush2.xpose.msra.mxu0 0.0
    %3325 = vmatprep.subr.mxu0 0.0
    %3326 = vmatpush2.xpose.msra.mxu0 0.0
    %3327 = vmatprep.subr.mxu0 0.0
    %3328 = vmatpush2.xpose.msra.mxu0 0.0
    %3329 = vmatprep.subr.mxu0 0.0
    %3330 = vmatpush2.xpose.msra.mxu0 0.0
    %3331 = vmatprep.mubr.f32.mxu0 0.0
    %3332 = vmatmul.mubr.f32.gmra.mxu0 %v3253
    %v3333 = vpop.f32.mrf.mxu0
    %v3334 = vadd.f32 0.0, %v3333
    %v3335 = vpop.f32.mrf.mxu0
    %3336 = vdwg.mxu0
    %v3338 = vsel %vm1801, %v2787, 0
    %v3341 = vsel %vm1801, %v90, 0
    %v3344 = vsel %vm1801, %v91, 0
    %v3347 = vsel %vm1801, %v92, 0
    %v3350 = vsel %vm1801, %v93, 0
    %3352 = vmatprep.subr.mxu0 0.0
    %3353 = vmatpush1.xpose.msra.mxu0 0.0
    %3354 = vmatprep.subr.mxu0 0.0
    %3355 = vmatpush1.xpose.msra.mxu0 0.0
    %3356 = vmatprep.subr.mxu0 0.0
    %3357 = vmatpush1.xpose.msra.mxu0 0.0
    %3358 = vmatprep.subr.mxu0 0.0
    %3359 = vmatpush1.xpose.msra.mxu0 0.0
    %3360 = vmatprep.subr.mxu0 0.0
    %3361 = vmatpush1.xpose.msra.mxu0 0.0
    %3362 = vmatprep.subr.mxu0 0.0
    %3363 = vmatpush1.xpose.msra.mxu0 0.0
    %3364 = vmatprep.subr.mxu0 0.0
    %3365 = vmatpush1.xpose.msra.mxu0 0.0
    %3366 = vmatprep.subr.mxu0 0.0
    %3367 = vmatpush1.xpose.msra.mxu0 0.0
    %3368 = vmatprep.subr.mxu0 0.0
    %3369 = vmatpush1.xpose.msra.mxu0 0.0
    %3370 = vmatprep.subr.mxu0 0.0
    %3371 = vmatpush1.xpose.msra.mxu0 0.0
    %3372 = vmatprep.subr.mxu0 0.0
    %3373 = vmatpush1.xpose.msra.mxu0 0.0
    %3374 = vmatprep.subr.mxu0 0.0
    %3375 = vmatpush1.xpose.msra.mxu0 0.0
    %3376 = vmatprep.subr.mxu0 0.0
    %3377 = vmatpush1.xpose.msra.mxu0 %v3350
    %3378 = vmatprep.subr.mxu0 0.0
    %3379 = vmatpush1.xpose.msra.mxu0 %v3347
    %3380 = vmatprep.subr.mxu0 0.0
    %3381 = vmatpush1.xpose.msra.mxu0 %v3344
    %3382 = vmatprep.subr.mxu0 0.0
    %3383 = vmatpush1.xpose.msra.mxu0 %v3341
    %3384 = vmatprep.subr.mxu0 0.0
    %3385 = vmatpush2.xpose.msra.mxu0 0.0
    %3386 = vmatprep.subr.mxu0 0.0
    %3387 = vmatpush2.xpose.msra.mxu0 0.0
    %3388 = vmatprep.subr.mxu0 0.0
    %3389 = vmatpush2.xpose.msra.mxu0 0.0
    %3390 = vmatprep.subr.mxu0 0.0
    %3391 = vmatpush2.xpose.msra.mxu0 0.0
    %3392 = vmatprep.subr.mxu0 0.0
    %3393 = vmatpush2.xpose.msra.mxu0 0.0
    %3394 = vmatprep.subr.mxu0 0.0
    %3395 = vmatpush2.xpose.msra.mxu0 0.0
    %3396 = vmatprep.subr.mxu0 0.0
    %3397 = vmatpush2.xpose.msra.mxu0 0.0
    %3398 = vmatprep.subr.mxu0 0.0
    %3399 = vmatpush2.xpose.msra.mxu0 0.0
    %3400 = vmatprep.subr.mxu0 0.0
    %3401 = vmatpush2.xpose.msra.mxu0 0.0
    %3402 = vmatprep.subr.mxu0 0.0
    %3403 = vmatpush2.xpose.msra.mxu0 0.0
    %3404 = vmatprep.subr.mxu0 0.0
    %3405 = vmatpush2.xpose.msra.mxu0 0.0
    %3406 = vmatprep.subr.mxu0 0.0
    %3407 = vmatpush2.xpose.msra.mxu0 0.0
    %3408 = vmatprep.subr.mxu0 0.0
    %3409 = vmatpush2.xpose.msra.mxu0 0.0
    %3410 = vmatprep.subr.mxu0 0.0
    %3411 = vmatpush2.xpose.msra.mxu0 0.0
    %3412 = vmatprep.subr.mxu0 0.0
    %3413 = vmatpush2.xpose.msra.mxu0 0.0
    %3414 = vmatprep.subr.mxu0 0.0
    %3415 = vmatpush2.xpose.msra.mxu0 0.0
    %3416 = vmatprep.mubr.f32.mxu0 0.0
    %3417 = vmatmul.mubr.f32.gmra.mxu0 %v3338
    %v3418 = vpop.f32.mrf.mxu0
    %v3419 = vadd.f32 0.0, %v3418
    %v3420 = vpop.f32.mrf.mxu0
    %3421 = vdwg.mxu0
    %v3423 = vsel %vm1801, %v2860, 0
    %3425 = vmatprep.subr.mxu0 0.0
    %3426 = vmatpush1.xpose.msra.mxu0 0.0
    %3427 = vmatprep.subr.mxu0 0.0
    %3428 = vmatpush1.xpose.msra.mxu0 0.0
    %3429 = vmatprep.subr.mxu0 0.0
    %3430 = vmatpush1.xpose.msra.mxu0 0.0
    %3431 = vmatprep.subr.mxu0 0.0
    %3432 = vmatpush1.xpose.msra.mxu0 0.0
    %3433 = vmatprep.subr.mxu0 0.0
    %3434 = vmatpush1.xpose.msra.mxu0 0.0
    %3435 = vmatprep.subr.mxu0 0.0
    %3436 = vmatpush1.xpose.msra.mxu0 0.0
    %3437 = vmatprep.subr.mxu0 0.0
    %3438 = vmatpush1.xpose.msra.mxu0 0.0
    %3439 = vmatprep.subr.mxu0 0.0
    %3440 = vmatpush1.xpose.msra.mxu0 0.0
    %3441 = vmatprep.subr.mxu0 0.0
    %3442 = vmatpush1.xpose.msra.mxu0 0.0
    %3443 = vmatprep.subr.mxu0 0.0
    %3444 = vmatpush1.xpose.msra.mxu0 0.0
    %3445 = vmatprep.subr.mxu0 0.0
    %3446 = vmatpush1.xpose.msra.mxu0 0.0
    %3447 = vmatprep.subr.mxu0 0.0
    %3448 = vmatpush1.xpose.msra.mxu0 0.0
    %3449 = vmatprep.subr.mxu0 0.0
    %3450 = vmatpush1.xpose.msra.mxu0 %v3095
    %3451 = vmatprep.subr.mxu0 0.0
    %3452 = vmatpush1.xpose.msra.mxu0 %v3092
    %3453 = vmatprep.subr.mxu0 0.0
    %3454 = vmatpush1.xpose.msra.mxu0 %v3089
    %3455 = vmatprep.subr.mxu0 0.0
    %3456 = vmatpush1.xpose.msra.mxu0 %v3086
    %3457 = vmatprep.subr.mxu0 0.0
    %3458 = vmatpush2.xpose.msra.mxu0 0.0
    %3459 = vmatprep.subr.mxu0 0.0
    %3460 = vmatpush2.xpose.msra.mxu0 0.0
    %3461 = vmatprep.subr.mxu0 0.0
    %3462 = vmatpush2.xpose.msra.mxu0 0.0
    %3463 = vmatprep.subr.mxu0 0.0
    %3464 = vmatpush2.xpose.msra.mxu0 0.0
    %3465 = vmatprep.subr.mxu0 0.0
    %3466 = vmatpush2.xpose.msra.mxu0 0.0
    %3467 = vmatprep.subr.mxu0 0.0
    %3468 = vmatpush2.xpose.msra.mxu0 0.0
    %3469 = vmatprep.subr.mxu0 0.0
    %3470 = vmatpush2.xpose.msra.mxu0 0.0
    %3471 = vmatprep.subr.mxu0 0.0
    %3472 = vmatpush2.xpose.msra.mxu0 0.0
    %3473 = vmatprep.subr.mxu0 0.0
    %3474 = vmatpush2.xpose.msra.mxu0 0.0
    %3475 = vmatprep.subr.mxu0 0.0
    %3476 = vmatpush2.xpose.msra.mxu0 0.0
    %3477 = vmatprep.subr.mxu0 0.0
    %3478 = vmatpush2.xpose.msra.mxu0 0.0
    %3479 = vmatprep.subr.mxu0 0.0
    %3480 = vmatpush2.xpose.msra.mxu0 0.0
    %3481 = vmatprep.subr.mxu0 0.0
    %3482 = vmatpush2.xpose.msra.mxu0 0.0
    %3483 = vmatprep.subr.mxu0 0.0
    %3484 = vmatpush2.xpose.msra.mxu0 0.0
    %3485 = vmatprep.subr.mxu0 0.0
    %3486 = vmatpush2.xpose.msra.mxu0 0.0
    %3487 = vmatprep.subr.mxu0 0.0
    %3488 = vmatpush2.xpose.msra.mxu0 0.0
    %3489 = vmatprep.mubr.f32.mxu0 0.0
    %3490 = vmatmul.mubr.f32.gmra.mxu0 %v3423
    %v3491 = vpop.f32.mrf.mxu0
    %v3492 = vadd.f32 0.0, %v3491
    %v3493 = vpop.f32.mrf.mxu0
    %3494 = vdwg.mxu0
    %v3496 = vsel %vm1801, %v2933, 0
    %3498 = vmatprep.subr.mxu0 0.0
    %3499 = vmatpush1.xpose.msra.mxu0 0.0
    %3500 = vmatprep.subr.mxu0 0.0
    %3501 = vmatpush1.xpose.msra.mxu0 0.0
    %3502 = vmatprep.subr.mxu0 0.0
    %3503 = vmatpush1.xpose.msra.mxu0 0.0
    %3504 = vmatprep.subr.mxu0 0.0
    %3505 = vmatpush1.xpose.msra.mxu0 0.0
    %3506 = vmatprep.subr.mxu0 0.0
    %3507 = vmatpush1.xpose.msra.mxu0 0.0
    %3508 = vmatprep.subr.mxu0 0.0
    %3509 = vmatpush1.xpose.msra.mxu0 0.0
    %3510 = vmatprep.subr.mxu0 0.0
    %3511 = vmatpush1.xpose.msra.mxu0 0.0
    %3512 = vmatprep.subr.mxu0 0.0
    %3513 = vmatpush1.xpose.msra.mxu0 0.0
    %3514 = vmatprep.subr.mxu0 0.0
    %3515 = vmatpush1.xpose.msra.mxu0 0.0
    %3516 = vmatprep.subr.mxu0 0.0
    %3517 = vmatpush1.xpose.msra.mxu0 0.0
    %3518 = vmatprep.subr.mxu0 0.0
    %3519 = vmatpush1.xpose.msra.mxu0 0.0
    %3520 = vmatprep.subr.mxu0 0.0
    %3521 = vmatpush1.xpose.msra.mxu0 0.0
    %3522 = vmatprep.subr.mxu0 0.0
    %3523 = vmatpush1.xpose.msra.mxu0 %v3180
    %3524 = vmatprep.subr.mxu0 0.0
    %3525 = vmatpush1.xpose.msra.mxu0 %v3177
    %3526 = vmatprep.subr.mxu0 0.0
    %3527 = vmatpush1.xpose.msra.mxu0 %v3174
    %3528 = vmatprep.subr.mxu0 0.0
    %3529 = vmatpush1.xpose.msra.mxu0 %v3171
    %3530 = vmatprep.subr.mxu0 0.0
    %3531 = vmatpush2.xpose.msra.mxu0 0.0
    %3532 = vmatprep.subr.mxu0 0.0
    %3533 = vmatpush2.xpose.msra.mxu0 0.0
    %3534 = vmatprep.subr.mxu0 0.0
    %3535 = vmatpush2.xpose.msra.mxu0 0.0
    %3536 = vmatprep.subr.mxu0 0.0
    %3537 = vmatpush2.xpose.msra.mxu0 0.0
    %3538 = vmatprep.subr.mxu0 0.0
    %3539 = vmatpush2.xpose.msra.mxu0 0.0
    %3540 = vmatprep.subr.mxu0 0.0
    %3541 = vmatpush2.xpose.msra.mxu0 0.0
    %3542 = vmatprep.subr.mxu0 0.0
    %3543 = vmatpush2.xpose.msra.mxu0 0.0
    %3544 = vmatprep.subr.mxu0 0.0
    %3545 = vmatpush2.xpose.msra.mxu0 0.0
    %3546 = vmatprep.subr.mxu0 0.0
    %3547 = vmatpush2.xpose.msra.mxu0 0.0
    %3548 = vmatprep.subr.mxu0 0.0
    %3549 = vmatpush2.xpose.msra.mxu0 0.0
    %3550 = vmatprep.subr.mxu0 0.0
    %3551 = vmatpush2.xpose.msra.mxu0 0.0
    %3552 = vmatprep.subr.mxu0 0.0
    %3553 = vmatpush2.xpose.msra.mxu0 0.0
    %3554 = vmatprep.subr.mxu0 0.0
    %3555 = vmatpush2.xpose.msra.mxu0 0.0
    %3556 = vmatprep.subr.mxu0 0.0
    %3557 = vmatpush2.xpose.msra.mxu0 0.0
    %3558 = vmatprep.subr.mxu0 0.0
    %3559 = vmatpush2.xpose.msra.mxu0 0.0
    %3560 = vmatprep.subr.mxu0 0.0
    %3561 = vmatpush2.xpose.msra.mxu0 0.0
    %3562 = vmatprep.mubr.f32.mxu0 0.0
    %3563 = vmatmul.mubr.f32.gmra.mxu0 %v3496
    %v3564 = vpop.f32.mrf.mxu0
    %v3565 = vadd.f32 0.0, %v3564
    %v3566 = vpop.f32.mrf.mxu0
    %3567 = vdwg.mxu0
    %v3569 = vsel %vm1801, %v3006, 0
    %3571 = vmatprep.subr.mxu0 0.0
    %3572 = vmatpush1.xpose.msra.mxu0 0.0
    %3573 = vmatprep.subr.mxu0 0.0
    %3574 = vmatpush1.xpose.msra.mxu0 0.0
    %3575 = vmatprep.subr.mxu0 0.0
    %3576 = vmatpush1.xpose.msra.mxu0 0.0
    %3577 = vmatprep.subr.mxu0 0.0
    %3578 = vmatpush1.xpose.msra.mxu0 0.0
    %3579 = vmatprep.subr.mxu0 0.0
    %3580 = vmatpush1.xpose.msra.mxu0 0.0
    %3581 = vmatprep.subr.mxu0 0.0
    %3582 = vmatpush1.xpose.msra.mxu0 0.0
    %3583 = vmatprep.subr.mxu0 0.0
    %3584 = vmatpush1.xpose.msra.mxu0 0.0
    %3585 = vmatprep.subr.mxu0 0.0
    %3586 = vmatpush1.xpose.msra.mxu0 0.0
    %3587 = vmatprep.subr.mxu0 0.0
    %3588 = vmatpush1.xpose.msra.mxu0 0.0
    %3589 = vmatprep.subr.mxu0 0.0
    %3590 = vmatpush1.xpose.msra.mxu0 0.0
    %3591 = vmatprep.subr.mxu0 0.0
    %3592 = vmatpush1.xpose.msra.mxu0 0.0
    %3593 = vmatprep.subr.mxu0 0.0
    %3594 = vmatpush1.xpose.msra.mxu0 0.0
    %3595 = vmatprep.subr.mxu0 0.0
    %3596 = vmatpush1.xpose.msra.mxu0 %v3265
    %3597 = vmatprep.subr.mxu0 0.0
    %3598 = vmatpush1.xpose.msra.mxu0 %v3262
    %3599 = vmatprep.subr.mxu0 0.0
    %3600 = vmatpush1.xpose.msra.mxu0 %v3259
    %3601 = vmatprep.subr.mxu0 0.0
    %3602 = vmatpush1.xpose.msra.mxu0 %v3256
    %3603 = vmatprep.subr.mxu0 0.0
    %3604 = vmatpush2.xpose.msra.mxu0 0.0
    %3605 = vmatprep.subr.mxu0 0.0
    %3606 = vmatpush2.xpose.msra.mxu0 0.0
    %3607 = vmatprep.subr.mxu0 0.0
    %3608 = vmatpush2.xpose.msra.mxu0 0.0
    %3609 = vmatprep.subr.mxu0 0.0
    %3610 = vmatpush2.xpose.msra.mxu0 0.0
    %3611 = vmatprep.subr.mxu0 0.0
    %3612 = vmatpush2.xpose.msra.mxu0 0.0
    %3613 = vmatprep.subr.mxu0 0.0
    %3614 = vmatpush2.xpose.msra.mxu0 0.0
    %3615 = vmatprep.subr.mxu0 0.0
    %3616 = vmatpush2.xpose.msra.mxu0 0.0
    %3617 = vmatprep.subr.mxu0 0.0
    %3618 = vmatpush2.xpose.msra.mxu0 0.0
    %3619 = vmatprep.subr.mxu0 0.0
    %3620 = vmatpush2.xpose.msra.mxu0 0.0
    %3621 = vmatprep.subr.mxu0 0.0
    %3622 = vmatpush2.xpose.msra.mxu0 0.0
    %3623 = vmatprep.subr.mxu0 0.0
    %3624 = vmatpush2.xpose.msra.mxu0 0.0
    %3625 = vmatprep.subr.mxu0 0.0
    %3626 = vmatpush2.xpose.msra.mxu0 0.0
    %3627 = vmatprep.subr.mxu0 0.0
    %3628 = vmatpush2.xpose.msra.mxu0 0.0
    %3629 = vmatprep.subr.mxu0 0.0
    %3630 = vmatpush2.xpose.msra.mxu0 0.0
    %3631 = vmatprep.subr.mxu0 0.0
    %3632 = vmatpush2.xpose.msra.mxu0 0.0
    %3633 = vmatprep.subr.mxu0 0.0
    %3634 = vmatpush2.xpose.msra.mxu0 0.0
    %3635 = vmatprep.mubr.f32.mxu0 0.0
    %3636 = vmatmul.mubr.f32.gmra.mxu0 %v3569
    %v3637 = vpop.f32.mrf.mxu0
    %v3638 = vadd.f32 0.0, %v3637
    %v3639 = vpop.f32.mrf.mxu0
    %3640 = vdwg.mxu0
    %v3642 = vsel %vm1801, %v3079, 0
    %3644 = vmatprep.subr.mxu0 0.0
    %3645 = vmatpush1.xpose.msra.mxu0 0.0
    %3646 = vmatprep.subr.mxu0 0.0
    %3647 = vmatpush1.xpose.msra.mxu0 0.0
    %3648 = vmatprep.subr.mxu0 0.0
    %3649 = vmatpush1.xpose.msra.mxu0 0.0
    %3650 = vmatprep.subr.mxu0 0.0
    %3651 = vmatpush1.xpose.msra.mxu0 0.0
    %3652 = vmatprep.subr.mxu0 0.0
    %3653 = vmatpush1.xpose.msra.mxu0 0.0
    %3654 = vmatprep.subr.mxu0 0.0
    %3655 = vmatpush1.xpose.msra.mxu0 0.0
    %3656 = vmatprep.subr.mxu0 0.0
    %3657 = vmatpush1.xpose.msra.mxu0 0.0
    %3658 = vmatprep.subr.mxu0 0.0
    %3659 = vmatpush1.xpose.msra.mxu0 0.0
    %3660 = vmatprep.subr.mxu0 0.0
    %3661 = vmatpush1.xpose.msra.mxu0 0.0
    %3662 = vmatprep.subr.mxu0 0.0
    %3663 = vmatpush1.xpose.msra.mxu0 0.0
    %3664 = vmatprep.subr.mxu0 0.0
    %3665 = vmatpush1.xpose.msra.mxu0 0.0
    %3666 = vmatprep.subr.mxu0 0.0
    %3667 = vmatpush1.xpose.msra.mxu0 0.0
    %3668 = vmatprep.subr.mxu0 0.0
    %3669 = vmatpush1.xpose.msra.mxu0 %v3350
    %3670 = vmatprep.subr.mxu0 0.0
    %3671 = vmatpush1.xpose.msra.mxu0 %v3347
    %3672 = vmatprep.subr.mxu0 0.0
    %3673 = vmatpush1.xpose.msra.mxu0 %v3344
    %3674 = vmatprep.subr.mxu0 0.0
    %3675 = vmatpush1.xpose.msra.mxu0 %v3341
    %3676 = vmatprep.subr.mxu0 0.0
    %3677 = vmatpush2.xpose.msra.mxu0 0.0
    %3678 = vmatprep.subr.mxu0 0.0
    %3679 = vmatpush2.xpose.msra.mxu0 0.0
    %3680 = vmatprep.subr.mxu0 0.0
    %3681 = vmatpush2.xpose.msra.mxu0 0.0
    %3682 = vmatprep.subr.mxu0 0.0
    %3683 = vmatpush2.xpose.msra.mxu0 0.0
    %3684 = vmatprep.subr.mxu0 0.0
    %3685 = vmatpush2.xpose.msra.mxu0 0.0
    %3686 = vmatprep.subr.mxu0 0.0
    %3687 = vmatpush2.xpose.msra.mxu0 0.0
    %3688 = vmatprep.subr.mxu0 0.0
    %3689 = vmatpush2.xpose.msra.mxu0 0.0
    %3690 = vmatprep.subr.mxu0 0.0
    %3691 = vmatpush2.xpose.msra.mxu0 0.0
    %3692 = vmatprep.subr.mxu0 0.0
    %3693 = vmatpush2.xpose.msra.mxu0 0.0
    %3694 = vmatprep.subr.mxu0 0.0
    %3695 = vmatpush2.xpose.msra.mxu0 0.0
    %3696 = vmatprep.subr.mxu0 0.0
    %3697 = vmatpush2.xpose.msra.mxu0 0.0
    %3698 = vmatprep.subr.mxu0 0.0
    %3699 = vmatpush2.xpose.msra.mxu0 0.0
    %3700 = vmatprep.subr.mxu0 0.0
    %3701 = vmatpush2.xpose.msra.mxu0 0.0
    %3702 = vmatprep.subr.mxu0 0.0
    %3703 = vmatpush2.xpose.msra.mxu0 0.0
    %3704 = vmatprep.subr.mxu0 0.0
    %3705 = vmatpush2.xpose.msra.mxu0 0.0
    %3706 = vmatprep.subr.mxu0 0.0
    %3707 = vmatpush2.xpose.msra.mxu0 0.0
    %3708 = vmatprep.mubr.f32.mxu0 0.0
    %3709 = vmatmul.mubr.f32.gmra.mxu0 %v3642
    %v3710 = vpop.f32.mrf.mxu0
    %v3711 = vadd.f32 0.0, %v3710
    %v3712 = vpop.f32.mrf.mxu0
    %3713 = vdwg.mxu0
    %v3714 = vsel %vm94, %v3164, 0.0
    %v3715 = vsel %vm94, %v3249, 0.0
    %v3716 = vadd.f32 %v3714, %v3715
    %v3717 = vsel %vm94, %v3334, 0.0
    %v3718 = vadd.f32 %v3716, %v3717
    %v3719 = vsel %vm94, %v3419, 0.0
    %v3720 = vadd.f32 %v3718, %v3719
    %v3721 = vsel %vm94, %v3492, 0.0
    %v3722 = vsel %vm94, %v3565, 0.0
    %v3723 = vadd.f32 %v3721, %v3722
    %v3724 = vsel %vm94, %v3638, 0.0
    %v3725 = vadd.f32 %v3723, %v3724
    %v3726 = vsel %vm94, %v3711, 0.0
    %v3727 = vadd.f32 %v3725, %v3726
    %v3728 = vadd.f32 %v3720, %v21
    %v3729 = vadd.f32 %v3727, %v22
    %v3730 = vsel %vm94, %v3728, 0.0
    %3731 = vadd.xlane.f32.xlu0 %v3730
    %v3732 = vpop.xlane.xlu0 %3731
    %v3733 = vsel %vm94, %v3729, 0.0
    %3734 = vadd.xlane.f32.xlu0 %v3733
    %v3735 = vpop.xlane.xlu0 %3734
    %v3736 = vrcp.pop 32.0
    %v3737 = vmul.f32 %v3732, %v3736
    %v3738 = vmul.f32 %v3735, %v3736
    %v3739 = vsub.f32 %v3728, %v3737
    %v3740 = vsub.f32 %v3729, %v3738
    %v3741 = vmul.f32 %v3739, %v3739
    %v3742 = vmul.f32 %v3740, %v3740
    %v3743 = vsel %vm94, %v3741, 0.0
    %3744 = vadd.xlane.f32.xlu0 %v3743
    %v3745 = vpop.xlane.xlu0 %3744
    %v3746 = vsel %vm94, %v3742, 0.0
    %3747 = vadd.xlane.f32.xlu0 %v3746
    %v3748 = vpop.xlane.xlu0 %3747
    %v3749 = vmul.f32 %v3745, %v3736
    %v3750 = vmul.f32 %v3748, %v3736
    %v3751 = vadd.f32 %v3749, 1e-05
    %v3752 = vadd.f32 %v3750, 1e-05
    %v3753 = vrsqrt.pop %v3751
    %v3754 = vrsqrt.pop %v3752
    %v3755 = vmul.f32 %v3739, %v3753
    %v3756 = vmul.f32 %v3740, %v3754
    %v3757 = vld [vmem:[%s4] sm:$0x3]
    %v3758 = vlaneseq
    %v3759 = vshrl.u32 %v3758, 7
    %v3760 = vsub.s32 0, %v3759
    %v3761 = vrot.slane %v3757, %v3760
    %v3762 = vmul.f32 %v3755, %v3761
    %v3763 = vmul.f32 %v3756, %v3761
    %v3764 = vlaneseq
    %v3765 = vshrl.u32 %v3764, 7
    %v3766 = vsub.s32 1, %v3765
    %v3767 = vrot.slane %v3757, %v3766
    %v3768 = vadd.f32 %v3762, %v3767
    %v3769 = vadd.f32 %v3763, %v3767
    %3770 = vst.msk [vmem:[#allocation2] sm:$0xff] %vm94, %v3768
    %3771 = vst.msk [vmem:[#allocation2 + $0x8] sm:$0xff] %vm94, %v3769
    // Predicated region
    $region22: #{tpu_custom_call.1} parent=1 // pred_check
      _
    $region23: #{tpu_custom_call.1} parent=1 // pred_check_branch
      %3773 = sbr.rel (0) target = $region25
    $region24: #{tpu_custom_call.1} parent=1 // pred_region
      %s3775 = ssub.s32 256, 256
      %3776 = vsyncadd [#allocation3], %s3775
      %s3777 = sshll.u32 [#allocation2], 4
      %s3778 = int_to_ptr.vmem [resolvable:$true] %s3777
      %3783 = dma.vmem_to_hbm [thread:$0]  %s3778, 256, %s5, [#allocation3], 128, 128, 8
    $region25: #{tpu_custom_call.1} parent=1 // pred_fallthru
      _
    // Predicated region
    $region26: #{tpu_custom_call.1} parent=1 // pred_check
      _
    $region27: #{tpu_custom_call.1} parent=1 // pred_check_branch
      %3785 = sbr.rel (0) target = $region29
    $region28: #{tpu_custom_call.1} parent=1 // pred_region
      %3786 = dma.done [#allocation3], 256
    $region29: #{tpu_custom_call.1} parent=1 // pred_fallthru
      _
    %3787 = vsyncpa [#allocation3], 1

</llo_original>
